<compile_context>
chip_gen: v7x
topology: tpu7x:2x2x1
jax: 0.10.0
libtpu: 0.0.40
codegen_flags: <defaults>
</compile_context>

<pallas_src>
import math
import jax
import jax.numpy as jnp
from jax.experimental import pallas as pl
from jax.experimental.pallas import tpu as pltpu

D_MODEL = 32
N_HEAD = 4
D_FF = 64
EPS = 1e-7   # LayerNormalizationBlock eps


def encoder_block_kernel(ln_ref, mask_ref, x_ref, wqkv_ref, wo_ref,
                         w1_ref, b1_ref, w2_ref, b2_ref, out_ref):
    # x_ref: (Bblk, S, D); mask_ref: (Bblk, 1, S)
    # wqkv_ref: (3, H, D, dk); wo_ref: (H, dk, D)
    Bblk, S, D = x_ref.shape
    H = wo_ref.shape[0]
    dk = wo_ref.shape[1]
    M = Bblk * S

    x2 = x_ref[...].reshape(M, D)                       # fold batch into M

    def layer_norm(z, alpha, bias):
        mean = jnp.mean(z, axis=-1, keepdims=True)
        # torch.std() is unbiased -> divide by (D - 1); eps added to std
        var = jnp.sum((z - mean) ** 2, axis=-1, keepdims=True) / (D - 1)
        std = jnp.sqrt(var)
        return alpha * (z - mean) / (std + EPS) + bias

    # ---------------- sublayer 1: masked MHSA + residual ----------------
    xn = layer_norm(x2, ln_ref[0, 0], ln_ref[0, 1])     # (M, D)
    scale = 1.0 / math.sqrt(dk)
    # additive key-mask bias, hoisted once (broadcasts over queries & heads)
    mask_bias = jnp.where(mask_ref[...] == 0.0, -100000000.0, 0.0)  # (Bblk,1,S)

    attn = jnp.zeros((M, D), dtype=jnp.float32)
    for h in range(H):                                  # static, unrolled (H=4)
        qh = jnp.dot(xn, wqkv_ref[0, h], preferred_element_type=jnp.float32)
        kh = jnp.dot(xn, wqkv_ref[1, h], preferred_element_type=jnp.float32)
        vh = jnp.dot(xn, wqkv_ref[2, h], preferred_element_type=jnp.float32)
        q3 = qh.reshape(Bblk, S, dk)
        k3 = kh.reshape(Bblk, S, dk)
        v3 = vh.reshape(Bblk, S, dk)
        s = jnp.einsum('bqe,bke->bqk', q3, k3,
                       preferred_element_type=jnp.float32) * scale + mask_bias
        s = s - jnp.max(s, axis=-1, keepdims=True)
        p = jnp.exp(s)
        p = p * (1.0 / jnp.sum(p, axis=-1, keepdims=True))
        ctx = jnp.einsum('bqk,bke->bqe', p, v3,
                         preferred_element_type=jnp.float32)      # (Bblk,S,dk)
        # accumulate through Wo row-block for this head (no lane concat)
        attn = attn + jnp.dot(ctx.reshape(M, dk), wo_ref[h],
                              preferred_element_type=jnp.float32)
    # TODO(synk): training-mode dropout not implemented (identity here).
    x1 = x2 + attn

    # ---------------- sublayer 2: feed-forward + residual ----------------
    xn2 = layer_norm(x1, ln_ref[1, 0], ln_ref[1, 1])
    hid = jnp.maximum(
        jnp.dot(xn2, w1_ref[...], preferred_element_type=jnp.float32) + b1_ref[...],
        0.0)
    ff = jnp.dot(hid, w2_ref[...], preferred_element_type=jnp.float32) + b2_ref[...]

    out_ref[...] = (x1 + ff).reshape(Bblk, S, D)


def encoder_block(x, mask, params, *, block_b=None):
    B, S, D = x.shape
    F = params["w1"].shape[1]
    H = N_HEAD
    dk = D // H

    # Fold the whole (small) batch into one grid step by default.  For larger
    # batches cap block_b (and on v7x keep >= 2 grid steps so both TensorCores
    # get work via the "parallel" axis).
    if block_b is None:
        block_b = B
    assert B % block_b == 0
    grid = (B // block_b,)

    # Pre-reshape weights so the kernel never lane-slices or concatenates:
    #   wqkv_h[t, h] is the (D, dk) projection of head h for t in {q, k, v}
    #   wo_h[h]      is the (dk, D) output-projection row block of head h
    wq_h = params["wq"].reshape(D, H, dk).transpose(1, 0, 2)
    wk_h = params["wk"].reshape(D, H, dk).transpose(1, 0, 2)
    wv_h = params["wv"].reshape(D, H, dk).transpose(1, 0, 2)
    wqkv_h = jnp.stack([wq_h, wk_h, wv_h], axis=0)       # (3, H, D, dk)
    wo_h = params["wo"].reshape(H, dk, D)                # (H, dk, D)
    b1 = params["b1"].reshape(1, F)
    b2 = params["b2"].reshape(1, D)

    return pl.pallas_call(
        encoder_block_kernel,
        out_shape=jax.ShapeDtypeStruct((B, S, D), jnp.float32),
        grid=grid,
        in_specs=[
            pl.BlockSpec(memory_space=pltpu.MemorySpace.SMEM),        # ln (2,2)
            pl.BlockSpec((block_b, 1, S), lambda b: (b, 0, 0)),       # mask
            pl.BlockSpec((block_b, S, D), lambda b: (b, 0, 0)),       # x
            pl.BlockSpec((3, H, D, dk), lambda b: (0, 0, 0, 0)),      # Wqkv per head
            pl.BlockSpec((H, dk, D), lambda b: (0, 0, 0)),            # Wo per head
            pl.BlockSpec((D, F), lambda b: (0, 0)),                   # W1
            pl.BlockSpec((1, F), lambda b: (0, 0)),                   # b1
            pl.BlockSpec((F, D), lambda b: (0, 0)),                   # W2
            pl.BlockSpec((1, D), lambda b: (0, 0)),                   # b2
        ],
        out_specs=pl.BlockSpec((block_b, S, D), lambda b: (b, 0, 0)),
        compiler_params=pltpu.CompilerParams(dimension_semantics=("parallel",)),
    )(params["ln"], mask, x, wqkv_h, wo_h, params["w1"], b1, params["w2"], b2)


def reference(x, mask, p):
    """Pure-JAX replica of the PyTorch EndoderBlock forward (eval mode)."""
    def ln(z, a, b):
        mean = z.mean(-1, keepdims=True)
        std = jnp.sqrt(((z - mean) ** 2).sum(-1, keepdims=True) / (z.shape[-1] - 1))
        return a * (z - mean) / (std + EPS) + b

    B, S, D = x.shape
    H, dkk = N_HEAD, D // N_HEAD
    xn = ln(x, p["ln"][0, 0], p["ln"][0, 1])
    q = (xn @ p["wq"]).reshape(B, S, H, dkk).transpose(0, 2, 1, 3)
    k = (xn @ p["wk"]).reshape(B, S, H, dkk).transpose(0, 2, 1, 3)
    v = (xn @ p["wv"]).reshape(B, S, H, dkk).transpose(0, 2, 1, 3)
    sc = q @ k.transpose(0, 1, 3, 2) / math.sqrt(dkk)
    sc = jnp.where(mask[:, None, :, :] == 0, -100000000.0, sc)
    sc = jax.nn.softmax(sc, axis=-1)
    ctx = (sc @ v).transpose(0, 2, 1, 3).reshape(B, S, D)
    x1 = x + ctx @ p["wo"]
    xn2 = ln(x1, p["ln"][1, 0], p["ln"][1, 1])
    ff = jnp.maximum(xn2 @ p["w1"] + p["b1"], 0.0) @ p["w2"] + p["b2"]
    return x1 + ff


if __name__ == "__main__":
    B, S, D, F = 2, 8, D_MODEL, D_FF

    key = jax.random.PRNGKey(0)
    ks = jax.random.split(key, 8)
    params = {
        # LN params: row 0 = first skip connection's LN, row 1 = second; [alpha, bias]
        "ln": jnp.array([[1.0, 0.0], [1.0, 0.0]], dtype=jnp.float32),
        "wq": 0.1 * jax.random.normal(ks[0], (D, D), jnp.float32),
        "wk": 0.1 * jax.random.normal(ks[1], (D, D), jnp.float32),
        "wv": 0.1 * jax.random.normal(ks[2], (D, D), jnp.float32),
        "wo": 0.1 * jax.random.normal(ks[3], (D, D), jnp.float32),
        "w1": 0.1 * jax.random.normal(ks[4], (D, F), jnp.float32),
        "b1": 0.1 * jax.random.normal(ks[5], (F,), jnp.float32),
        "w2": 0.1 * jax.random.normal(ks[6], (F, D), jnp.float32),
        "b2": 0.1 * jax.random.normal(ks[7], (D,), jnp.float32),
    }

    kx, _ = jax.random.split(jax.random.PRNGKey(1))
    x = jax.random.normal(kx, (B, S, D), jnp.float32)
    # padding-style mask over keys: batch 0 fully visible, batch 1 masks last 2 tokens
    mask = jnp.ones((B, 1, S), jnp.float32)
    mask = mask.at[1, 0, S - 2:].set(0.0)

    out = encoder_block(x, mask, params)
    out = jax.block_until_ready(out)

    ref = reference(x, mask, params)
    assert out.shape == (B, S, D)
    assert jnp.allclose(out, ref, atol=1e-4, rtol=1e-4), \
        f"max abs diff {jnp.max(jnp.abs(out - ref))}"
    print("KERNEL_OK")
</pallas_src>

<mosaic_0001>
module attributes {stable_mosaic.version = 11 : i64} {
  func.func @encoder_block_kernel(%arg0: i32, %arg1: memref<2x2xf32, #tpu.memory_space<smem>>, %arg2: memref<2x1x8xf32, #tpu.memory_space<vmem>>, %arg3: memref<2x8x32xf32, #tpu.memory_space<vmem>>, %arg4: memref<3x4x32x8xf32, #tpu.memory_space<vmem>>, %arg5: memref<4x8x32xf32, #tpu.memory_space<vmem>>, %arg6: memref<32x64xf32, #tpu.memory_space<vmem>>, %arg7: memref<1x64xf32, #tpu.memory_space<vmem>>, %arg8: memref<64x32xf32, #tpu.memory_space<vmem>>, %arg9: memref<1x32xf32, #tpu.memory_space<vmem>>, %arg10: memref<2x8x32xf32, #tpu.memory_space<vmem>>) attributes {dimension_semantics = [#tpu.dimension_semantics<parallel>], iteration_bounds = array<i64: 1>, scalar_prefetch = 0 : i64, scratch_operands = 0 : i64, tpu.core_type = #tpu.core_type<tc>, window_params = [{transform_indices = @transform_0, window_bounds = array<i64: 2, 2>}, {transform_indices = @transform_1, window_bounds = array<i64: 2, 1, 8>}, {transform_indices = @transform_2, window_bounds = array<i64: 2, 8, 32>}, {pipeline_mode = #tpu.pipeline_mode<synchronous>, transform_indices = @transform_3, window_bounds = array<i64: 3, 4, 32, 8>}, {pipeline_mode = #tpu.pipeline_mode<synchronous>, transform_indices = @transform_4, window_bounds = array<i64: 4, 8, 32>}, {pipeline_mode = #tpu.pipeline_mode<synchronous>, transform_indices = @transform_5, window_bounds = array<i64: 32, 64>}, {pipeline_mode = #tpu.pipeline_mode<synchronous>, transform_indices = @transform_6, window_bounds = array<i64: 1, 64>}, {pipeline_mode = #tpu.pipeline_mode<synchronous>, transform_indices = @transform_7, window_bounds = array<i64: 64, 32>}, {pipeline_mode = #tpu.pipeline_mode<synchronous>, transform_indices = @transform_8, window_bounds = array<i64: 1, 32>}, {transform_indices = @transform_9, window_bounds = array<i64: 2, 8, 32>}]} {
    %c0 = arith.constant 0 : index
    %c0_0 = arith.constant 0 : index
    %c0_1 = arith.constant 0 : index
    %0 = vector.load %arg3[%c0, %c0_0, %c0_1] : memref<2x8x32xf32, #tpu.memory_space<vmem>>, vector<2x8x32xf32>
    %1 = vector.shape_cast %0 : vector<2x8x32xf32> to vector<16x32xf32>
    %c0_2 = arith.constant 0 : index
    %c0_3 = arith.constant 0 : index
    %2 = memref.load %arg1[%c0_2, %c0_3] : memref<2x2xf32, #tpu.memory_space<smem>>
    %c0_4 = arith.constant 0 : index
    %c1 = arith.constant 1 : index
    %3 = memref.load %arg1[%c0_4, %c1] : memref<2x2xf32, #tpu.memory_space<smem>>
    %cst = arith.constant dense<0.000000e+00> : vector<16xf32>
    %4 = vector.multi_reduction <add>, %1, %cst [1] : vector<16x32xf32> to vector<16xf32>
    %5 = vector.shape_cast %4 : vector<16xf32> to vector<16x1xf32>
    %cst_5 = arith.constant 3.200000e+01 : f32
    %6 = vector.broadcast %cst_5 : f32 to vector<16x1xf32>
    %7 = arith.divf %5, %6 : vector<16x1xf32>
    %8 = vector.broadcast %7 : vector<16x1xf32> to vector<16x32xf32>
    %9 = arith.subf %1, %8 : vector<16x32xf32>
    %10 = arith.mulf %9, %9 : vector<16x32xf32>
    %cst_6 = arith.constant dense<0.000000e+00> : vector<16xf32>
    %11 = vector.multi_reduction <add>, %10, %cst_6 [1] : vector<16x32xf32> to vector<16xf32>
    %12 = vector.shape_cast %11 : vector<16xf32> to vector<16x1xf32>
    %cst_7 = arith.constant 3.100000e+01 : f32
    %13 = vector.broadcast %cst_7 : f32 to vector<16x1xf32>
    %14 = arith.divf %12, %13 : vector<16x1xf32>
    %15 = math.sqrt %14 : vector<16x1xf32>
    %16 = vector.broadcast %7 : vector<16x1xf32> to vector<16x32xf32>
    %17 = arith.subf %1, %16 : vector<16x32xf32>
    %18 = vector.broadcast %2 : f32 to vector<16x32xf32>
    %19 = arith.mulf %18, %17 : vector<16x32xf32>
    %cst_8 = arith.constant 1.000000e-07 : f32
    %20 = vector.broadcast %cst_8 : f32 to vector<16x1xf32>
    %21 = arith.addf %15, %20 : vector<16x1xf32>
    %22 = vector.broadcast %21 : vector<16x1xf32> to vector<16x32xf32>
    %23 = arith.divf %19, %22 : vector<16x32xf32>
    %24 = vector.broadcast %3 : f32 to vector<16x32xf32>
    %25 = arith.addf %23, %24 : vector<16x32xf32>
    %c0_9 = arith.constant 0 : index
    %c0_10 = arith.constant 0 : index
    %c0_11 = arith.constant 0 : index
    %26 = vector.load %arg2[%c0_9, %c0_10, %c0_11] : memref<2x1x8xf32, #tpu.memory_space<vmem>>, vector<2x1x8xf32>
    %cst_12 = arith.constant 0.000000e+00 : f32
    %27 = vector.broadcast %cst_12 : f32 to vector<2x1x8xf32>
    %28 = arith.cmpf oeq, %26, %27 : vector<2x1x8xf32>
    %cst_13 = arith.constant -1.000000e+08 : f32
    %cst_14 = arith.constant 0.000000e+00 : f32
    %29 = vector.broadcast %cst_13 : f32 to vector<2x1x8xf32>
    %30 = vector.broadcast %cst_14 : f32 to vector<2x1x8xf32>
    %31 = arith.select %28, %29, %30 : vector<2x1x8xi1>, vector<2x1x8xf32>
    %cst_15 = arith.constant 0.000000e+00 : f32
    %32 = vector.broadcast %cst_15 : f32 to vector<16x32xf32>
    %c0_16 = arith.constant 0 : index
    %c0_17 = arith.constant 0 : index
    %c0_18 = arith.constant 0 : index
    %c0_19 = arith.constant 0 : index
    %33 = vector.load %arg4[%c0_16, %c0_17, %c0_18, %c0_19] : memref<3x4x32x8xf32, #tpu.memory_space<vmem>>, vector<1x1x32x8xf32>
    %34 = vector.shape_cast %33 : vector<1x1x32x8xf32> to vector<32x8xf32>
    %cst_20 = arith.constant dense<0.000000e+00> : vector<16x8xf32>
    %35 = tpu.matmul %25, %34, %cst_20 {dimension_numbers = #tpu.dot_dimension_numbers<[1], [0], [0], [1], [0, 0, 1, 1], [], []>} : vector<16x32xf32>, vector<32x8xf32>, vector<16x8xf32> -> vector<16x8xf32>
    %c1_21 = arith.constant 1 : index
    %c0_22 = arith.constant 0 : index
    %c0_23 = arith.constant 0 : index
    %c0_24 = arith.constant 0 : index
    %36 = vector.load %arg4[%c1_21, %c0_22, %c0_23, %c0_24] : memref<3x4x32x8xf32, #tpu.memory_space<vmem>>, vector<1x1x32x8xf32>
    %37 = vector.shape_cast %36 : vector<1x1x32x8xf32> to vector<32x8xf32>
    %cst_25 = arith.constant dense<0.000000e+00> : vector<16x8xf32>
    %38 = tpu.matmul %25, %37, %cst_25 {dimension_numbers = #tpu.dot_dimension_numbers<[1], [0], [0], [1], [0, 0, 1, 1], [], []>} : vector<16x32xf32>, vector<32x8xf32>, vector<16x8xf32> -> vector<16x8xf32>
    %c2 = arith.constant 2 : index
    %c0_26 = arith.constant 0 : index
    %c0_27 = arith.constant 0 : index
    %c0_28 = arith.constant 0 : index
    %39 = vector.load %arg4[%c2, %c0_26, %c0_27, %c0_28] : memref<3x4x32x8xf32, #tpu.memory_space<vmem>>, vector<1x1x32x8xf32>
    %40 = vector.shape_cast %39 : vector<1x1x32x8xf32> to vector<32x8xf32>
    %cst_29 = arith.constant dense<0.000000e+00> : vector<16x8xf32>
    %41 = tpu.matmul %25, %40, %cst_29 {dimension_numbers = #tpu.dot_dimension_numbers<[1], [0], [0], [1], [0, 0, 1, 1], [], []>} : vector<16x32xf32>, vector<32x8xf32>, vector<16x8xf32> -> vector<16x8xf32>
    %42 = vector.shape_cast %35 : vector<16x8xf32> to vector<2x8x8xf32>
    %43 = vector.shape_cast %38 : vector<16x8xf32> to vector<2x8x8xf32>
    %44 = vector.shape_cast %41 : vector<16x8xf32> to vector<2x8x8xf32>
    "tpu.trace_start"() <{level = 10 : i32, message = "bqe,bke->bqk"}> : () -> ()
    %cst_30 = arith.constant dense<0.000000e+00> : vector<2x8x8xf32>
    %45 = tpu.matmul %42, %43, %cst_30 {dimension_numbers = #tpu.dot_dimension_numbers<[2], [2], [1], [1], [0, 0, 0, 1, 1, 1], [0], [0]>} : vector<2x8x8xf32>, vector<2x8x8xf32>, vector<2x8x8xf32> -> vector<2x8x8xf32>
    "tpu.trace_stop"() : () -> ()
    %cst_31 = arith.constant 0.353553385 : f32
    %46 = vector.broadcast %cst_31 : f32 to vector<2x8x8xf32>
    %47 = arith.mulf %45, %46 : vector<2x8x8xf32>
    %48 = vector.broadcast %31 : vector<2x1x8xf32> to vector<2x8x8xf32>
    %49 = arith.addf %47, %48 : vector<2x8x8xf32>
    %cst_32 = arith.constant dense<0xFF800000> : vector<2x8xf32>
    %50 = vector.multi_reduction <maximumf>, %49, %cst_32 [2] : vector<2x8x8xf32> to vector<2x8xf32>
    %51 = vector.shape_cast %50 : vector<2x8xf32> to vector<2x8x1xf32>
    %52 = vector.broadcast %51 : vector<2x8x1xf32> to vector<2x8x8xf32>
    %53 = arith.subf %49, %52 : vector<2x8x8xf32>
    %54 = math.exp %53 : vector<2x8x8xf32>
    %cst_33 = arith.constant dense<0.000000e+00> : vector<2x8xf32>
    %55 = vector.multi_reduction <add>, %54, %cst_33 [2] : vector<2x8x8xf32> to vector<2x8xf32>
    %56 = vector.shape_cast %55 : vector<2x8xf32> to vector<2x8x1xf32>
    %cst_34 = arith.constant 1.000000e+00 : f32
    %57 = vector.broadcast %cst_34 : f32 to vector<2x8x1xf32>
    %58 = arith.divf %57, %56 : vector<2x8x1xf32>
    %59 = vector.broadcast %58 : vector<2x8x1xf32> to vector<2x8x8xf32>
    %60 = arith.mulf %54, %59 : vector<2x8x8xf32>
    "tpu.trace_start"() <{level = 10 : i32, message = "bqk,bke->bqe"}> : () -> ()
    %cst_35 = arith.constant dense<0.000000e+00> : vector<2x8x8xf32>
    %61 = tpu.matmul %60, %44, %cst_35 {dimension_numbers = #tpu.dot_dimension_numbers<[2], [1], [1], [2], [0, 0, 0, 1, 1, 2], [0], [0]>} : vector<2x8x8xf32>, vector<2x8x8xf32>, vector<2x8x8xf32> -> vector<2x8x8xf32>
    "tpu.trace_stop"() : () -> ()
    %62 = vector.shape_cast %61 : vector<2x8x8xf32> to vector<16x8xf32>
    %c0_36 = arith.constant 0 : index
    %c0_37 = arith.constant 0 : index
    %c0_38 = arith.constant 0 : index
    %63 = vector.load %arg5[%c0_36, %c0_37, %c0_38] : memref<4x8x32xf32, #tpu.memory_space<vmem>>, vector<1x8x32xf32>
    %64 = vector.shape_cast %63 : vector<1x8x32xf32> to vector<8x32xf32>
    %cst_39 = arith.constant dense<0.000000e+00> : vector<16x32xf32>
    %65 = tpu.matmul %62, %64, %cst_39 {dimension_numbers = #tpu.dot_dimension_numbers<[1], [0], [0], [1], [0, 0, 1, 1], [], []>} : vector<16x8xf32>, vector<8x32xf32>, vector<16x32xf32> -> vector<16x32xf32>
    %66 = arith.addf %32, %65 : vector<16x32xf32>
    %c0_40 = arith.constant 0 : index
    %c1_41 = arith.constant 1 : index
    %c0_42 = arith.constant 0 : index
    %c0_43 = arith.constant 0 : index
    %67 = vector.load %arg4[%c0_40, %c1_41, %c0_42, %c0_43] : memref<3x4x32x8xf32, #tpu.memory_space<vmem>>, vector<1x1x32x8xf32>
    %68 = vector.shape_cast %67 : vector<1x1x32x8xf32> to vector<32x8xf32>
    %cst_44 = arith.constant dense<0.000000e+00> : vector<16x8xf32>
    %69 = tpu.matmul %25, %68, %cst_44 {dimension_numbers = #tpu.dot_dimension_numbers<[1], [0], [0], [1], [0, 0, 1, 1], [], []>} : vector<16x32xf32>, vector<32x8xf32>, vector<16x8xf32> -> vector<16x8xf32>
    %c1_45 = arith.constant 1 : index
    %c1_46 = arith.constant 1 : index
    %c0_47 = arith.constant 0 : index
    %c0_48 = arith.constant 0 : index
    %70 = vector.load %arg4[%c1_45, %c1_46, %c0_47, %c0_48] : memref<3x4x32x8xf32, #tpu.memory_space<vmem>>, vector<1x1x32x8xf32>
    %71 = vector.shape_cast %70 : vector<1x1x32x8xf32> to vector<32x8xf32>
    %cst_49 = arith.constant dense<0.000000e+00> : vector<16x8xf32>
    %72 = tpu.matmul %25, %71, %cst_49 {dimension_numbers = #tpu.dot_dimension_numbers<[1], [0], [0], [1], [0, 0, 1, 1], [], []>} : vector<16x32xf32>, vector<32x8xf32>, vector<16x8xf32> -> vector<16x8xf32>
    %c2_50 = arith.constant 2 : index
    %c1_51 = arith.constant 1 : index
    %c0_52 = arith.constant 0 : index
    %c0_53 = arith.constant 0 : index
    %73 = vector.load %arg4[%c2_50, %c1_51, %c0_52, %c0_53] : memref<3x4x32x8xf32, #tpu.memory_space<vmem>>, vector<1x1x32x8xf32>
    %74 = vector.shape_cast %73 : vector<1x1x32x8xf32> to vector<32x8xf32>
    %cst_54 = arith.constant dense<0.000000e+00> : vector<16x8xf32>
    %75 = tpu.matmul %25, %74, %cst_54 {dimension_numbers = #tpu.dot_dimension_numbers<[1], [0], [0], [1], [0, 0, 1, 1], [], []>} : vector<16x32xf32>, vector<32x8xf32>, vector<16x8xf32> -> vector<16x8xf32>
    %76 = vector.shape_cast %69 : vector<16x8xf32> to vector<2x8x8xf32>
    %77 = vector.shape_cast %72 : vector<16x8xf32> to vector<2x8x8xf32>
    %78 = vector.shape_cast %75 : vector<16x8xf32> to vector<2x8x8xf32>
    "tpu.trace_start"() <{level = 10 : i32, message = "bqe,bke->bqk"}> : () -> ()
    %cst_55 = arith.constant dense<0.000000e+00> : vector<2x8x8xf32>
    %79 = tpu.matmul %76, %77, %cst_55 {dimension_numbers = #tpu.dot_dimension_numbers<[2], [2], [1], [1], [0, 0, 0, 1, 1, 1], [0], [0]>} : vector<2x8x8xf32>, vector<2x8x8xf32>, vector<2x8x8xf32> -> vector<2x8x8xf32>
    "tpu.trace_stop"() : () -> ()
    %cst_56 = arith.constant 0.353553385 : f32
    %80 = vector.broadcast %cst_56 : f32 to vector<2x8x8xf32>
    %81 = arith.mulf %79, %80 : vector<2x8x8xf32>
    %82 = vector.broadcast %31 : vector<2x1x8xf32> to vector<2x8x8xf32>
    %83 = arith.addf %81, %82 : vector<2x8x8xf32>
    %cst_57 = arith.constant dense<0xFF800000> : vector<2x8xf32>
    %84 = vector.multi_reduction <maximumf>, %83, %cst_57 [2] : vector<2x8x8xf32> to vector<2x8xf32>
    %85 = vector.shape_cast %84 : vector<2x8xf32> to vector<2x8x1xf32>
    %86 = vector.broadcast %85 : vector<2x8x1xf32> to vector<2x8x8xf32>
    %87 = arith.subf %83, %86 : vector<2x8x8xf32>
    %88 = math.exp %87 : vector<2x8x8xf32>
    %cst_58 = arith.constant dense<0.000000e+00> : vector<2x8xf32>
    %89 = vector.multi_reduction <add>, %88, %cst_58 [2] : vector<2x8x8xf32> to vector<2x8xf32>
    %90 = vector.shape_cast %89 : vector<2x8xf32> to vector<2x8x1xf32>
    %cst_59 = arith.constant 1.000000e+00 : f32
    %91 = vector.broadcast %cst_59 : f32 to vector<2x8x1xf32>
    %92 = arith.divf %91, %90 : vector<2x8x1xf32>
    %93 = vector.broadcast %92 : vector<2x8x1xf32> to vector<2x8x8xf32>
    %94 = arith.mulf %88, %93 : vector<2x8x8xf32>
    "tpu.trace_start"() <{level = 10 : i32, message = "bqk,bke->bqe"}> : () -> ()
    %cst_60 = arith.constant dense<0.000000e+00> : vector<2x8x8xf32>
    %95 = tpu.matmul %94, %78, %cst_60 {dimension_numbers = #tpu.dot_dimension_numbers<[2], [1], [1], [2], [0, 0, 0, 1, 1, 2], [0], [0]>} : vector<2x8x8xf32>, vector<2x8x8xf32>, vector<2x8x8xf32> -> vector<2x8x8xf32>
    "tpu.trace_stop"() : () -> ()
    %96 = vector.shape_cast %95 : vector<2x8x8xf32> to vector<16x8xf32>
    %c1_61 = arith.constant 1 : index
    %c0_62 = arith.constant 0 : index
    %c0_63 = arith.constant 0 : index
    %97 = vector.load %arg5[%c1_61, %c0_62, %c0_63] : memref<4x8x32xf32, #tpu.memory_space<vmem>>, vector<1x8x32xf32>
    %98 = vector.shape_cast %97 : vector<1x8x32xf32> to vector<8x32xf32>
    %cst_64 = arith.constant dense<0.000000e+00> : vector<16x32xf32>
    %99 = tpu.matmul %96, %98, %cst_64 {dimension_numbers = #tpu.dot_dimension_numbers<[1], [0], [0], [1], [0, 0, 1, 1], [], []>} : vector<16x8xf32>, vector<8x32xf32>, vector<16x32xf32> -> vector<16x32xf32>
    %100 = arith.addf %66, %99 : vector<16x32xf32>
    %c0_65 = arith.constant 0 : index
    %c2_66 = arith.constant 2 : index
    %c0_67 = arith.constant 0 : index
    %c0_68 = arith.constant 0 : index
    %101 = vector.load %arg4[%c0_65, %c2_66, %c0_67, %c0_68] : memref<3x4x32x8xf32, #tpu.memory_space<vmem>>, vector<1x1x32x8xf32>
    %102 = vector.shape_cast %101 : vector<1x1x32x8xf32> to vector<32x8xf32>
    %cst_69 = arith.constant dense<0.000000e+00> : vector<16x8xf32>
    %103 = tpu.matmul %25, %102, %cst_69 {dimension_numbers = #tpu.dot_dimension_numbers<[1], [0], [0], [1], [0, 0, 1, 1], [], []>} : vector<16x32xf32>, vector<32x8xf32>, vector<16x8xf32> -> vector<16x8xf32>
    %c1_70 = arith.constant 1 : index
    %c2_71 = arith.constant 2 : index
    %c0_72 = arith.constant 0 : index
    %c0_73 = arith.constant 0 : index
    %104 = vector.load %arg4[%c1_70, %c2_71, %c0_72, %c0_73] : memref<3x4x32x8xf32, #tpu.memory_space<vmem>>, vector<1x1x32x8xf32>
    %105 = vector.shape_cast %104 : vector<1x1x32x8xf32> to vector<32x8xf32>
    %cst_74 = arith.constant dense<0.000000e+00> : vector<16x8xf32>
    %106 = tpu.matmul %25, %105, %cst_74 {dimension_numbers = #tpu.dot_dimension_numbers<[1], [0], [0], [1], [0, 0, 1, 1], [], []>} : vector<16x32xf32>, vector<32x8xf32>, vector<16x8xf32> -> vector<16x8xf32>
    %c2_75 = arith.constant 2 : index
    %c2_76 = arith.constant 2 : index
    %c0_77 = arith.constant 0 : index
    %c0_78 = arith.constant 0 : index
    %107 = vector.load %arg4[%c2_75, %c2_76, %c0_77, %c0_78] : memref<3x4x32x8xf32, #tpu.memory_space<vmem>>, vector<1x1x32x8xf32>
    %108 = vector.shape_cast %107 : vector<1x1x32x8xf32> to vector<32x8xf32>
    %cst_79 = arith.constant dense<0.000000e+00> : vector<16x8xf32>
    %109 = tpu.matmul %25, %108, %cst_79 {dimension_numbers = #tpu.dot_dimension_numbers<[1], [0], [0], [1], [0, 0, 1, 1], [], []>} : vector<16x32xf32>, vector<32x8xf32>, vector<16x8xf32> -> vector<16x8xf32>
    %110 = vector.shape_cast %103 : vector<16x8xf32> to vector<2x8x8xf32>
    %111 = vector.shape_cast %106 : vector<16x8xf32> to vector<2x8x8xf32>
    %112 = vector.shape_cast %109 : vector<16x8xf32> to vector<2x8x8xf32>
    "tpu.trace_start"() <{level = 10 : i32, message = "bqe,bke->bqk"}> : () -> ()
    %cst_80 = arith.constant dense<0.000000e+00> : vector<2x8x8xf32>
    %113 = tpu.matmul %110, %111, %cst_80 {dimension_numbers = #tpu.dot_dimension_numbers<[2], [2], [1], [1], [0, 0, 0, 1, 1, 1], [0], [0]>} : vector<2x8x8xf32>, vector<2x8x8xf32>, vector<2x8x8xf32> -> vector<2x8x8xf32>
    "tpu.trace_stop"() : () -> ()
    %cst_81 = arith.constant 0.353553385 : f32
    %114 = vector.broadcast %cst_81 : f32 to vector<2x8x8xf32>
    %115 = arith.mulf %113, %114 : vector<2x8x8xf32>
    %116 = vector.broadcast %31 : vector<2x1x8xf32> to vector<2x8x8xf32>
    %117 = arith.addf %115, %116 : vector<2x8x8xf32>
    %cst_82 = arith.constant dense<0xFF800000> : vector<2x8xf32>
    %118 = vector.multi_reduction <maximumf>, %117, %cst_82 [2] : vector<2x8x8xf32> to vector<2x8xf32>
    %119 = vector.shape_cast %118 : vector<2x8xf32> to vector<2x8x1xf32>
    %120 = vector.broadcast %119 : vector<2x8x1xf32> to vector<2x8x8xf32>
    %121 = arith.subf %117, %120 : vector<2x8x8xf32>
    %122 = math.exp %121 : vector<2x8x8xf32>
    %cst_83 = arith.constant dense<0.000000e+00> : vector<2x8xf32>
    %123 = vector.multi_reduction <add>, %122, %cst_83 [2] : vector<2x8x8xf32> to vector<2x8xf32>
    %124 = vector.shape_cast %123 : vector<2x8xf32> to vector<2x8x1xf32>
    %cst_84 = arith.constant 1.000000e+00 : f32
    %125 = vector.broadcast %cst_84 : f32 to vector<2x8x1xf32>
    %126 = arith.divf %125, %124 : vector<2x8x1xf32>
    %127 = vector.broadcast %126 : vector<2x8x1xf32> to vector<2x8x8xf32>
    %128 = arith.mulf %122, %127 : vector<2x8x8xf32>
    "tpu.trace_start"() <{level = 10 : i32, message = "bqk,bke->bqe"}> : () -> ()
    %cst_85 = arith.constant dense<0.000000e+00> : vector<2x8x8xf32>
    %129 = tpu.matmul %128, %112, %cst_85 {dimension_numbers = #tpu.dot_dimension_numbers<[2], [1], [1], [2], [0, 0, 0, 1, 1, 2], [0], [0]>} : vector<2x8x8xf32>, vector<2x8x8xf32>, vector<2x8x8xf32> -> vector<2x8x8xf32>
    "tpu.trace_stop"() : () -> ()
    %130 = vector.shape_cast %129 : vector<2x8x8xf32> to vector<16x8xf32>
    %c2_86 = arith.constant 2 : index
    %c0_87 = arith.constant 0 : index
    %c0_88 = arith.constant 0 : index
    %131 = vector.load %arg5[%c2_86, %c0_87, %c0_88] : memref<4x8x32xf32, #tpu.memory_space<vmem>>, vector<1x8x32xf32>
    %132 = vector.shape_cast %131 : vector<1x8x32xf32> to vector<8x32xf32>
    %cst_89 = arith.constant dense<0.000000e+00> : vector<16x32xf32>
    %133 = tpu.matmul %130, %132, %cst_89 {dimension_numbers = #tpu.dot_dimension_numbers<[1], [0], [0], [1], [0, 0, 1, 1], [], []>} : vector<16x8xf32>, vector<8x32xf32>, vector<16x32xf32> -> vector<16x32xf32>
    %134 = arith.addf %100, %133 : vector<16x32xf32>
    %c0_90 = arith.constant 0 : index
    %c3 = arith.constant 3 : index
    %c0_91 = arith.constant 0 : index
    %c0_92 = arith.constant 0 : index
    %135 = vector.load %arg4[%c0_90, %c3, %c0_91, %c0_92] : memref<3x4x32x8xf32, #tpu.memory_space<vmem>>, vector<1x1x32x8xf32>
    %136 = vector.shape_cast %135 : vector<1x1x32x8xf32> to vector<32x8xf32>
    %cst_93 = arith.constant dense<0.000000e+00> : vector<16x8xf32>
    %137 = tpu.matmul %25, %136, %cst_93 {dimension_numbers = #tpu.dot_dimension_numbers<[1], [0], [0], [1], [0, 0, 1, 1], [], []>} : vector<16x32xf32>, vector<32x8xf32>, vector<16x8xf32> -> vector<16x8xf32>
    %c1_94 = arith.constant 1 : index
    %c3_95 = arith.constant 3 : index
    %c0_96 = arith.constant 0 : index
    %c0_97 = arith.constant 0 : index
    %138 = vector.load %arg4[%c1_94, %c3_95, %c0_96, %c0_97] : memref<3x4x32x8xf32, #tpu.memory_space<vmem>>, vector<1x1x32x8xf32>
    %139 = vector.shape_cast %138 : vector<1x1x32x8xf32> to vector<32x8xf32>
    %cst_98 = arith.constant dense<0.000000e+00> : vector<16x8xf32>
    %140 = tpu.matmul %25, %139, %cst_98 {dimension_numbers = #tpu.dot_dimension_numbers<[1], [0], [0], [1], [0, 0, 1, 1], [], []>} : vector<16x32xf32>, vector<32x8xf32>, vector<16x8xf32> -> vector<16x8xf32>
    %c2_99 = arith.constant 2 : index
    %c3_100 = arith.constant 3 : index
    %c0_101 = arith.constant 0 : index
    %c0_102 = arith.constant 0 : index
    %141 = vector.load %arg4[%c2_99, %c3_100, %c0_101, %c0_102] : memref<3x4x32x8xf32, #tpu.memory_space<vmem>>, vector<1x1x32x8xf32>
    %142 = vector.shape_cast %141 : vector<1x1x32x8xf32> to vector<32x8xf32>
    %cst_103 = arith.constant dense<0.000000e+00> : vector<16x8xf32>
    %143 = tpu.matmul %25, %142, %cst_103 {dimension_numbers = #tpu.dot_dimension_numbers<[1], [0], [0], [1], [0, 0, 1, 1], [], []>} : vector<16x32xf32>, vector<32x8xf32>, vector<16x8xf32> -> vector<16x8xf32>
    %144 = vector.shape_cast %137 : vector<16x8xf32> to vector<2x8x8xf32>
    %145 = vector.shape_cast %140 : vector<16x8xf32> to vector<2x8x8xf32>
    %146 = vector.shape_cast %143 : vector<16x8xf32> to vector<2x8x8xf32>
    "tpu.trace_start"() <{level = 10 : i32, message = "bqe,bke->bqk"}> : () -> ()
    %cst_104 = arith.constant dense<0.000000e+00> : vector<2x8x8xf32>
    %147 = tpu.matmul %144, %145, %cst_104 {dimension_numbers = #tpu.dot_dimension_numbers<[2], [2], [1], [1], [0, 0, 0, 1, 1, 1], [0], [0]>} : vector<2x8x8xf32>, vector<2x8x8xf32>, vector<2x8x8xf32> -> vector<2x8x8xf32>
    "tpu.trace_stop"() : () -> ()
    %cst_105 = arith.constant 0.353553385 : f32
    %148 = vector.broadcast %cst_105 : f32 to vector<2x8x8xf32>
    %149 = arith.mulf %147, %148 : vector<2x8x8xf32>
    %150 = vector.broadcast %31 : vector<2x1x8xf32> to vector<2x8x8xf32>
    %151 = arith.addf %149, %150 : vector<2x8x8xf32>
    %cst_106 = arith.constant dense<0xFF800000> : vector<2x8xf32>
    %152 = vector.multi_reduction <maximumf>, %151, %cst_106 [2] : vector<2x8x8xf32> to vector<2x8xf32>
    %153 = vector.shape_cast %152 : vector<2x8xf32> to vector<2x8x1xf32>
    %154 = vector.broadcast %153 : vector<2x8x1xf32> to vector<2x8x8xf32>
    %155 = arith.subf %151, %154 : vector<2x8x8xf32>
    %156 = math.exp %155 : vector<2x8x8xf32>
    %cst_107 = arith.constant dense<0.000000e+00> : vector<2x8xf32>
    %157 = vector.multi_reduction <add>, %156, %cst_107 [2] : vector<2x8x8xf32> to vector<2x8xf32>
    %158 = vector.shape_cast %157 : vector<2x8xf32> to vector<2x8x1xf32>
    %cst_108 = arith.constant 1.000000e+00 : f32
    %159 = vector.broadcast %cst_108 : f32 to vector<2x8x1xf32>
    %160 = arith.divf %159, %158 : vector<2x8x1xf32>
    %161 = vector.broadcast %160 : vector<2x8x1xf32> to vector<2x8x8xf32>
    %162 = arith.mulf %156, %161 : vector<2x8x8xf32>
    "tpu.trace_start"() <{level = 10 : i32, message = "bqk,bke->bqe"}> : () -> ()
    %cst_109 = arith.constant dense<0.000000e+00> : vector<2x8x8xf32>
    %163 = tpu.matmul %162, %146, %cst_109 {dimension_numbers = #tpu.dot_dimension_numbers<[2], [1], [1], [2], [0, 0, 0, 1, 1, 2], [0], [0]>} : vector<2x8x8xf32>, vector<2x8x8xf32>, vector<2x8x8xf32> -> vector<2x8x8xf32>
    "tpu.trace_stop"() : () -> ()
    %164 = vector.shape_cast %163 : vector<2x8x8xf32> to vector<16x8xf32>
    %c3_110 = arith.constant 3 : index
    %c0_111 = arith.constant 0 : index
    %c0_112 = arith.constant 0 : index
    %165 = vector.load %arg5[%c3_110, %c0_111, %c0_112] : memref<4x8x32xf32, #tpu.memory_space<vmem>>, vector<1x8x32xf32>
    %166 = vector.shape_cast %165 : vector<1x8x32xf32> to vector<8x32xf32>
    %cst_113 = arith.constant dense<0.000000e+00> : vector<16x32xf32>
    %167 = tpu.matmul %164, %166, %cst_113 {dimension_numbers = #tpu.dot_dimension_numbers<[1], [0], [0], [1], [0, 0, 1, 1], [], []>} : vector<16x8xf32>, vector<8x32xf32>, vector<16x32xf32> -> vector<16x32xf32>
    %168 = arith.addf %134, %167 : vector<16x32xf32>
    %169 = arith.addf %1, %168 : vector<16x32xf32>
    %c1_114 = arith.constant 1 : index
    %c0_115 = arith.constant 0 : index
    %170 = memref.load %arg1[%c1_114, %c0_115] : memref<2x2xf32, #tpu.memory_space<smem>>
    %c1_116 = arith.constant 1 : index
    %c1_117 = arith.constant 1 : index
    %171 = memref.load %arg1[%c1_116, %c1_117] : memref<2x2xf32, #tpu.memory_space<smem>>
    %cst_118 = arith.constant dense<0.000000e+00> : vector<16xf32>
    %172 = vector.multi_reduction <add>, %169, %cst_118 [1] : vector<16x32xf32> to vector<16xf32>
    %173 = vector.shape_cast %172 : vector<16xf32> to vector<16x1xf32>
    %cst_119 = arith.constant 3.200000e+01 : f32
    %174 = vector.broadcast %cst_119 : f32 to vector<16x1xf32>
    %175 = arith.divf %173, %174 : vector<16x1xf32>
    %176 = vector.broadcast %175 : vector<16x1xf32> to vector<16x32xf32>
    %177 = arith.subf %169, %176 : vector<16x32xf32>
    %178 = arith.mulf %177, %177 : vector<16x32xf32>
    %cst_120 = arith.constant dense<0.000000e+00> : vector<16xf32>
    %179 = vector.multi_reduction <add>, %178, %cst_120 [1] : vector<16x32xf32> to vector<16xf32>
    %180 = vector.shape_cast %179 : vector<16xf32> to vector<16x1xf32>
    %cst_121 = arith.constant 3.100000e+01 : f32
    %181 = vector.broadcast %cst_121 : f32 to vector<16x1xf32>
    %182 = arith.divf %180, %181 : vector<16x1xf32>
    %183 = math.sqrt %182 : vector<16x1xf32>
    %184 = vector.broadcast %175 : vector<16x1xf32> to vector<16x32xf32>
    %185 = arith.subf %169, %184 : vector<16x32xf32>
    %186 = vector.broadcast %170 : f32 to vector<16x32xf32>
    %187 = arith.mulf %186, %185 : vector<16x32xf32>
    %cst_122 = arith.constant 1.000000e-07 : f32
    %188 = vector.broadcast %cst_122 : f32 to vector<16x1xf32>
    %189 = arith.addf %183, %188 : vector<16x1xf32>
    %190 = vector.broadcast %189 : vector<16x1xf32> to vector<16x32xf32>
    %191 = arith.divf %187, %190 : vector<16x32xf32>
    %192 = vector.broadcast %171 : f32 to vector<16x32xf32>
    %193 = arith.addf %191, %192 : vector<16x32xf32>
    %c0_123 = arith.constant 0 : index
    %c0_124 = arith.constant 0 : index
    %194 = vector.load %arg6[%c0_123, %c0_124] : memref<32x64xf32, #tpu.memory_space<vmem>>, vector<32x64xf32>
    %cst_125 = arith.constant dense<0.000000e+00> : vector<16x64xf32>
    %195 = tpu.matmul %193, %194, %cst_125 {dimension_numbers = #tpu.dot_dimension_numbers<[1], [0], [0], [1], [0, 0, 1, 1], [], []>} : vector<16x32xf32>, vector<32x64xf32>, vector<16x64xf32> -> vector<16x64xf32>
    %c0_126 = arith.constant 0 : index
    %c0_127 = arith.constant 0 : index
    %196 = vector.load %arg7[%c0_126, %c0_127] : memref<1x64xf32, #tpu.memory_space<vmem>>, vector<1x64xf32>
    %197 = vector.broadcast %196 : vector<1x64xf32> to vector<16x64xf32>
    %198 = arith.addf %195, %197 : vector<16x64xf32>
    %cst_128 = arith.constant 0.000000e+00 : f32
    %199 = vector.broadcast %cst_128 : f32 to vector<16x64xf32>
    %200 = arith.maximumf %198, %199 : vector<16x64xf32>
    %c0_129 = arith.constant 0 : index
    %c0_130 = arith.constant 0 : index
    %201 = vector.load %arg8[%c0_129, %c0_130] : memref<64x32xf32, #tpu.memory_space<vmem>>, vector<64x32xf32>
    %cst_131 = arith.constant dense<0.000000e+00> : vector<16x32xf32>
    %202 = tpu.matmul %200, %201, %cst_131 {dimension_numbers = #tpu.dot_dimension_numbers<[1], [0], [0], [1], [0, 0, 1, 1], [], []>} : vector<16x64xf32>, vector<64x32xf32>, vector<16x32xf32> -> vector<16x32xf32>
    %c0_132 = arith.constant 0 : index
    %c0_133 = arith.constant 0 : index
    %203 = vector.load %arg9[%c0_132, %c0_133] : memref<1x32xf32, #tpu.memory_space<vmem>>, vector<1x32xf32>
    %204 = vector.broadcast %203 : vector<1x32xf32> to vector<16x32xf32>
    %205 = arith.addf %202, %204 : vector<16x32xf32>
    %206 = arith.addf %169, %205 : vector<16x32xf32>
    %207 = vector.shape_cast %206 : vector<16x32xf32> to vector<2x8x32xf32>
    %c0_134 = arith.constant 0 : index
    %c0_135 = arith.constant 0 : index
    %c0_136 = arith.constant 0 : index
    %208 = vector.load %arg10[%c0_134, %c0_135, %c0_136] : memref<2x8x32xf32, #tpu.memory_space<vmem>>, vector<2x8x32xf32>
    tpu.vector_store %arg10[%c0_134, %c0_135, %c0_136], %207 {strides = array<i32>} : memref<2x8x32xf32, #tpu.memory_space<vmem>>, vector<2x8x32xf32>,
    return
  }
  func.func @transform_0(%arg0: i32) -> (i32, i32) {
    %c0_i32 = arith.constant 0 : i32
    %c0_i32_0 = arith.constant 0 : i32
    %c0_i32_1 = arith.constant 0 : i32
    return %c0_i32, %c0_i32_0 : i32, i32
  }
  func.func @transform_1(%arg0: i32) -> (i32, i32, i32) {
    %c0_i32 = arith.constant 0 : i32
    %c0_i32_0 = arith.constant 0 : i32
    %c0_i32_1 = arith.constant 0 : i32
    return %arg0, %c0_i32, %c0_i32_0 : i32, i32, i32
  }
  func.func @transform_2(%arg0: i32) -> (i32, i32, i32) {
    %c0_i32 = arith.constant 0 : i32
    %c0_i32_0 = arith.constant 0 : i32
    %c0_i32_1 = arith.constant 0 : i32
    return %arg0, %c0_i32, %c0_i32_0 : i32, i32, i32
  }
  func.func @transform_3(%arg0: i32) -> (i32, i32, i32, i32) {
    %c0_i32 = arith.constant 0 : i32
    %c0_i32_0 = arith.constant 0 : i32
    %c0_i32_1 = arith.constant 0 : i32
    %c0_i32_2 = arith.constant 0 : i32
    %c0_i32_3 = arith.constant 0 : i32
    return %c0_i32, %c0_i32_0, %c0_i32_1, %c0_i32_2 : i32, i32, i32, i32
  }
  func.func @transform_4(%arg0: i32) -> (i32, i32, i32) {
    %c0_i32 = arith.constant 0 : i32
    %c0_i32_0 = arith.constant 0 : i32
    %c0_i32_1 = arith.constant 0 : i32
    %c0_i32_2 = arith.constant 0 : i32
    return %c0_i32, %c0_i32_0, %c0_i32_1 : i32, i32, i32
  }
  func.func @transform_5(%arg0: i32) -> (i32, i32) {
    %c0_i32 = arith.constant 0 : i32
    %c0_i32_0 = arith.constant 0 : i32
    %c0_i32_1 = arith.constant 0 : i32
    return %c0_i32, %c0_i32_0 : i32, i32
  }
  func.func @transform_6(%arg0: i32) -> (i32, i32) {
    %c0_i32 = arith.constant 0 : i32
    %c0_i32_0 = arith.constant 0 : i32
    %c0_i32_1 = arith.constant 0 : i32
    return %c0_i32, %c0_i32_0 : i32, i32
  }
  func.func @transform_7(%arg0: i32) -> (i32, i32) {
    %c0_i32 = arith.constant 0 : i32
    %c0_i32_0 = arith.constant 0 : i32
    %c0_i32_1 = arith.constant 0 : i32
    return %c0_i32, %c0_i32_0 : i32, i32
  }
  func.func @transform_8(%arg0: i32) -> (i32, i32) {
    %c0_i32 = arith.constant 0 : i32
    %c0_i32_0 = arith.constant 0 : i32
    %c0_i32_1 = arith.constant 0 : i32
    return %c0_i32, %c0_i32_0 : i32, i32
  }
  func.func @transform_9(%arg0: i32) -> (i32, i32, i32) {
    %c0_i32 = arith.constant 0 : i32
    %c0_i32_0 = arith.constant 0 : i32
    %c0_i32_1 = arith.constant 0 : i32
    return %arg0, %c0_i32, %c0_i32_0 : i32, i32, i32
  }
}

</mosaic_0001>

<llo_original>
// kernel: tpu_custom_call.1
$region0: #{tpu_custom_call.1}
  #allocation0 [shape = 'u32[]', space=smem, size = 0x4, offset = 0x4, fixed_abs, tag = 'smem constant byte address 0x4 - core index']
  #allocation1 [shape = 'u32[144,128]{1,0:T(1,128)}', space=vmem, size = 0x12000, scoped, tag = 'internal scratch']
  %s0 = inlined_call_operand.vmem [shape: f32[2,2], index: 0, kind: input, shape index: {}]
  %s1 = inlined_call_operand.vmem [shape: f32[2,1,8], index: 1, kind: input, shape index: {}]
  %s2 = inlined_call_operand.vmem [shape: f32[2,8,32], index: 2, kind: input, shape index: {}]
  %s3 = inlined_call_operand.vmem [shape: f32[3,4,32,8], index: 3, kind: input, shape index: {}]
  %s4 = inlined_call_operand.vmem [shape: f32[4,8,32], index: 4, kind: input, shape index: {}]
  %s5 = inlined_call_operand.vmem [shape: f32[32,64], index: 5, kind: input, shape index: {}]
  %s6 = inlined_call_operand.vmem [shape: f32[1,64], index: 6, kind: input, shape index: {}]
  %s7 = inlined_call_operand.vmem [shape: f32[64,32], index: 7, kind: input, shape index: {}]
  %s8 = inlined_call_operand.vmem [shape: f32[1,32], index: 8, kind: input, shape index: {}]
  %s9 = inlined_call_operand.hbm [shape: f32[2,8,32], index: 9, kind: output, shape index: {}]
  %s10 = sld [smem:[#allocation0]]
  $region50: #{tpu_custom_call.1} parent=0
    _
  %s12 = ssub.s32 1, %s10
  %s13 = scalar_select 0, %s12, %s10
  $region1: #{tpu_custom_call.1} parent=0
    #allocation2 [shape = 'u8[1024]{0}', space=smem, size = 0x400, scoped, tag = 'input window, operand 0, single buffered']
    #allocation3 [shape = 's32[1]{0}', space=sflag, size = 0x4, scoped, tag = 'scoped memory for tpu_custom_call.1']
    #allocation4 [shape = 's32[1]{0}', space=sflag, size = 0x4, scoped, tag = 'scoped memory for tpu_custom_call.1']
    #allocation5 [shape = 'u8[8192]{0}', space=vmem, size = 0x2000, scoped, tag = 'output window, operand 0, single buffered']
    %14 = vsyncpa [#allocation4], 0
    %15 = vsyncpa [#allocation3], 0
    // Predicated region
    $region2: #{tpu_custom_call.1} parent=1 // pred_check
      _
    $region3: #{tpu_custom_call.1} parent=1 // pred_check_branch
      %17 = sbr.rel (0) target = $region5
    $region4: #{tpu_custom_call.1} parent=1 // pred_region
      %s19 = ssub.s32 32, 32
      %20 = vsyncadd [#allocation4], %s19
      %s22 = sshll.u32 %s0, 4
      %s23 = int_to_ptr.vmem [resolvable:$true] %s22
      %25 = dma.vmem_to_smem %s23, 32, [#allocation2], [#allocation4]
    $region5: #{tpu_custom_call.1} parent=1 // pred_fallthru
      _
    // Predicated region
    $region6: #{tpu_custom_call.1} parent=1 // pred_check
      _
    $region7: #{tpu_custom_call.1} parent=1 // pred_check_branch
      %27 = sbr.rel (0) target = $region9
    $region8: #{tpu_custom_call.1} parent=1 // pred_region
      _
    $region9: #{tpu_custom_call.1} parent=1 // pred_fallthru
      _
    // Predicated region
    $region10: #{tpu_custom_call.1} parent=1 // pred_check
      _
    $region11: #{tpu_custom_call.1} parent=1 // pred_check_branch
      %29 = sbr.rel (0) target = $region13
    $region12: #{tpu_custom_call.1} parent=1 // pred_region
      _
    $region13: #{tpu_custom_call.1} parent=1 // pred_fallthru
      _
    // Predicated region
    $region14: #{tpu_custom_call.1} parent=1 // pred_check
      _
    $region15: #{tpu_custom_call.1} parent=1 // pred_check_branch
      %31 = sbr.rel (0) target = $region17
    $region16: #{tpu_custom_call.1} parent=1 // pred_region
      _
    $region17: #{tpu_custom_call.1} parent=1 // pred_fallthru
      _
    // Predicated region
    $region18: #{tpu_custom_call.1} parent=1 // pred_check
      _
    $region19: #{tpu_custom_call.1} parent=1 // pred_check_branch
      %33 = sbr.rel (0) target = $region21
    $region20: #{tpu_custom_call.1} parent=1 // pred_region
      _
    $region21: #{tpu_custom_call.1} parent=1 // pred_fallthru
      _
    // Predicated region
    $region22: #{tpu_custom_call.1} parent=1 // pred_check
      _
    $region23: #{tpu_custom_call.1} parent=1 // pred_check_branch
      %35 = sbr.rel (0) target = $region25
    $region24: #{tpu_custom_call.1} parent=1 // pred_region
      _
    $region25: #{tpu_custom_call.1} parent=1 // pred_fallthru
      _
    // Predicated region
    $region26: #{tpu_custom_call.1} parent=1 // pred_check
      _
    $region27: #{tpu_custom_call.1} parent=1 // pred_check_branch
      %37 = sbr.rel (0) target = $region29
    $region28: #{tpu_custom_call.1} parent=1 // pred_region
      _
    $region29: #{tpu_custom_call.1} parent=1 // pred_fallthru
      _
    // Predicated region
    $region30: #{tpu_custom_call.1} parent=1 // pred_check
      _
    $region31: #{tpu_custom_call.1} parent=1 // pred_check_branch
      %39 = sbr.rel (0) target = $region33
    $region32: #{tpu_custom_call.1} parent=1 // pred_region
      _
    $region33: #{tpu_custom_call.1} parent=1 // pred_fallthru
      _
    // Predicated region
    $region34: #{tpu_custom_call.1} parent=1 // pred_check
      _
    $region35: #{tpu_custom_call.1} parent=1 // pred_check_branch
      %41 = sbr.rel (0) target = $region37
    $region36: #{tpu_custom_call.1} parent=1 // pred_region
      _
    $region37: #{tpu_custom_call.1} parent=1 // pred_fallthru
      _
    // Predicated region
    $region38: #{tpu_custom_call.1} parent=1 // pred_check
      _
    $region39: #{tpu_custom_call.1} parent=1 // pred_check_branch
      %43 = sbr.rel (0) target = $region41
    $region40: #{tpu_custom_call.1} parent=1 // pred_region
      %44 = dma.done [#allocation4], 32
    $region41: #{tpu_custom_call.1} parent=1 // pred_fallthru
      _
    %45 = sfence
    %v46 = vld [vmem:[%s2] sm:$0xff]
    %v47 = vld [vmem:[%s2 + $0x8] sm:$0xff]
    %s48 = sld [smem:[#allocation2]]
    %s49 = sld [smem:[#allocation2 + $0x1]]
    %vm50 = vcmask 261120
    %v51 = vsel %vm50, %v46, 0.0
    %52 = vadd.xlane.f32.xlu0 %v51
    %v53 = vpop.xlane.xlu0 %52
    %v54 = vsel %vm50, %v47, 0.0
    %55 = vadd.xlane.f32.xlu0 %v54
    %v56 = vpop.xlane.xlu0 %55
    %v57 = vrcp.pop 32.0
    %v58 = vmul.f32 %v53, %v57
    %v59 = vmul.f32 %v56, %v57
    %v60 = vsub.f32 %v46, %v58
    %v61 = vsub.f32 %v47, %v59
    %v62 = vmul.f32 %v60, %v60
    %v63 = vmul.f32 %v61, %v61
    %v64 = vsel %vm50, %v62, 0.0
    %65 = vadd.xlane.f32.xlu0 %v64
    %v66 = vpop.xlane.xlu0 %65
    %v67 = vsel %vm50, %v63, 0.0
    %68 = vadd.xlane.f32.xlu0 %v67
    %v69 = vpop.xlane.xlu0 %68
    %v70 = vrcp.pop 31.0
    %v71 = vmul.f32 %v66, %v70
    %v72 = vmul.f32 %v69, %v70
    %v73 = vrsqrt.pop %v71
    %v74 = vmul.f32 %v71, %v73
    %vm75 = vcmp.eq.f32.partialorder %v71, inf
    %v76 = vsel %vm75, %v71, %v74
    %vm77 = vcmp.eq.f32.partialorder %v71, 0.0
    %v78 = vand.u32 %v71, 2147483648
    %v79 = vsel %vm77, %v78, %v76
    %v80 = vrsqrt.pop %v72
    %v81 = vmul.f32 %v72, %v80
    %vm82 = vcmp.eq.f32.partialorder %v72, inf
    %v83 = vsel %vm82, %v72, %v81
    %vm84 = vcmp.eq.f32.partialorder %v72, 0.0
    %v85 = vand.u32 %v72, 2147483648
    %v86 = vsel %vm84, %v85, %v83
    %v87 = vstv %s48
    %v88 = vmul.f32 %v87, %v60
    %v89 = vmul.f32 %v87, %v61
    %v90 = vadd.f32 %v79, 1e-07
    %v91 = vadd.f32 %v86, 1e-07
    %v92 = vrcp.pop %v90
    %v93 = vmul.f32 %v88, %v92
    %v94 = vrcp.pop %v91
    %v95 = vmul.f32 %v89, %v94
    %v96 = vstv %s49
    %v97 = vadd.f32 %v93, %v96
    %v98 = vadd.f32 %v95, %v96
    %v99 = vld [vmem:[%s1] sm:$0x1]
    %v100 = vld [vmem:[%s1 + $0x1] sm:$0x1]
    %vm101 = vcmp.eq.f32.partialorder %v99, 0.0
    %vm102 = vcmp.eq.f32.partialorder %v100, 0.0
    %v103 = vsel %vm101, -1e+08, 0.0
    %v104 = vsel %vm102, -1e+08, 0.0
    %v105 = vld [vmem:[%s3] sm:$0xff]
    %v106 = vld [vmem:[%s3 + $0x8] sm:$0xff]
    %v107 = vld [vmem:[%s3 + $0x10] sm:$0xff]
    %v108 = vld [vmem:[%s3 + $0x18] sm:$0xff]
    %v110 = vsel %vm50, %v97, 0
    %v113 = vsel %vm50, %v98, 0
    %115 = vmatprep.subr.mxu0 0.0
    %116 = vmatpush1.msra.mxu0 %v105
    %117 = vmatprep.subr.mxu0 0.0
    %118 = vmatpush1.msra.mxu0 %v106
    %119 = vmatprep.subr.mxu0 0.0
    %120 = vmatpush1.msra.mxu0 %v107
    %121 = vmatprep.subr.mxu0 0.0
    %122 = vmatpush1.msra.mxu0 %v108
    %123 = vmatprep.subr.mxu0 0.0
    %124 = vmatpush1.msra.mxu0 0.0
    %125 = vmatprep.subr.mxu0 0.0
    %126 = vmatpush1.msra.mxu0 0.0
    %127 = vmatprep.subr.mxu0 0.0
    %128 = vmatpush1.msra.mxu0 0.0
    %129 = vmatprep.subr.mxu0 0.0
    %130 = vmatpush1.msra.mxu0 0.0
    %131 = vmatprep.subr.mxu0 0.0
    %132 = vmatpush1.msra.mxu0 0.0
    %133 = vmatprep.subr.mxu0 0.0
    %134 = vmatpush1.msra.mxu0 0.0
    %135 = vmatprep.subr.mxu0 0.0
    %136 = vmatpush1.msra.mxu0 0.0
    %137 = vmatprep.subr.mxu0 0.0
    %138 = vmatpush1.msra.mxu0 0.0
    %139 = vmatprep.subr.mxu0 0.0
    %140 = vmatpush1.msra.mxu0 0.0
    %141 = vmatprep.subr.mxu0 0.0
    %142 = vmatpush1.msra.mxu0 0.0
    %143 = vmatprep.subr.mxu0 0.0
    %144 = vmatpush1.msra.mxu0 0.0
    %145 = vmatprep.subr.mxu0 0.0
    %146 = vmatpush1.msra.mxu0 0.0
    %147 = vmatprep.subr.mxu0 0.0
    %148 = vmatpush1.msra.mxu0 0.0
    %149 = vmatprep.subr.mxu0 0.0
    %150 = vmatpush1.msra.mxu0 0.0
    %151 = vmatprep.subr.mxu0 0.0
    %152 = vmatpush1.msra.mxu0 0.0
    %153 = vmatprep.subr.mxu0 0.0
    %154 = vmatpush1.msra.mxu0 0.0
    %155 = vmatprep.subr.mxu0 0.0
    %156 = vmatpush1.msra.mxu0 0.0
    %157 = vmatprep.subr.mxu0 0.0
    %158 = vmatpush1.msra.mxu0 0.0
    %159 = vmatprep.subr.mxu0 0.0
    %160 = vmatpush1.msra.mxu0 0.0
    %161 = vmatprep.subr.mxu0 0.0
    %162 = vmatpush1.msra.mxu0 0.0
    %163 = vmatprep.subr.mxu0 0.0
    %164 = vmatpush1.msra.mxu0 0.0
    %165 = vmatprep.subr.mxu0 0.0
    %166 = vmatpush1.msra.mxu0 0.0
    %167 = vmatprep.subr.mxu0 0.0
    %168 = vmatpush1.msra.mxu0 0.0
    %169 = vmatprep.subr.mxu0 0.0
    %170 = vmatpush1.msra.mxu0 0.0
    %171 = vmatprep.subr.mxu0 0.0
    %172 = vmatpush1.msra.mxu0 0.0
    %173 = vmatprep.subr.mxu0 0.0
    %174 = vmatpush1.msra.mxu0 0.0
    %175 = vmatprep.subr.mxu0 0.0
    %176 = vmatpush1.msra.mxu0 0.0
    %177 = vmatprep.subr.mxu0 0.0
    %178 = vmatpush1.msra.mxu0 0.0
    %179 = vmatprep.mubr.f32.mxu0 0.0
    %180 = vmatmul.mubr.f32.gmra.mrb[0].mxu0 %v110
    %v181 = vpop.f32.mrb[0].mxu0
    %v182 = vadd.f32 0.0, %v181
    %v183 = vpop.f32.mrb[0].mxu0
    %184 = vmatprep.mubr.f32.mxu0 0.0
    %185 = vmatmul.mubr.f32.gmra.mrb[0].mxu0 %v113
    %v186 = vpop.f32.mrb[0].mxu0
    %v187 = vadd.f32 0.0, %v186
    %v188 = vpop.f32.mrb[0].mxu0
    %189 = vdwg.mxu0
    %s190 = scalar_lea.vmem %s3, 128
    %v191 = vld [vmem:[%s190] sm:$0xff]
    %v192 = vld [vmem:[%s190 + $0x8] sm:$0xff]
    %v193 = vld [vmem:[%s190 + $0x10] sm:$0xff]
    %v194 = vld [vmem:[%s190 + $0x18] sm:$0xff]
    %195 = vmatprep.subr.mxu0 0.0
    %196 = vmatpush1.msra.mxu0 %v191
    %197 = vmatprep.subr.mxu0 0.0
    %198 = vmatpush1.msra.mxu0 %v192
    %199 = vmatprep.subr.mxu0 0.0
    %200 = vmatpush1.msra.mxu0 %v193
    %201 = vmatprep.subr.mxu0 0.0
    %202 = vmatpush1.msra.mxu0 %v194
    %203 = vmatprep.subr.mxu0 0.0
    %204 = vmatpush1.msra.mxu0 0.0
    %205 = vmatprep.subr.mxu0 0.0
    %206 = vmatpush1.msra.mxu0 0.0
    %207 = vmatprep.subr.mxu0 0.0
    %208 = vmatpush1.msra.mxu0 0.0
    %209 = vmatprep.subr.mxu0 0.0
    %210 = vmatpush1.msra.mxu0 0.0
    %211 = vmatprep.subr.mxu0 0.0
    %212 = vmatpush1.msra.mxu0 0.0
    %213 = vmatprep.subr.mxu0 0.0
    %214 = vmatpush1.msra.mxu0 0.0
    %215 = vmatprep.subr.mxu0 0.0
    %216 = vmatpush1.msra.mxu0 0.0
    %217 = vmatprep.subr.mxu0 0.0
    %218 = vmatpush1.msra.mxu0 0.0
    %219 = vmatprep.subr.mxu0 0.0
    %220 = vmatpush1.msra.mxu0 0.0
    %221 = vmatprep.subr.mxu0 0.0
    %222 = vmatpush1.msra.mxu0 0.0
    %223 = vmatprep.subr.mxu0 0.0
    %224 = vmatpush1.msra.mxu0 0.0
    %225 = vmatprep.subr.mxu0 0.0
    %226 = vmatpush1.msra.mxu0 0.0
    %227 = vmatprep.subr.mxu0 0.0
    %228 = vmatpush1.msra.mxu0 0.0
    %229 = vmatprep.subr.mxu0 0.0
    %230 = vmatpush1.msra.mxu0 0.0
    %231 = vmatprep.subr.mxu0 0.0
    %232 = vmatpush1.msra.mxu0 0.0
    %233 = vmatprep.subr.mxu0 0.0
    %234 = vmatpush1.msra.mxu0 0.0
    %235 = vmatprep.subr.mxu0 0.0
    %236 = vmatpush1.msra.mxu0 0.0
    %237 = vmatprep.subr.mxu0 0.0
    %238 = vmatpush1.msra.mxu0 0.0
    %239 = vmatprep.subr.mxu0 0.0
    %240 = vmatpush1.msra.mxu0 0.0
    %241 = vmatprep.subr.mxu0 0.0
    %242 = vmatpush1.msra.mxu0 0.0
    %243 = vmatprep.subr.mxu0 0.0
    %244 = vmatpush1.msra.mxu0 0.0
    %245 = vmatprep.subr.mxu0 0.0
    %246 = vmatpush1.msra.mxu0 0.0
    %247 = vmatprep.subr.mxu0 0.0
    %248 = vmatpush1.msra.mxu0 0.0
    %249 = vmatprep.subr.mxu0 0.0
    %250 = vmatpush1.msra.mxu0 0.0
    %251 = vmatprep.subr.mxu0 0.0
    %252 = vmatpush1.msra.mxu0 0.0
    %253 = vmatprep.subr.mxu0 0.0
    %254 = vmatpush1.msra.mxu0 0.0
    %255 = vmatprep.subr.mxu0 0.0
    %256 = vmatpush1.msra.mxu0 0.0
    %257 = vmatprep.subr.mxu0 0.0
    %258 = vmatpush1.msra.mxu0 0.0
    %259 = vmatprep.mubr.f32.mxu0 0.0
    %260 = vmatmul.mubr.f32.gmra.mrb[0].mxu0 %v110
    %v261 = vpop.f32.mrb[0].mxu0
    %v262 = vadd.f32 0.0, %v261
    %v263 = vpop.f32.mrb[0].mxu0
    %264 = vmatprep.mubr.f32.mxu0 0.0
    %265 = vmatmul.mubr.f32.gmra.mrb[0].mxu0 %v113
    %v266 = vpop.f32.mrb[0].mxu0
    %v267 = vadd.f32 0.0, %v266
    %v268 = vpop.f32.mrb[0].mxu0
    %269 = vdwg.mxu0
    %s270 = scalar_lea.vmem %s3, 256
    %v271 = vld [vmem:[%s270] sm:$0xff]
    %v272 = vld [vmem:[%s270 + $0x8] sm:$0xff]
    %v273 = vld [vmem:[%s270 + $0x10] sm:$0xff]
    %v274 = vld [vmem:[%s270 + $0x18] sm:$0xff]
    %275 = vmatprep.subr.mxu0 0.0
    %276 = vmatpush1.msra.mxu0 %v271
    %277 = vmatprep.subr.mxu0 0.0
    %278 = vmatpush1.msra.mxu0 %v272
    %279 = vmatprep.subr.mxu0 0.0
    %280 = vmatpush1.msra.mxu0 %v273
    %281 = vmatprep.subr.mxu0 0.0
    %282 = vmatpush1.msra.mxu0 %v274
    %283 = vmatprep.subr.mxu0 0.0
    %284 = vmatpush1.msra.mxu0 0.0
    %285 = vmatprep.subr.mxu0 0.0
    %286 = vmatpush1.msra.mxu0 0.0
    %287 = vmatprep.subr.mxu0 0.0
    %288 = vmatpush1.msra.mxu0 0.0
    %289 = vmatprep.subr.mxu0 0.0
    %290 = vmatpush1.msra.mxu0 0.0
    %291 = vmatprep.subr.mxu0 0.0
    %292 = vmatpush1.msra.mxu0 0.0
    %293 = vmatprep.subr.mxu0 0.0
    %294 = vmatpush1.msra.mxu0 0.0
    %295 = vmatprep.subr.mxu0 0.0
    %296 = vmatpush1.msra.mxu0 0.0
    %297 = vmatprep.subr.mxu0 0.0
    %298 = vmatpush1.msra.mxu0 0.0
    %299 = vmatprep.subr.mxu0 0.0
    %300 = vmatpush1.msra.mxu0 0.0
    %301 = vmatprep.subr.mxu0 0.0
    %302 = vmatpush1.msra.mxu0 0.0
    %303 = vmatprep.subr.mxu0 0.0
    %304 = vmatpush1.msra.mxu0 0.0
    %305 = vmatprep.subr.mxu0 0.0
    %306 = vmatpush1.msra.mxu0 0.0
    %307 = vmatprep.subr.mxu0 0.0
    %308 = vmatpush1.msra.mxu0 0.0
    %309 = vmatprep.subr.mxu0 0.0
    %310 = vmatpush1.msra.mxu0 0.0
    %311 = vmatprep.subr.mxu0 0.0
    %312 = vmatpush1.msra.mxu0 0.0
    %313 = vmatprep.subr.mxu0 0.0
    %314 = vmatpush1.msra.mxu0 0.0
    %315 = vmatprep.subr.mxu0 0.0
    %316 = vmatpush1.msra.mxu0 0.0
    %317 = vmatprep.subr.mxu0 0.0
    %318 = vmatpush1.msra.mxu0 0.0
    %319 = vmatprep.subr.mxu0 0.0
    %320 = vmatpush1.msra.mxu0 0.0
    %321 = vmatprep.subr.mxu0 0.0
    %322 = vmatpush1.msra.mxu0 0.0
    %323 = vmatprep.subr.mxu0 0.0
    %324 = vmatpush1.msra.mxu0 0.0
    %325 = vmatprep.subr.mxu0 0.0
    %326 = vmatpush1.msra.mxu0 0.0
    %327 = vmatprep.subr.mxu0 0.0
    %328 = vmatpush1.msra.mxu0 0.0
    %329 = vmatprep.subr.mxu0 0.0
    %330 = vmatpush1.msra.mxu0 0.0
    %331 = vmatprep.subr.mxu0 0.0
    %332 = vmatpush1.msra.mxu0 0.0
    %333 = vmatprep.subr.mxu0 0.0
    %334 = vmatpush1.msra.mxu0 0.0
    %335 = vmatprep.subr.mxu0 0.0
    %336 = vmatpush1.msra.mxu0 0.0
    %337 = vmatprep.subr.mxu0 0.0
    %338 = vmatpush1.msra.mxu0 0.0
    %339 = vmatprep.mubr.f32.mxu0 0.0
    %340 = vmatmul.mubr.f32.gmra.mrb[0].mxu0 %v110
    %v341 = vpop.f32.mrb[0].mxu0
    %v342 = vadd.f32 0.0, %v341
    %v343 = vpop.f32.mrb[0].mxu0
    %344 = vmatprep.mubr.f32.mxu0 0.0
    %345 = vmatmul.mubr.f32.gmra.mrb[0].mxu0 %v113
    %v346 = vpop.f32.mrb[0].mxu0
    %v347 = vadd.f32 0.0, %v346
    %v348 = vpop.f32.mrb[0].mxu0
    %349 = vdwg.mxu0
    %vm350 = vcmask 64512
    %v352 = vsel %vm350, %v182, 0
    %v355 = vsel %vm350, %v262, 0
    %357 = vmatprep.subr.mxu0 0.0
    %358 = vmatpush1.xpose.msra.mxu0 %v355
    %359 = vmatprep.subr.mxu0 0.0
    %360 = vmatpush1.xpose.msra.mxu0 0.0
    %361 = vmatprep.subr.mxu0 0.0
    %362 = vmatpush1.xpose.msra.mxu0 0.0
    %363 = vmatprep.subr.mxu0 0.0
    %364 = vmatpush1.xpose.msra.mxu0 0.0
    %365 = vmatprep.subr.mxu0 0.0
    %366 = vmatpush1.xpose.msra.mxu0 0.0
    %367 = vmatprep.subr.mxu0 0.0
    %368 = vmatpush1.xpose.msra.mxu0 0.0
    %369 = vmatprep.subr.mxu0 0.0
    %370 = vmatpush1.xpose.msra.mxu0 0.0
    %371 = vmatprep.subr.mxu0 0.0
    %372 = vmatpush1.xpose.msra.mxu0 0.0
    %373 = vmatprep.subr.mxu0 0.0
    %374 = vmatpush1.xpose.msra.mxu0 0.0
    %375 = vmatprep.subr.mxu0 0.0
    %376 = vmatpush1.xpose.msra.mxu0 0.0
    %377 = vmatprep.subr.mxu0 0.0
    %378 = vmatpush1.xpose.msra.mxu0 0.0
    %379 = vmatprep.subr.mxu0 0.0
    %380 = vmatpush1.xpose.msra.mxu0 0.0
    %381 = vmatprep.subr.mxu0 0.0
    %382 = vmatpush1.xpose.msra.mxu0 0.0
    %383 = vmatprep.subr.mxu0 0.0
    %384 = vmatpush1.xpose.msra.mxu0 0.0
    %385 = vmatprep.subr.mxu0 0.0
    %386 = vmatpush1.xpose.msra.mxu0 0.0
    %387 = vmatprep.subr.mxu0 0.0
    %388 = vmatpush1.xpose.msra.mxu0 0.0
    %389 = vmatprep.subr.mxu0 0.0
    %390 = vmatpush1.xpose.msra.mxu0 0.0
    %391 = vmatprep.subr.mxu0 0.0
    %392 = vmatpush1.xpose.msra.mxu0 0.0
    %393 = vmatprep.subr.mxu0 0.0
    %394 = vmatpush1.xpose.msra.mxu0 0.0
    %395 = vmatprep.subr.mxu0 0.0
    %396 = vmatpush1.xpose.msra.mxu0 0.0
    %397 = vmatprep.subr.mxu0 0.0
    %398 = vmatpush1.xpose.msra.mxu0 0.0
    %399 = vmatprep.subr.mxu0 0.0
    %400 = vmatpush1.xpose.msra.mxu0 0.0
    %401 = vmatprep.subr.mxu0 0.0
    %402 = vmatpush1.xpose.msra.mxu0 0.0
    %403 = vmatprep.subr.mxu0 0.0
    %404 = vmatpush1.xpose.msra.mxu0 0.0
    %405 = vmatprep.subr.mxu0 0.0
    %406 = vmatpush1.xpose.msra.mxu0 0.0
    %407 = vmatprep.subr.mxu0 0.0
    %408 = vmatpush1.xpose.msra.mxu0 0.0
    %409 = vmatprep.subr.mxu0 0.0
    %410 = vmatpush1.xpose.msra.mxu0 0.0
    %411 = vmatprep.subr.mxu0 0.0
    %412 = vmatpush1.xpose.msra.mxu0 0.0
    %413 = vmatprep.subr.mxu0 0.0
    %414 = vmatpush1.xpose.msra.mxu0 0.0
    %415 = vmatprep.subr.mxu0 0.0
    %416 = vmatpush1.xpose.msra.mxu0 0.0
    %417 = vmatprep.subr.mxu0 0.0
    %418 = vmatpush1.xpose.msra.mxu0 0.0
    %419 = vmatprep.subr.mxu0 0.0
    %420 = vmatpush1.xpose.msra.mxu0 0.0
    %421 = vmatprep.mubr.f32.mxu0 0.0
    %422 = vmatmul.mubr.f32.gmra.mrb[0].mxu0 %v352
    %v423 = vpop.f32.mrb[0].mxu0
    %v424 = vadd.f32 0.0, %v423
    %v425 = vpop.f32.mrb[0].mxu0
    %426 = vdwg.mxu0
    %v428 = vsel %vm350, %v187, 0
    %v431 = vsel %vm350, %v267, 0
    %433 = vmatprep.subr.mxu0 0.0
    %434 = vmatpush1.xpose.msra.mxu0 %v431
    %435 = vmatprep.subr.mxu0 0.0
    %436 = vmatpush1.xpose.msra.mxu0 0.0
    %437 = vmatprep.subr.mxu0 0.0
    %438 = vmatpush1.xpose.msra.mxu0 0.0
    %439 = vmatprep.subr.mxu0 0.0
    %440 = vmatpush1.xpose.msra.mxu0 0.0
    %441 = vmatprep.subr.mxu0 0.0
    %442 = vmatpush1.xpose.msra.mxu0 0.0
    %443 = vmatprep.subr.mxu0 0.0
    %444 = vmatpush1.xpose.msra.mxu0 0.0
    %445 = vmatprep.subr.mxu0 0.0
    %446 = vmatpush1.xpose.msra.mxu0 0.0
    %447 = vmatprep.subr.mxu0 0.0
    %448 = vmatpush1.xpose.msra.mxu0 0.0
    %449 = vmatprep.subr.mxu0 0.0
    %450 = vmatpush1.xpose.msra.mxu0 0.0
    %451 = vmatprep.subr.mxu0 0.0
    %452 = vmatpush1.xpose.msra.mxu0 0.0
    %453 = vmatprep.subr.mxu0 0.0
    %454 = vmatpush1.xpose.msra.mxu0 0.0
    %455 = vmatprep.subr.mxu0 0.0
    %456 = vmatpush1.xpose.msra.mxu0 0.0
    %457 = vmatprep.subr.mxu0 0.0
    %458 = vmatpush1.xpose.msra.mxu0 0.0
    %459 = vmatprep.subr.mxu0 0.0
    %460 = vmatpush1.xpose.msra.mxu0 0.0
    %461 = vmatprep.subr.mxu0 0.0
    %462 = vmatpush1.xpose.msra.mxu0 0.0
    %463 = vmatprep.subr.mxu0 0.0
    %464 = vmatpush1.xpose.msra.mxu0 0.0
    %465 = vmatprep.subr.mxu0 0.0
    %466 = vmatpush1.xpose.msra.mxu0 0.0
    %467 = vmatprep.subr.mxu0 0.0
    %468 = vmatpush1.xpose.msra.mxu0 0.0
    %469 = vmatprep.subr.mxu0 0.0
    %470 = vmatpush1.xpose.msra.mxu0 0.0
    %471 = vmatprep.subr.mxu0 0.0
    %472 = vmatpush1.xpose.msra.mxu0 0.0
    %473 = vmatprep.subr.mxu0 0.0
    %474 = vmatpush1.xpose.msra.mxu0 0.0
    %475 = vmatprep.subr.mxu0 0.0
    %476 = vmatpush1.xpose.msra.mxu0 0.0
    %477 = vmatprep.subr.mxu0 0.0
    %478 = vmatpush1.xpose.msra.mxu0 0.0
    %479 = vmatprep.subr.mxu0 0.0
    %480 = vmatpush1.xpose.msra.mxu0 0.0
    %481 = vmatprep.subr.mxu0 0.0
    %482 = vmatpush1.xpose.msra.mxu0 0.0
    %483 = vmatprep.subr.mxu0 0.0
    %484 = vmatpush1.xpose.msra.mxu0 0.0
    %485 = vmatprep.subr.mxu0 0.0
    %486 = vmatpush1.xpose.msra.mxu0 0.0
    %487 = vmatprep.subr.mxu0 0.0
    %488 = vmatpush1.xpose.msra.mxu0 0.0
    %489 = vmatprep.subr.mxu0 0.0
    %490 = vmatpush1.xpose.msra.mxu0 0.0
    %491 = vmatprep.subr.mxu0 0.0
    %492 = vmatpush1.xpose.msra.mxu0 0.0
    %493 = vmatprep.subr.mxu0 0.0
    %494 = vmatpush1.xpose.msra.mxu0 0.0
    %495 = vmatprep.subr.mxu0 0.0
    %496 = vmatpush1.xpose.msra.mxu0 0.0
    %497 = vmatprep.mubr.f32.mxu0 0.0
    %498 = vmatmul.mubr.f32.gmra.mrb[0].mxu0 %v428
    %v499 = vpop.f32.mrb[0].mxu0
    %v500 = vadd.f32 0.0, %v499
    %v501 = vpop.f32.mrb[0].mxu0
    %502 = vdwg.mxu0
    %v503 = vmul.f32 %v424, 0.35355338
    %v504 = vmul.f32 %v500, 0.35355338
    %v507 = vlaneseq
    %v508 = vshrl.u32 %v507, 7
    %v509 = vsub.s32 0, %v508
    %v510 = vrot.slane %v103, %v509
    %v511 = vlaneseq
    %v512 = vshrl.u32 %v511, 7
    %v513 = vsub.s32 0, %v512
    %v514 = vrot.slane %v104, %v513
    %v517 = vadd.f32 %v503, %v510
    %v518 = vadd.f32 %v504, %v514
    %v519 = vsel %vm350, %v517, -inf
    %520 = vmax.xlane.f32.xlu0 %v519
    %v521 = vpop.xlane.xlu0 %520
    %v522 = vsel %vm350, %v518, -inf
    %523 = vmax.xlane.f32.xlu0 %v522
    %v524 = vpop.xlane.xlu0 %523
    %v525 = vsub.f32 %v517, %v521
    %v526 = vsub.f32 %v518, %v524
    %v527 = vmul.f32 %v525, 1.442695
    %v528 = vpow.pop %v527
    %v529 = vmul.f32 %v526, 1.442695
    %v530 = vpow.pop %v529
    %v531 = vsel %vm350, %v528, 0.0
    %532 = vadd.xlane.f32.xlu0 %v531
    %v533 = vpop.xlane.xlu0 %532
    %v534 = vsel %vm350, %v530, 0.0
    %535 = vadd.xlane.f32.xlu0 %v534
    %v536 = vpop.xlane.xlu0 %535
    %v537 = vrcp.pop %v533
    %v538 = vmul.f32 1.0, %v537
    %v539 = vrcp.pop %v536
    %v540 = vmul.f32 1.0, %v539
    %v541 = vmul.f32 %v528, %v538
    %v542 = vmul.f32 %v530, %v540
    %v544 = vsel %vm350, %v541, 0
    %546 = vmatprep.subr.mxu0 0.0
    %547 = vmatpush1.msra.mxu0 %v342
    %548 = vmatprep.subr.mxu0 0.0
    %549 = vmatpush1.msra.mxu0 0.0
    %550 = vmatprep.subr.mxu0 0.0
    %551 = vmatpush1.msra.mxu0 0.0
    %552 = vmatprep.subr.mxu0 0.0
    %553 = vmatpush1.msra.mxu0 0.0
    %554 = vmatprep.subr.mxu0 0.0
    %555 = vmatpush1.msra.mxu0 0.0
    %556 = vmatprep.subr.mxu0 0.0
    %557 = vmatpush1.msra.mxu0 0.0
    %558 = vmatprep.subr.mxu0 0.0
    %559 = vmatpush1.msra.mxu0 0.0
    %560 = vmatprep.subr.mxu0 0.0
    %561 = vmatpush1.msra.mxu0 0.0
    %562 = vmatprep.subr.mxu0 0.0
    %563 = vmatpush1.msra.mxu0 0.0
    %564 = vmatprep.subr.mxu0 0.0
    %565 = vmatpush1.msra.mxu0 0.0
    %566 = vmatprep.subr.mxu0 0.0
    %567 = vmatpush1.msra.mxu0 0.0
    %568 = vmatprep.subr.mxu0 0.0
    %569 = vmatpush1.msra.mxu0 0.0
    %570 = vmatprep.subr.mxu0 0.0
    %571 = vmatpush1.msra.mxu0 0.0
    %572 = vmatprep.subr.mxu0 0.0
    %573 = vmatpush1.msra.mxu0 0.0
    %574 = vmatprep.subr.mxu0 0.0
    %575 = vmatpush1.msra.mxu0 0.0
    %576 = vmatprep.subr.mxu0 0.0
    %577 = vmatpush1.msra.mxu0 0.0
    %578 = vmatprep.subr.mxu0 0.0
    %579 = vmatpush1.msra.mxu0 0.0
    %580 = vmatprep.subr.mxu0 0.0
    %581 = vmatpush1.msra.mxu0 0.0
    %582 = vmatprep.subr.mxu0 0.0
    %583 = vmatpush1.msra.mxu0 0.0
    %584 = vmatprep.subr.mxu0 0.0
    %585 = vmatpush1.msra.mxu0 0.0
    %586 = vmatprep.subr.mxu0 0.0
    %587 = vmatpush1.msra.mxu0 0.0
    %588 = vmatprep.subr.mxu0 0.0
    %589 = vmatpush1.msra.mxu0 0.0
    %590 = vmatprep.subr.mxu0 0.0
    %591 = vmatpush1.msra.mxu0 0.0
    %592 = vmatprep.subr.mxu0 0.0
    %593 = vmatpush1.msra.mxu0 0.0
    %594 = vmatprep.subr.mxu0 0.0
    %595 = vmatpush1.msra.mxu0 0.0
    %596 = vmatprep.subr.mxu0 0.0
    %597 = vmatpush1.msra.mxu0 0.0
    %598 = vmatprep.subr.mxu0 0.0
    %599 = vmatpush1.msra.mxu0 0.0
    %600 = vmatprep.subr.mxu0 0.0
    %601 = vmatpush1.msra.mxu0 0.0
    %602 = vmatprep.subr.mxu0 0.0
    %603 = vmatpush1.msra.mxu0 0.0
    %604 = vmatprep.subr.mxu0 0.0
    %605 = vmatpush1.msra.mxu0 0.0
    %606 = vmatprep.subr.mxu0 0.0
    %607 = vmatpush1.msra.mxu0 0.0
    %608 = vmatprep.subr.mxu0 0.0
    %609 = vmatpush1.msra.mxu0 0.0
    %610 = vmatprep.mubr.f32.mxu0 0.0
    %611 = vmatmul.mubr.f32.gmra.mrb[0].mxu0 %v544
    %v612 = vpop.f32.mrb[0].mxu0
    %v613 = vadd.f32 0.0, %v612
    %v614 = vpop.f32.mrb[0].mxu0
    %615 = vdwg.mxu0
    %v617 = vsel %vm350, %v542, 0
    %619 = vmatprep.subr.mxu0 0.0
    %620 = vmatpush1.msra.mxu0 %v347
    %621 = vmatprep.subr.mxu0 0.0
    %622 = vmatpush1.msra.mxu0 0.0
    %623 = vmatprep.subr.mxu0 0.0
    %624 = vmatpush1.msra.mxu0 0.0
    %625 = vmatprep.subr.mxu0 0.0
    %626 = vmatpush1.msra.mxu0 0.0
    %627 = vmatprep.subr.mxu0 0.0
    %628 = vmatpush1.msra.mxu0 0.0
    %629 = vmatprep.subr.mxu0 0.0
    %630 = vmatpush1.msra.mxu0 0.0
    %631 = vmatprep.subr.mxu0 0.0
    %632 = vmatpush1.msra.mxu0 0.0
    %633 = vmatprep.subr.mxu0 0.0
    %634 = vmatpush1.msra.mxu0 0.0
    %635 = vmatprep.subr.mxu0 0.0
    %636 = vmatpush1.msra.mxu0 0.0
    %637 = vmatprep.subr.mxu0 0.0
    %638 = vmatpush1.msra.mxu0 0.0
    %639 = vmatprep.subr.mxu0 0.0
    %640 = vmatpush1.msra.mxu0 0.0
    %641 = vmatprep.subr.mxu0 0.0
    %642 = vmatpush1.msra.mxu0 0.0
    %643 = vmatprep.subr.mxu0 0.0
    %644 = vmatpush1.msra.mxu0 0.0
    %645 = vmatprep.subr.mxu0 0.0
    %646 = vmatpush1.msra.mxu0 0.0
    %647 = vmatprep.subr.mxu0 0.0
    %648 = vmatpush1.msra.mxu0 0.0
    %649 = vmatprep.subr.mxu0 0.0
    %650 = vmatpush1.msra.mxu0 0.0
    %651 = vmatprep.subr.mxu0 0.0
    %652 = vmatpush1.msra.mxu0 0.0
    %653 = vmatprep.subr.mxu0 0.0
    %654 = vmatpush1.msra.mxu0 0.0
    %655 = vmatprep.subr.mxu0 0.0
    %656 = vmatpush1.msra.mxu0 0.0
    %657 = vmatprep.subr.mxu0 0.0
    %658 = vmatpush1.msra.mxu0 0.0
    %659 = vmatprep.subr.mxu0 0.0
    %660 = vmatpush1.msra.mxu0 0.0
    %661 = vmatprep.subr.mxu0 0.0
    %662 = vmatpush1.msra.mxu0 0.0
    %663 = vmatprep.subr.mxu0 0.0
    %664 = vmatpush1.msra.mxu0 0.0
    %665 = vmatprep.subr.mxu0 0.0
    %666 = vmatpush1.msra.mxu0 0.0
    %667 = vmatprep.subr.mxu0 0.0
    %668 = vmatpush1.msra.mxu0 0.0
    %669 = vmatprep.subr.mxu0 0.0
    %670 = vmatpush1.msra.mxu0 0.0
    %671 = vmatprep.subr.mxu0 0.0
    %672 = vmatpush1.msra.mxu0 0.0
    %673 = vmatprep.subr.mxu0 0.0
    %674 = vmatpush1.msra.mxu0 0.0
    %675 = vmatprep.subr.mxu0 0.0
    %676 = vmatpush1.msra.mxu0 0.0
    %677 = vmatprep.subr.mxu0 0.0
    %678 = vmatpush1.msra.mxu0 0.0
    %679 = vmatprep.subr.mxu0 0.0
    %680 = vmatpush1.msra.mxu0 0.0
    %681 = vmatprep.subr.mxu0 0.0
    %682 = vmatpush1.msra.mxu0 0.0
    %683 = vmatprep.mubr.f32.mxu0 0.0
    %684 = vmatmul.mubr.f32.gmra.mrb[0].mxu0 %v617
    %v685 = vpop.f32.mrb[0].mxu0
    %v686 = vadd.f32 0.0, %v685
    %v687 = vpop.f32.mrb[0].mxu0
    %688 = vdwg.mxu0
    %v689 = vld [vmem:[%s4] sm:$0xff]
    %s690 = scalar_lea.vmem %s3, 32
    %v691 = vld [vmem:[%s690] sm:$0xff]
    %v692 = vld [vmem:[%s690 + $0x8] sm:$0xff]
    %v693 = vld [vmem:[%s690 + $0x10] sm:$0xff]
    %v694 = vld [vmem:[%s690 + $0x18] sm:$0xff]
    %695 = vmatprep.subr.mxu0 0.0
    %696 = vmatpush1.msra.mxu0 %v691
    %697 = vmatprep.subr.mxu0 0.0
    %698 = vmatpush1.msra.mxu0 %v692
    %699 = vmatprep.subr.mxu0 0.0
    %700 = vmatpush1.msra.mxu0 %v693
    %701 = vmatprep.subr.mxu0 0.0
    %702 = vmatpush1.msra.mxu0 %v694
    %703 = vmatprep.subr.mxu0 0.0
    %704 = vmatpush1.msra.mxu0 0.0
    %705 = vmatprep.subr.mxu0 0.0
    %706 = vmatpush1.msra.mxu0 0.0
    %707 = vmatprep.subr.mxu0 0.0
    %708 = vmatpush1.msra.mxu0 0.0
    %709 = vmatprep.subr.mxu0 0.0
    %710 = vmatpush1.msra.mxu0 0.0
    %711 = vmatprep.subr.mxu0 0.0
    %712 = vmatpush1.msra.mxu0 0.0
    %713 = vmatprep.subr.mxu0 0.0
    %714 = vmatpush1.msra.mxu0 0.0
    %715 = vmatprep.subr.mxu0 0.0
    %716 = vmatpush1.msra.mxu0 0.0
    %717 = vmatprep.subr.mxu0 0.0
    %718 = vmatpush1.msra.mxu0 0.0
    %719 = vmatprep.subr.mxu0 0.0
    %720 = vmatpush1.msra.mxu0 0.0
    %721 = vmatprep.subr.mxu0 0.0
    %722 = vmatpush1.msra.mxu0 0.0
    %723 = vmatprep.subr.mxu0 0.0
    %724 = vmatpush1.msra.mxu0 0.0
    %725 = vmatprep.subr.mxu0 0.0
    %726 = vmatpush1.msra.mxu0 0.0
    %727 = vmatprep.subr.mxu0 0.0
    %728 = vmatpush1.msra.mxu0 0.0
    %729 = vmatprep.subr.mxu0 0.0
    %730 = vmatpush1.msra.mxu0 0.0
    %731 = vmatprep.subr.mxu0 0.0
    %732 = vmatpush1.msra.mxu0 0.0
    %733 = vmatprep.subr.mxu0 0.0
    %734 = vmatpush1.msra.mxu0 0.0
    %735 = vmatprep.subr.mxu0 0.0
    %736 = vmatpush1.msra.mxu0 0.0
    %737 = vmatprep.subr.mxu0 0.0
    %738 = vmatpush1.msra.mxu0 0.0
    %739 = vmatprep.subr.mxu0 0.0
    %740 = vmatpush1.msra.mxu0 0.0
    %741 = vmatprep.subr.mxu0 0.0
    %742 = vmatpush1.msra.mxu0 0.0
    %743 = vmatprep.subr.mxu0 0.0
    %744 = vmatpush1.msra.mxu0 0.0
    %745 = vmatprep.subr.mxu0 0.0
    %746 = vmatpush1.msra.mxu0 0.0
    %747 = vmatprep.subr.mxu0 0.0
    %748 = vmatpush1.msra.mxu0 0.0
    %749 = vmatprep.subr.mxu0 0.0
    %750 = vmatpush1.msra.mxu0 0.0
    %751 = vmatprep.subr.mxu0 0.0
    %752 = vmatpush1.msra.mxu0 0.0
    %753 = vmatprep.subr.mxu0 0.0
    %754 = vmatpush1.msra.mxu0 0.0
    %755 = vmatprep.subr.mxu0 0.0
    %756 = vmatpush1.msra.mxu0 0.0
    %757 = vmatprep.subr.mxu0 0.0
    %758 = vmatpush1.msra.mxu0 0.0
    %759 = vmatprep.mubr.f32.mxu0 0.0
    %760 = vmatmul.mubr.f32.gmra.mrb[0].mxu0 %v110
    %v761 = vpop.f32.mrb[0].mxu0
    %v762 = vadd.f32 0.0, %v761
    %v763 = vpop.f32.mrb[0].mxu0
    %764 = vmatprep.mubr.f32.mxu0 0.0
    %765 = vmatmul.mubr.f32.gmra.mrb[0].mxu0 %v113
    %v766 = vpop.f32.mrb[0].mxu0
    %v767 = vadd.f32 0.0, %v766
    %v768 = vpop.f32.mrb[0].mxu0
    %769 = vdwg.mxu0
    %s770 = scalar_lea.vmem %s3, 160
    %v771 = vld [vmem:[%s770] sm:$0xff]
    %v772 = vld [vmem:[%s770 + $0x8] sm:$0xff]
    %v773 = vld [vmem:[%s770 + $0x10] sm:$0xff]
    %v774 = vld [vmem:[%s770 + $0x18] sm:$0xff]
    %775 = vmatprep.subr.mxu0 0.0
    %776 = vmatpush1.msra.mxu0 %v771
    %777 = vmatprep.subr.mxu0 0.0
    %778 = vmatpush1.msra.mxu0 %v772
    %779 = vmatprep.subr.mxu0 0.0
    %780 = vmatpush1.msra.mxu0 %v773
    %781 = vmatprep.subr.mxu0 0.0
    %782 = vmatpush1.msra.mxu0 %v774
    %783 = vmatprep.subr.mxu0 0.0
    %784 = vmatpush1.msra.mxu0 0.0
    %785 = vmatprep.subr.mxu0 0.0
    %786 = vmatpush1.msra.mxu0 0.0
    %787 = vmatprep.subr.mxu0 0.0
    %788 = vmatpush1.msra.mxu0 0.0
    %789 = vmatprep.subr.mxu0 0.0
    %790 = vmatpush1.msra.mxu0 0.0
    %791 = vmatprep.subr.mxu0 0.0
    %792 = vmatpush1.msra.mxu0 0.0
    %793 = vmatprep.subr.mxu0 0.0
    %794 = vmatpush1.msra.mxu0 0.0
    %795 = vmatprep.subr.mxu0 0.0
    %796 = vmatpush1.msra.mxu0 0.0
    %797 = vmatprep.subr.mxu0 0.0
    %798 = vmatpush1.msra.mxu0 0.0
    %799 = vmatprep.subr.mxu0 0.0
    %800 = vmatpush1.msra.mxu0 0.0
    %801 = vmatprep.subr.mxu0 0.0
    %802 = vmatpush1.msra.mxu0 0.0
    %803 = vmatprep.subr.mxu0 0.0
    %804 = vmatpush1.msra.mxu0 0.0
    %805 = vmatprep.subr.mxu0 0.0
    %806 = vmatpush1.msra.mxu0 0.0
    %807 = vmatprep.subr.mxu0 0.0
    %808 = vmatpush1.msra.mxu0 0.0
    %809 = vmatprep.subr.mxu0 0.0
    %810 = vmatpush1.msra.mxu0 0.0
    %811 = vmatprep.subr.mxu0 0.0
    %812 = vmatpush1.msra.mxu0 0.0
    %813 = vmatprep.subr.mxu0 0.0
    %814 = vmatpush1.msra.mxu0 0.0
    %815 = vmatprep.subr.mxu0 0.0
    %816 = vmatpush1.msra.mxu0 0.0
    %817 = vmatprep.subr.mxu0 0.0
    %818 = vmatpush1.msra.mxu0 0.0
    %819 = vmatprep.subr.mxu0 0.0
    %820 = vmatpush1.msra.mxu0 0.0
    %821 = vmatprep.subr.mxu0 0.0
    %822 = vmatpush1.msra.mxu0 0.0
    %823 = vmatprep.subr.mxu0 0.0
    %824 = vmatpush1.msra.mxu0 0.0
    %825 = vmatprep.subr.mxu0 0.0
    %826 = vmatpush1.msra.mxu0 0.0
    %827 = vmatprep.subr.mxu0 0.0
    %828 = vmatpush1.msra.mxu0 0.0
    %829 = vmatprep.subr.mxu0 0.0
    %830 = vmatpush1.msra.mxu0 0.0
    %831 = vmatprep.subr.mxu0 0.0
    %832 = vmatpush1.msra.mxu0 0.0
    %833 = vmatprep.subr.mxu0 0.0
    %834 = vmatpush1.msra.mxu0 0.0
    %835 = vmatprep.subr.mxu0 0.0
    %836 = vmatpush1.msra.mxu0 0.0
    %837 = vmatprep.subr.mxu0 0.0
    %838 = vmatpush1.msra.mxu0 0.0
    %839 = vmatprep.mubr.f32.mxu0 0.0
    %840 = vmatmul.mubr.f32.gmra.mrb[0].mxu0 %v110
    %v841 = vpop.f32.mrb[0].mxu0
    %v842 = vadd.f32 0.0, %v841
    %v843 = vpop.f32.mrb[0].mxu0
    %844 = vmatprep.mubr.f32.mxu0 0.0
    %845 = vmatmul.mubr.f32.gmra.mrb[0].mxu0 %v113
    %v846 = vpop.f32.mrb[0].mxu0
    %v847 = vadd.f32 0.0, %v846
    %v848 = vpop.f32.mrb[0].mxu0
    %849 = vdwg.mxu0
    %s850 = scalar_lea.vmem %s3, 288
    %v851 = vld [vmem:[%s850] sm:$0xff]
    %v852 = vld [vmem:[%s850 + $0x8] sm:$0xff]
    %v853 = vld [vmem:[%s850 + $0x10] sm:$0xff]
    %v854 = vld [vmem:[%s850 + $0x18] sm:$0xff]
    %855 = vmatprep.subr.mxu0 0.0
    %856 = vmatpush1.msra.mxu0 %v851
    %857 = vmatprep.subr.mxu0 0.0
    %858 = vmatpush1.msra.mxu0 %v852
    %859 = vmatprep.subr.mxu0 0.0
    %860 = vmatpush1.msra.mxu0 %v853
    %861 = vmatprep.subr.mxu0 0.0
    %862 = vmatpush1.msra.mxu0 %v854
    %863 = vmatprep.subr.mxu0 0.0
    %864 = vmatpush1.msra.mxu0 0.0
    %865 = vmatprep.subr.mxu0 0.0
    %866 = vmatpush1.msra.mxu0 0.0
    %867 = vmatprep.subr.mxu0 0.0
    %868 = vmatpush1.msra.mxu0 0.0
    %869 = vmatprep.subr.mxu0 0.0
    %870 = vmatpush1.msra.mxu0 0.0
    %871 = vmatprep.subr.mxu0 0.0
    %872 = vmatpush1.msra.mxu0 0.0
    %873 = vmatprep.subr.mxu0 0.0
    %874 = vmatpush1.msra.mxu0 0.0
    %875 = vmatprep.subr.mxu0 0.0
    %876 = vmatpush1.msra.mxu0 0.0
    %877 = vmatprep.subr.mxu0 0.0
    %878 = vmatpush1.msra.mxu0 0.0
    %879 = vmatprep.subr.mxu0 0.0
    %880 = vmatpush1.msra.mxu0 0.0
    %881 = vmatprep.subr.mxu0 0.0
    %882 = vmatpush1.msra.mxu0 0.0
    %883 = vmatprep.subr.mxu0 0.0
    %884 = vmatpush1.msra.mxu0 0.0
    %885 = vmatprep.subr.mxu0 0.0
    %886 = vmatpush1.msra.mxu0 0.0
    %887 = vmatprep.subr.mxu0 0.0
    %888 = vmatpush1.msra.mxu0 0.0
    %889 = vmatprep.subr.mxu0 0.0
    %890 = vmatpush1.msra.mxu0 0.0
    %891 = vmatprep.subr.mxu0 0.0
    %892 = vmatpush1.msra.mxu0 0.0
    %893 = vmatprep.subr.mxu0 0.0
    %894 = vmatpush1.msra.mxu0 0.0
    %895 = vmatprep.subr.mxu0 0.0
    %896 = vmatpush1.msra.mxu0 0.0
    %897 = vmatprep.subr.mxu0 0.0
    %898 = vmatpush1.msra.mxu0 0.0
    %899 = vmatprep.subr.mxu0 0.0
    %900 = vmatpush1.msra.mxu0 0.0
    %901 = vmatprep.subr.mxu0 0.0
    %902 = vmatpush1.msra.mxu0 0.0
    %903 = vmatprep.subr.mxu0 0.0
    %904 = vmatpush1.msra.mxu0 0.0
    %905 = vmatprep.subr.mxu0 0.0
    %906 = vmatpush1.msra.mxu0 0.0
    %907 = vmatprep.subr.mxu0 0.0
    %908 = vmatpush1.msra.mxu0 0.0
    %909 = vmatprep.subr.mxu0 0.0
    %910 = vmatpush1.msra.mxu0 0.0
    %911 = vmatprep.subr.mxu0 0.0
    %912 = vmatpush1.msra.mxu0 0.0
    %913 = vmatprep.subr.mxu0 0.0
    %914 = vmatpush1.msra.mxu0 0.0
    %915 = vmatprep.subr.mxu0 0.0
    %916 = vmatpush1.msra.mxu0 0.0
    %917 = vmatprep.subr.mxu0 0.0
    %918 = vmatpush1.msra.mxu0 0.0
    %919 = vmatprep.mubr.f32.mxu0 0.0
    %920 = vmatmul.mubr.f32.gmra.mrb[0].mxu0 %v110
    %v921 = vpop.f32.mrb[0].mxu0
    %v922 = vadd.f32 0.0, %v921
    %v923 = vpop.f32.mrb[0].mxu0
    %924 = vmatprep.mubr.f32.mxu0 0.0
    %925 = vmatmul.mubr.f32.gmra.mrb[0].mxu0 %v113
    %v926 = vpop.f32.mrb[0].mxu0
    %v927 = vadd.f32 0.0, %v926
    %v928 = vpop.f32.mrb[0].mxu0
    %929 = vdwg.mxu0
    %v931 = vsel %vm350, %v762, 0
    %v934 = vsel %vm350, %v842, 0
    %936 = vmatprep.subr.mxu0 0.0
    %937 = vmatpush1.xpose.msra.mxu0 %v934
    %938 = vmatprep.subr.mxu0 0.0
    %939 = vmatpush1.xpose.msra.mxu0 0.0
    %940 = vmatprep.subr.mxu0 0.0
    %941 = vmatpush1.xpose.msra.mxu0 0.0
    %942 = vmatprep.subr.mxu0 0.0
    %943 = vmatpush1.xpose.msra.mxu0 0.0
    %944 = vmatprep.subr.mxu0 0.0
    %945 = vmatpush1.xpose.msra.mxu0 0.0
    %946 = vmatprep.subr.mxu0 0.0
    %947 = vmatpush1.xpose.msra.mxu0 0.0
    %948 = vmatprep.subr.mxu0 0.0
    %949 = vmatpush1.xpose.msra.mxu0 0.0
    %950 = vmatprep.subr.mxu0 0.0
    %951 = vmatpush1.xpose.msra.mxu0 0.0
    %952 = vmatprep.subr.mxu0 0.0
    %953 = vmatpush1.xpose.msra.mxu0 0.0
    %954 = vmatprep.subr.mxu0 0.0
    %955 = vmatpush1.xpose.msra.mxu0 0.0
    %956 = vmatprep.subr.mxu0 0.0
    %957 = vmatpush1.xpose.msra.mxu0 0.0
    %958 = vmatprep.subr.mxu0 0.0
    %959 = vmatpush1.xpose.msra.mxu0 0.0
    %960 = vmatprep.subr.mxu0 0.0
    %961 = vmatpush1.xpose.msra.mxu0 0.0
    %962 = vmatprep.subr.mxu0 0.0
    %963 = vmatpush1.xpose.msra.mxu0 0.0
    %964 = vmatprep.subr.mxu0 0.0
    %965 = vmatpush1.xpose.msra.mxu0 0.0
    %966 = vmatprep.subr.mxu0 0.0
    %967 = vmatpush1.xpose.msra.mxu0 0.0
    %968 = vmatprep.subr.mxu0 0.0
    %969 = vmatpush1.xpose.msra.mxu0 0.0
    %970 = vmatprep.subr.mxu0 0.0
    %971 = vmatpush1.xpose.msra.mxu0 0.0
    %972 = vmatprep.subr.mxu0 0.0
    %973 = vmatpush1.xpose.msra.mxu0 0.0
    %974 = vmatprep.subr.mxu0 0.0
    %975 = vmatpush1.xpose.msra.mxu0 0.0
    %976 = vmatprep.subr.mxu0 0.0
    %977 = vmatpush1.xpose.msra.mxu0 0.0
    %978 = vmatprep.subr.mxu0 0.0
    %979 = vmatpush1.xpose.msra.mxu0 0.0
    %980 = vmatprep.subr.mxu0 0.0
    %981 = vmatpush1.xpose.msra.mxu0 0.0
    %982 = vmatprep.subr.mxu0 0.0
    %983 = vmatpush1.xpose.msra.mxu0 0.0
    %984 = vmatprep.subr.mxu0 0.0
    %985 = vmatpush1.xpose.msra.mxu0 0.0
    %986 = vmatprep.subr.mxu0 0.0
    %987 = vmatpush1.xpose.msra.mxu0 0.0
    %988 = vmatprep.subr.mxu0 0.0
    %989 = vmatpush1.xpose.msra.mxu0 0.0
    %990 = vmatprep.subr.mxu0 0.0
    %991 = vmatpush1.xpose.msra.mxu0 0.0
    %992 = vmatprep.subr.mxu0 0.0
    %993 = vmatpush1.xpose.msra.mxu0 0.0
    %994 = vmatprep.subr.mxu0 0.0
    %995 = vmatpush1.xpose.msra.mxu0 0.0
    %996 = vmatprep.subr.mxu0 0.0
    %997 = vmatpush1.xpose.msra.mxu0 0.0
    %998 = vmatprep.subr.mxu0 0.0
    %999 = vmatpush1.xpose.msra.mxu0 0.0
    %1000 = vmatprep.mubr.f32.mxu0 0.0
    %1001 = vmatmul.mubr.f32.gmra.mrb[0].mxu0 %v931
    %v1002 = vpop.f32.mrb[0].mxu0
    %v1003 = vadd.f32 0.0, %v1002
    %v1004 = vpop.f32.mrb[0].mxu0
    %1005 = vdwg.mxu0
    %v1007 = vsel %vm350, %v767, 0
    %v1010 = vsel %vm350, %v847, 0
    %1012 = vmatprep.subr.mxu0 0.0
    %1013 = vmatpush1.xpose.msra.mxu0 %v1010
    %1014 = vmatprep.subr.mxu0 0.0
    %1015 = vmatpush1.xpose.msra.mxu0 0.0
    %1016 = vmatprep.subr.mxu0 0.0
    %1017 = vmatpush1.xpose.msra.mxu0 0.0
    %1018 = vmatprep.subr.mxu0 0.0
    %1019 = vmatpush1.xpose.msra.mxu0 0.0
    %1020 = vmatprep.subr.mxu0 0.0
    %1021 = vmatpush1.xpose.msra.mxu0 0.0
    %1022 = vmatprep.subr.mxu0 0.0
    %1023 = vmatpush1.xpose.msra.mxu0 0.0
    %1024 = vmatprep.subr.mxu0 0.0
    %1025 = vmatpush1.xpose.msra.mxu0 0.0
    %1026 = vmatprep.subr.mxu0 0.0
    %1027 = vmatpush1.xpose.msra.mxu0 0.0
    %1028 = vmatprep.subr.mxu0 0.0
    %1029 = vmatpush1.xpose.msra.mxu0 0.0
    %1030 = vmatprep.subr.mxu0 0.0
    %1031 = vmatpush1.xpose.msra.mxu0 0.0
    %1032 = vmatprep.subr.mxu0 0.0
    %1033 = vmatpush1.xpose.msra.mxu0 0.0
    %1034 = vmatprep.subr.mxu0 0.0
    %1035 = vmatpush1.xpose.msra.mxu0 0.0
    %1036 = vmatprep.subr.mxu0 0.0
    %1037 = vmatpush1.xpose.msra.mxu0 0.0
    %1038 = vmatprep.subr.mxu0 0.0
    %1039 = vmatpush1.xpose.msra.mxu0 0.0
    %1040 = vmatprep.subr.mxu0 0.0
    %1041 = vmatpush1.xpose.msra.mxu0 0.0
    %1042 = vmatprep.subr.mxu0 0.0
    %1043 = vmatpush1.xpose.msra.mxu0 0.0
    %1044 = vmatprep.subr.mxu0 0.0
    %1045 = vmatpush1.xpose.msra.mxu0 0.0
    %1046 = vmatprep.subr.mxu0 0.0
    %1047 = vmatpush1.xpose.msra.mxu0 0.0
    %1048 = vmatprep.subr.mxu0 0.0
    %1049 = vmatpush1.xpose.msra.mxu0 0.0
    %1050 = vmatprep.subr.mxu0 0.0
    %1051 = vmatpush1.xpose.msra.mxu0 0.0
    %1052 = vmatprep.subr.mxu0 0.0
    %1053 = vmatpush1.xpose.msra.mxu0 0.0
    %1054 = vmatprep.subr.mxu0 0.0
    %1055 = vmatpush1.xpose.msra.mxu0 0.0
    %1056 = vmatprep.subr.mxu0 0.0
    %1057 = vmatpush1.xpose.msra.mxu0 0.0
    %1058 = vmatprep.subr.mxu0 0.0
    %1059 = vmatpush1.xpose.msra.mxu0 0.0
    %1060 = vmatprep.subr.mxu0 0.0
    %1061 = vmatpush1.xpose.msra.mxu0 0.0
    %1062 = vmatprep.subr.mxu0 0.0
    %1063 = vmatpush1.xpose.msra.mxu0 0.0
    %1064 = vmatprep.subr.mxu0 0.0
    %1065 = vmatpush1.xpose.msra.mxu0 0.0
    %1066 = vmatprep.subr.mxu0 0.0
    %1067 = vmatpush1.xpose.msra.mxu0 0.0
    %1068 = vmatprep.subr.mxu0 0.0
    %1069 = vmatpush1.xpose.msra.mxu0 0.0
    %1070 = vmatprep.subr.mxu0 0.0
    %1071 = vmatpush1.xpose.msra.mxu0 0.0
    %1072 = vmatprep.subr.mxu0 0.0
    %1073 = vmatpush1.xpose.msra.mxu0 0.0
    %1074 = vmatprep.subr.mxu0 0.0
    %1075 = vmatpush1.xpose.msra.mxu0 0.0
    %1076 = vmatprep.mubr.f32.mxu0 0.0
    %1077 = vmatmul.mubr.f32.gmra.mrb[0].mxu0 %v1007
    %v1078 = vpop.f32.mrb[0].mxu0
    %v1079 = vadd.f32 0.0, %v1078
    %v1080 = vpop.f32.mrb[0].mxu0
    %1081 = vdwg.mxu0
    %v1082 = vmul.f32 %v1003, 0.35355338
    %v1083 = vmul.f32 %v1079, 0.35355338
    %v1084 = vadd.f32 %v1082, %v510
    %v1085 = vadd.f32 %v1083, %v514
    %v1086 = vsel %vm350, %v1084, -inf
    %1087 = vmax.xlane.f32.xlu0 %v1086
    %v1088 = vpop.xlane.xlu0 %1087
    %v1089 = vsel %vm350, %v1085, -inf
    %1090 = vmax.xlane.f32.xlu0 %v1089
    %v1091 = vpop.xlane.xlu0 %1090
    %v1092 = vsub.f32 %v1084, %v1088
    %v1093 = vsub.f32 %v1085, %v1091
    %v1094 = vmul.f32 %v1092, 1.442695
    %v1095 = vpow.pop %v1094
    %v1096 = vmul.f32 %v1093, 1.442695
    %v1097 = vpow.pop %v1096
    %v1098 = vsel %vm350, %v1095, 0.0
    %1099 = vadd.xlane.f32.xlu0 %v1098
    %v1100 = vpop.xlane.xlu0 %1099
    %v1101 = vsel %vm350, %v1097, 0.0
    %1102 = vadd.xlane.f32.xlu0 %v1101
    %v1103 = vpop.xlane.xlu0 %1102
    %v1104 = vrcp.pop %v1100
    %v1105 = vmul.f32 1.0, %v1104
    %v1106 = vrcp.pop %v1103
    %v1107 = vmul.f32 1.0, %v1106
    %v1108 = vmul.f32 %v1095, %v1105
    %v1109 = vmul.f32 %v1097, %v1107
    %v1111 = vsel %vm350, %v1108, 0
    %1113 = vmatprep.subr.mxu0 0.0
    %1114 = vmatpush1.msra.mxu0 %v922
    %1115 = vmatprep.subr.mxu0 0.0
    %1116 = vmatpush1.msra.mxu0 0.0
    %1117 = vmatprep.subr.mxu0 0.0
    %1118 = vmatpush1.msra.mxu0 0.0
    %1119 = vmatprep.subr.mxu0 0.0
    %1120 = vmatpush1.msra.mxu0 0.0
    %1121 = vmatprep.subr.mxu0 0.0
    %1122 = vmatpush1.msra.mxu0 0.0
    %1123 = vmatprep.subr.mxu0 0.0
    %1124 = vmatpush1.msra.mxu0 0.0
    %1125 = vmatprep.subr.mxu0 0.0
    %1126 = vmatpush1.msra.mxu0 0.0
    %1127 = vmatprep.subr.mxu0 0.0
    %1128 = vmatpush1.msra.mxu0 0.0
    %1129 = vmatprep.subr.mxu0 0.0
    %1130 = vmatpush1.msra.mxu0 0.0
    %1131 = vmatprep.subr.mxu0 0.0
    %1132 = vmatpush1.msra.mxu0 0.0
    %1133 = vmatprep.subr.mxu0 0.0
    %1134 = vmatpush1.msra.mxu0 0.0
    %1135 = vmatprep.subr.mxu0 0.0
    %1136 = vmatpush1.msra.mxu0 0.0
    %1137 = vmatprep.subr.mxu0 0.0
    %1138 = vmatpush1.msra.mxu0 0.0
    %1139 = vmatprep.subr.mxu0 0.0
    %1140 = vmatpush1.msra.mxu0 0.0
    %1141 = vmatprep.subr.mxu0 0.0
    %1142 = vmatpush1.msra.mxu0 0.0
    %1143 = vmatprep.subr.mxu0 0.0
    %1144 = vmatpush1.msra.mxu0 0.0
    %1145 = vmatprep.subr.mxu0 0.0
    %1146 = vmatpush1.msra.mxu0 0.0
    %1147 = vmatprep.subr.mxu0 0.0
    %1148 = vmatpush1.msra.mxu0 0.0
    %1149 = vmatprep.subr.mxu0 0.0
    %1150 = vmatpush1.msra.mxu0 0.0
    %1151 = vmatprep.subr.mxu0 0.0
    %1152 = vmatpush1.msra.mxu0 0.0
    %1153 = vmatprep.subr.mxu0 0.0
    %1154 = vmatpush1.msra.mxu0 0.0
    %1155 = vmatprep.subr.mxu0 0.0
    %1156 = vmatpush1.msra.mxu0 0.0
    %1157 = vmatprep.subr.mxu0 0.0
    %1158 = vmatpush1.msra.mxu0 0.0
    %1159 = vmatprep.subr.mxu0 0.0
    %1160 = vmatpush1.msra.mxu0 0.0
    %1161 = vmatprep.subr.mxu0 0.0
    %1162 = vmatpush1.msra.mxu0 0.0
    %1163 = vmatprep.subr.mxu0 0.0
    %1164 = vmatpush1.msra.mxu0 0.0
    %1165 = vmatprep.subr.mxu0 0.0
    %1166 = vmatpush1.msra.mxu0 0.0
    %1167 = vmatprep.subr.mxu0 0.0
    %1168 = vmatpush1.msra.mxu0 0.0
    %1169 = vmatprep.subr.mxu0 0.0
    %1170 = vmatpush1.msra.mxu0 0.0
    %1171 = vmatprep.subr.mxu0 0.0
    %1172 = vmatpush1.msra.mxu0 0.0
    %1173 = vmatprep.subr.mxu0 0.0
    %1174 = vmatpush1.msra.mxu0 0.0
    %1175 = vmatprep.subr.mxu0 0.0
    %1176 = vmatpush1.msra.mxu0 0.0
    %1177 = vmatprep.mubr.f32.mxu0 0.0
    %1178 = vmatmul.mubr.f32.gmra.mrb[0].mxu0 %v1111
    %v1179 = vpop.f32.mrb[0].mxu0
    %v1180 = vadd.f32 0.0, %v1179
    %v1181 = vpop.f32.mrb[0].mxu0
    %1182 = vdwg.mxu0
    %v1184 = vsel %vm350, %v1109, 0
    %1186 = vmatprep.subr.mxu0 0.0
    %1187 = vmatpush1.msra.mxu0 %v927
    %1188 = vmatprep.subr.mxu0 0.0
    %1189 = vmatpush1.msra.mxu0 0.0
    %1190 = vmatprep.subr.mxu0 0.0
    %1191 = vmatpush1.msra.mxu0 0.0
    %1192 = vmatprep.subr.mxu0 0.0
    %1193 = vmatpush1.msra.mxu0 0.0
    %1194 = vmatprep.subr.mxu0 0.0
    %1195 = vmatpush1.msra.mxu0 0.0
    %1196 = vmatprep.subr.mxu0 0.0
    %1197 = vmatpush1.msra.mxu0 0.0
    %1198 = vmatprep.subr.mxu0 0.0
    %1199 = vmatpush1.msra.mxu0 0.0
    %1200 = vmatprep.subr.mxu0 0.0
    %1201 = vmatpush1.msra.mxu0 0.0
    %1202 = vmatprep.subr.mxu0 0.0
    %1203 = vmatpush1.msra.mxu0 0.0
    %1204 = vmatprep.subr.mxu0 0.0
    %1205 = vmatpush1.msra.mxu0 0.0
    %1206 = vmatprep.subr.mxu0 0.0
    %1207 = vmatpush1.msra.mxu0 0.0
    %1208 = vmatprep.subr.mxu0 0.0
    %1209 = vmatpush1.msra.mxu0 0.0
    %1210 = vmatprep.subr.mxu0 0.0
    %1211 = vmatpush1.msra.mxu0 0.0
    %1212 = vmatprep.subr.mxu0 0.0
    %1213 = vmatpush1.msra.mxu0 0.0
    %1214 = vmatprep.subr.mxu0 0.0
    %1215 = vmatpush1.msra.mxu0 0.0
    %1216 = vmatprep.subr.mxu0 0.0
    %1217 = vmatpush1.msra.mxu0 0.0
    %1218 = vmatprep.subr.mxu0 0.0
    %1219 = vmatpush1.msra.mxu0 0.0
    %1220 = vmatprep.subr.mxu0 0.0
    %1221 = vmatpush1.msra.mxu0 0.0
    %1222 = vmatprep.subr.mxu0 0.0
    %1223 = vmatpush1.msra.mxu0 0.0
    %1224 = vmatprep.subr.mxu0 0.0
    %1225 = vmatpush1.msra.mxu0 0.0
    %1226 = vmatprep.subr.mxu0 0.0
    %1227 = vmatpush1.msra.mxu0 0.0
    %1228 = vmatprep.subr.mxu0 0.0
    %1229 = vmatpush1.msra.mxu0 0.0
    %1230 = vmatprep.subr.mxu0 0.0
    %1231 = vmatpush1.msra.mxu0 0.0
    %1232 = vmatprep.subr.mxu0 0.0
    %1233 = vmatpush1.msra.mxu0 0.0
    %1234 = vmatprep.subr.mxu0 0.0
    %1235 = vmatpush1.msra.mxu0 0.0
    %1236 = vmatprep.subr.mxu0 0.0
    %1237 = vmatpush1.msra.mxu0 0.0
    %1238 = vmatprep.subr.mxu0 0.0
    %1239 = vmatpush1.msra.mxu0 0.0
    %1240 = vmatprep.subr.mxu0 0.0
    %1241 = vmatpush1.msra.mxu0 0.0
    %1242 = vmatprep.subr.mxu0 0.0
    %1243 = vmatpush1.msra.mxu0 0.0
    %1244 = vmatprep.subr.mxu0 0.0
    %1245 = vmatpush1.msra.mxu0 0.0
    %1246 = vmatprep.subr.mxu0 0.0
    %1247 = vmatpush1.msra.mxu0 0.0
    %1248 = vmatprep.subr.mxu0 0.0
    %1249 = vmatpush1.msra.mxu0 0.0
    %1250 = vmatprep.mubr.f32.mxu0 0.0
    %1251 = vmatmul.mubr.f32.gmra.mrb[0].mxu0 %v1184
    %v1252 = vpop.f32.mrb[0].mxu0
    %v1253 = vadd.f32 0.0, %v1252
    %v1254 = vpop.f32.mrb[0].mxu0
    %1255 = vdwg.mxu0
    %s1256 = scalar_lea.vmem %s4, 8
    %v1257 = vld [vmem:[%s1256] sm:$0xff]
    %v1259 = vsel %vm350, %v1180, 0
    %v1262 = vsel %vm350, %v1253, 0
    %1264 = vmatprep.subr.mxu0 0.0
    %1265 = vmatpush1.msra.mxu0 %v1257
    %1266 = vmatprep.subr.mxu0 0.0
    %1267 = vmatpush1.msra.mxu0 0.0
    %1268 = vmatprep.subr.mxu0 0.0
    %1269 = vmatpush1.msra.mxu0 0.0
    %1270 = vmatprep.subr.mxu0 0.0
    %1271 = vmatpush1.msra.mxu0 0.0
    %1272 = vmatprep.subr.mxu0 0.0
    %1273 = vmatpush1.msra.mxu0 0.0
    %1274 = vmatprep.subr.mxu0 0.0
    %1275 = vmatpush1.msra.mxu0 0.0
    %1276 = vmatprep.subr.mxu0 0.0
    %1277 = vmatpush1.msra.mxu0 0.0
    %1278 = vmatprep.subr.mxu0 0.0
    %1279 = vmatpush1.msra.mxu0 0.0
    %1280 = vmatprep.subr.mxu0 0.0
    %1281 = vmatpush1.msra.mxu0 0.0
    %1282 = vmatprep.subr.mxu0 0.0
    %1283 = vmatpush1.msra.mxu0 0.0
    %1284 = vmatprep.subr.mxu0 0.0
    %1285 = vmatpush1.msra.mxu0 0.0
    %1286 = vmatprep.subr.mxu0 0.0
    %1287 = vmatpush1.msra.mxu0 0.0
    %1288 = vmatprep.subr.mxu0 0.0
    %1289 = vmatpush1.msra.mxu0 0.0
    %1290 = vmatprep.subr.mxu0 0.0
    %1291 = vmatpush1.msra.mxu0 0.0
    %1292 = vmatprep.subr.mxu0 0.0
    %1293 = vmatpush1.msra.mxu0 0.0
    %1294 = vmatprep.subr.mxu0 0.0
    %1295 = vmatpush1.msra.mxu0 0.0
    %1296 = vmatprep.subr.mxu0 0.0
    %1297 = vmatpush1.msra.mxu0 0.0
    %1298 = vmatprep.subr.mxu0 0.0
    %1299 = vmatpush1.msra.mxu0 0.0
    %1300 = vmatprep.subr.mxu0 0.0
    %1301 = vmatpush1.msra.mxu0 0.0
    %1302 = vmatprep.subr.mxu0 0.0
    %1303 = vmatpush1.msra.mxu0 0.0
    %1304 = vmatprep.subr.mxu0 0.0
    %1305 = vmatpush1.msra.mxu0 0.0
    %1306 = vmatprep.subr.mxu0 0.0
    %1307 = vmatpush1.msra.mxu0 0.0
    %1308 = vmatprep.subr.mxu0 0.0
    %1309 = vmatpush1.msra.mxu0 0.0
    %1310 = vmatprep.subr.mxu0 0.0
    %1311 = vmatpush1.msra.mxu0 0.0
    %1312 = vmatprep.subr.mxu0 0.0
    %1313 = vmatpush1.msra.mxu0 0.0
    %1314 = vmatprep.subr.mxu0 0.0
    %1315 = vmatpush1.msra.mxu0 0.0
    %1316 = vmatprep.subr.mxu0 0.0
    %1317 = vmatpush1.msra.mxu0 0.0
    %1318 = vmatprep.subr.mxu0 0.0
    %1319 = vmatpush1.msra.mxu0 0.0
    %1320 = vmatprep.subr.mxu0 0.0
    %1321 = vmatpush1.msra.mxu0 0.0
    %1322 = vmatprep.subr.mxu0 0.0
    %1323 = vmatpush1.msra.mxu0 0.0
    %1324 = vmatprep.subr.mxu0 0.0
    %1325 = vmatpush1.msra.mxu0 0.0
    %1326 = vmatprep.subr.mxu0 0.0
    %1327 = vmatpush1.msra.mxu0 0.0
    %1328 = vmatprep.mubr.f32.mxu0 0.0
    %1329 = vmatmul.mubr.f32.gmra.mrb[0].mxu0 %v1259
    %v1330 = vpop.f32.mrb[0].mxu0
    %v1331 = vadd.f32 0.0, %v1330
    %v1332 = vpop.f32.mrb[0].mxu0
    %1333 = vmatprep.mubr.f32.mxu0 0.0
    %1334 = vmatmul.mubr.f32.gmra.mrb[0].mxu0 %v1262
    %v1335 = vpop.f32.mrb[0].mxu0
    %v1336 = vadd.f32 0.0, %v1335
    %v1337 = vpop.f32.mrb[0].mxu0
    %1338 = vdwg.mxu0
    %v1340 = vsel %vm350, %v613, 0
    %v1343 = vsel %vm350, %v686, 0
    %1345 = vmatprep.subr.mxu0 0.0
    %1346 = vmatpush1.msra.mxu0 %v689
    %1347 = vmatprep.subr.mxu0 0.0
    %1348 = vmatpush1.msra.mxu0 0.0
    %1349 = vmatprep.subr.mxu0 0.0
    %1350 = vmatpush1.msra.mxu0 0.0
    %1351 = vmatprep.subr.mxu0 0.0
    %1352 = vmatpush1.msra.mxu0 0.0
    %1353 = vmatprep.subr.mxu0 0.0
    %1354 = vmatpush1.msra.mxu0 0.0
    %1355 = vmatprep.subr.mxu0 0.0
    %1356 = vmatpush1.msra.mxu0 0.0
    %1357 = vmatprep.subr.mxu0 0.0
    %1358 = vmatpush1.msra.mxu0 0.0
    %1359 = vmatprep.subr.mxu0 0.0
    %1360 = vmatpush1.msra.mxu0 0.0
    %1361 = vmatprep.subr.mxu0 0.0
    %1362 = vmatpush1.msra.mxu0 0.0
    %1363 = vmatprep.subr.mxu0 0.0
    %1364 = vmatpush1.msra.mxu0 0.0
    %1365 = vmatprep.subr.mxu0 0.0
    %1366 = vmatpush1.msra.mxu0 0.0
    %1367 = vmatprep.subr.mxu0 0.0
    %1368 = vmatpush1.msra.mxu0 0.0
    %1369 = vmatprep.subr.mxu0 0.0
    %1370 = vmatpush1.msra.mxu0 0.0
    %1371 = vmatprep.subr.mxu0 0.0
    %1372 = vmatpush1.msra.mxu0 0.0
    %1373 = vmatprep.subr.mxu0 0.0
    %1374 = vmatpush1.msra.mxu0 0.0
    %1375 = vmatprep.subr.mxu0 0.0
    %1376 = vmatpush1.msra.mxu0 0.0
    %1377 = vmatprep.subr.mxu0 0.0
    %1378 = vmatpush1.msra.mxu0 0.0
    %1379 = vmatprep.subr.mxu0 0.0
    %1380 = vmatpush1.msra.mxu0 0.0
    %1381 = vmatprep.subr.mxu0 0.0
    %1382 = vmatpush1.msra.mxu0 0.0
    %1383 = vmatprep.subr.mxu0 0.0
    %1384 = vmatpush1.msra.mxu0 0.0
    %1385 = vmatprep.subr.mxu0 0.0
    %1386 = vmatpush1.msra.mxu0 0.0
    %1387 = vmatprep.subr.mxu0 0.0
    %1388 = vmatpush1.msra.mxu0 0.0
    %1389 = vmatprep.subr.mxu0 0.0
    %1390 = vmatpush1.msra.mxu0 0.0
    %1391 = vmatprep.subr.mxu0 0.0
    %1392 = vmatpush1.msra.mxu0 0.0
    %1393 = vmatprep.subr.mxu0 0.0
    %1394 = vmatpush1.msra.mxu0 0.0
    %1395 = vmatprep.subr.mxu0 0.0
    %1396 = vmatpush1.msra.mxu0 0.0
    %1397 = vmatprep.subr.mxu0 0.0
    %1398 = vmatpush1.msra.mxu0 0.0
    %1399 = vmatprep.subr.mxu0 0.0
    %1400 = vmatpush1.msra.mxu0 0.0
    %1401 = vmatprep.subr.mxu0 0.0
    %1402 = vmatpush1.msra.mxu0 0.0
    %1403 = vmatprep.subr.mxu0 0.0
    %1404 = vmatpush1.msra.mxu0 0.0
    %1405 = vmatprep.subr.mxu0 0.0
    %1406 = vmatpush1.msra.mxu0 0.0
    %1407 = vmatprep.subr.mxu0 0.0
    %1408 = vmatpush1.msra.mxu0 0.0
    %1409 = vmatprep.mubr.f32.mxu0 0.0
    %1410 = vmatmul.mubr.f32.gmra.mrb[0].mxu0 %v1340
    %v1411 = vpop.f32.mrb[0].mxu0
    %v1412 = vadd.f32 %v1331, %v1411
    %v1413 = vpop.f32.mrb[0].mxu0
    %1414 = vmatprep.mubr.f32.mxu0 0.0
    %1415 = vmatmul.mubr.f32.gmra.mrb[0].mxu0 %v1343
    %v1416 = vpop.f32.mrb[0].mxu0
    %v1417 = vadd.f32 %v1336, %v1416
    %v1418 = vpop.f32.mrb[0].mxu0
    %1419 = vdwg.mxu0
    %s1420 = scalar_lea.vmem %s3, 64
    %v1421 = vld [vmem:[%s1420] sm:$0xff]
    %v1422 = vld [vmem:[%s1420 + $0x8] sm:$0xff]
    %v1423 = vld [vmem:[%s1420 + $0x10] sm:$0xff]
    %v1424 = vld [vmem:[%s1420 + $0x18] sm:$0xff]
    %1425 = vmatprep.subr.mxu0 0.0
    %1426 = vmatpush1.msra.mxu0 %v1421
    %1427 = vmatprep.subr.mxu0 0.0
    %1428 = vmatpush1.msra.mxu0 %v1422
    %1429 = vmatprep.subr.mxu0 0.0
    %1430 = vmatpush1.msra.mxu0 %v1423
    %1431 = vmatprep.subr.mxu0 0.0
    %1432 = vmatpush1.msra.mxu0 %v1424
    %1433 = vmatprep.subr.mxu0 0.0
    %1434 = vmatpush1.msra.mxu0 0.0
    %1435 = vmatprep.subr.mxu0 0.0
    %1436 = vmatpush1.msra.mxu0 0.0
    %1437 = vmatprep.subr.mxu0 0.0
    %1438 = vmatpush1.msra.mxu0 0.0
    %1439 = vmatprep.subr.mxu0 0.0
    %1440 = vmatpush1.msra.mxu0 0.0
    %1441 = vmatprep.subr.mxu0 0.0
    %1442 = vmatpush1.msra.mxu0 0.0
    %1443 = vmatprep.subr.mxu0 0.0
    %1444 = vmatpush1.msra.mxu0 0.0
    %1445 = vmatprep.subr.mxu0 0.0
    %1446 = vmatpush1.msra.mxu0 0.0
    %1447 = vmatprep.subr.mxu0 0.0
    %1448 = vmatpush1.msra.mxu0 0.0
    %1449 = vmatprep.subr.mxu0 0.0
    %1450 = vmatpush1.msra.mxu0 0.0
    %1451 = vmatprep.subr.mxu0 0.0
    %1452 = vmatpush1.msra.mxu0 0.0
    %1453 = vmatprep.subr.mxu0 0.0
    %1454 = vmatpush1.msra.mxu0 0.0
    %1455 = vmatprep.subr.mxu0 0.0
    %1456 = vmatpush1.msra.mxu0 0.0
    %1457 = vmatprep.subr.mxu0 0.0
    %1458 = vmatpush1.msra.mxu0 0.0
    %1459 = vmatprep.subr.mxu0 0.0
    %1460 = vmatpush1.msra.mxu0 0.0
    %1461 = vmatprep.subr.mxu0 0.0
    %1462 = vmatpush1.msra.mxu0 0.0
    %1463 = vmatprep.subr.mxu0 0.0
    %1464 = vmatpush1.msra.mxu0 0.0
    %1465 = vmatprep.subr.mxu0 0.0
    %1466 = vmatpush1.msra.mxu0 0.0
    %1467 = vmatprep.subr.mxu0 0.0
    %1468 = vmatpush1.msra.mxu0 0.0
    %1469 = vmatprep.subr.mxu0 0.0
    %1470 = vmatpush1.msra.mxu0 0.0
    %1471 = vmatprep.subr.mxu0 0.0
    %1472 = vmatpush1.msra.mxu0 0.0
    %1473 = vmatprep.subr.mxu0 0.0
    %1474 = vmatpush1.msra.mxu0 0.0
    %1475 = vmatprep.subr.mxu0 0.0
    %1476 = vmatpush1.msra.mxu0 0.0
    %1477 = vmatprep.subr.mxu0 0.0
    %1478 = vmatpush1.msra.mxu0 0.0
    %1479 = vmatprep.subr.mxu0 0.0
    %1480 = vmatpush1.msra.mxu0 0.0
    %1481 = vmatprep.subr.mxu0 0.0
    %1482 = vmatpush1.msra.mxu0 0.0
    %1483 = vmatprep.subr.mxu0 0.0
    %1484 = vmatpush1.msra.mxu0 0.0
    %1485 = vmatprep.subr.mxu0 0.0
    %1486 = vmatpush1.msra.mxu0 0.0
    %1487 = vmatprep.subr.mxu0 0.0
    %1488 = vmatpush1.msra.mxu0 0.0
    %1489 = vmatprep.mubr.f32.mxu0 0.0
    %1490 = vmatmul.mubr.f32.gmra.mrb[0].mxu0 %v110
    %v1491 = vpop.f32.mrb[0].mxu0
    %v1492 = vadd.f32 0.0, %v1491
    %v1493 = vpop.f32.mrb[0].mxu0
    %1494 = vmatprep.mubr.f32.mxu0 0.0
    %1495 = vmatmul.mubr.f32.gmra.mrb[0].mxu0 %v113
    %v1496 = vpop.f32.mrb[0].mxu0
    %v1497 = vadd.f32 0.0, %v1496
    %v1498 = vpop.f32.mrb[0].mxu0
    %1499 = vdwg.mxu0
    %s1500 = scalar_lea.vmem %s3, 192
    %v1501 = vld [vmem:[%s1500] sm:$0xff]
    %v1502 = vld [vmem:[%s1500 + $0x8] sm:$0xff]
    %v1503 = vld [vmem:[%s1500 + $0x10] sm:$0xff]
    %v1504 = vld [vmem:[%s1500 + $0x18] sm:$0xff]
    %1505 = vmatprep.subr.mxu0 0.0
    %1506 = vmatpush1.msra.mxu0 %v1501
    %1507 = vmatprep.subr.mxu0 0.0
    %1508 = vmatpush1.msra.mxu0 %v1502
    %1509 = vmatprep.subr.mxu0 0.0
    %1510 = vmatpush1.msra.mxu0 %v1503
    %1511 = vmatprep.subr.mxu0 0.0
    %1512 = vmatpush1.msra.mxu0 %v1504
    %1513 = vmatprep.subr.mxu0 0.0
    %1514 = vmatpush1.msra.mxu0 0.0
    %1515 = vmatprep.subr.mxu0 0.0
    %1516 = vmatpush1.msra.mxu0 0.0
    %1517 = vmatprep.subr.mxu0 0.0
    %1518 = vmatpush1.msra.mxu0 0.0
    %1519 = vmatprep.subr.mxu0 0.0
    %1520 = vmatpush1.msra.mxu0 0.0
    %1521 = vmatprep.subr.mxu0 0.0
    %1522 = vmatpush1.msra.mxu0 0.0
    %1523 = vmatprep.subr.mxu0 0.0
    %1524 = vmatpush1.msra.mxu0 0.0
    %1525 = vmatprep.subr.mxu0 0.0
    %1526 = vmatpush1.msra.mxu0 0.0
    %1527 = vmatprep.subr.mxu0 0.0
    %1528 = vmatpush1.msra.mxu0 0.0
    %1529 = vmatprep.subr.mxu0 0.0
    %1530 = vmatpush1.msra.mxu0 0.0
    %1531 = vmatprep.subr.mxu0 0.0
    %1532 = vmatpush1.msra.mxu0 0.0
    %1533 = vmatprep.subr.mxu0 0.0
    %1534 = vmatpush1.msra.mxu0 0.0
    %1535 = vmatprep.subr.mxu0 0.0
    %1536 = vmatpush1.msra.mxu0 0.0
    %1537 = vmatprep.subr.mxu0 0.0
    %1538 = vmatpush1.msra.mxu0 0.0
    %1539 = vmatprep.subr.mxu0 0.0
    %1540 = vmatpush1.msra.mxu0 0.0
    %1541 = vmatprep.subr.mxu0 0.0
    %1542 = vmatpush1.msra.mxu0 0.0
    %1543 = vmatprep.subr.mxu0 0.0
    %1544 = vmatpush1.msra.mxu0 0.0
    %1545 = vmatprep.subr.mxu0 0.0
    %1546 = vmatpush1.msra.mxu0 0.0
    %1547 = vmatprep.subr.mxu0 0.0
    %1548 = vmatpush1.msra.mxu0 0.0
    %1549 = vmatprep.subr.mxu0 0.0
    %1550 = vmatpush1.msra.mxu0 0.0
    %1551 = vmatprep.subr.mxu0 0.0
    %1552 = vmatpush1.msra.mxu0 0.0
    %1553 = vmatprep.subr.mxu0 0.0
    %1554 = vmatpush1.msra.mxu0 0.0
    %1555 = vmatprep.subr.mxu0 0.0
    %1556 = vmatpush1.msra.mxu0 0.0
    %1557 = vmatprep.subr.mxu0 0.0
    %1558 = vmatpush1.msra.mxu0 0.0
    %1559 = vmatprep.subr.mxu0 0.0
    %1560 = vmatpush1.msra.mxu0 0.0
    %1561 = vmatprep.subr.mxu0 0.0
    %1562 = vmatpush1.msra.mxu0 0.0
    %1563 = vmatprep.subr.mxu0 0.0
    %1564 = vmatpush1.msra.mxu0 0.0
    %1565 = vmatprep.subr.mxu0 0.0
    %1566 = vmatpush1.msra.mxu0 0.0
    %1567 = vmatprep.subr.mxu0 0.0
    %1568 = vmatpush1.msra.mxu0 0.0
    %1569 = vmatprep.mubr.f32.mxu0 0.0
    %1570 = vmatmul.mubr.f32.gmra.mrb[0].mxu0 %v110
    %v1571 = vpop.f32.mrb[0].mxu0
    %v1572 = vadd.f32 0.0, %v1571
    %v1573 = vpop.f32.mrb[0].mxu0
    %1574 = vmatprep.mubr.f32.mxu0 0.0
    %1575 = vmatmul.mubr.f32.gmra.mrb[0].mxu0 %v113
    %v1576 = vpop.f32.mrb[0].mxu0
    %v1577 = vadd.f32 0.0, %v1576
    %v1578 = vpop.f32.mrb[0].mxu0
    %1579 = vdwg.mxu0
    %s1580 = scalar_lea.vmem %s3, 320
    %v1581 = vld [vmem:[%s1580] sm:$0xff]
    %v1582 = vld [vmem:[%s1580 + $0x8] sm:$0xff]
    %v1583 = vld [vmem:[%s1580 + $0x10] sm:$0xff]
    %v1584 = vld [vmem:[%s1580 + $0x18] sm:$0xff]
    %1585 = vmatprep.subr.mxu0 0.0
    %1586 = vmatpush1.msra.mxu0 %v1581
    %1587 = vmatprep.subr.mxu0 0.0
    %1588 = vmatpush1.msra.mxu0 %v1582
    %1589 = vmatprep.subr.mxu0 0.0
    %1590 = vmatpush1.msra.mxu0 %v1583
    %1591 = vmatprep.subr.mxu0 0.0
    %1592 = vmatpush1.msra.mxu0 %v1584
    %1593 = vmatprep.subr.mxu0 0.0
    %1594 = vmatpush1.msra.mxu0 0.0
    %1595 = vmatprep.subr.mxu0 0.0
    %1596 = vmatpush1.msra.mxu0 0.0
    %1597 = vmatprep.subr.mxu0 0.0
    %1598 = vmatpush1.msra.mxu0 0.0
    %1599 = vmatprep.subr.mxu0 0.0
    %1600 = vmatpush1.msra.mxu0 0.0
    %1601 = vmatprep.subr.mxu0 0.0
    %1602 = vmatpush1.msra.mxu0 0.0
    %1603 = vmatprep.subr.mxu0 0.0
    %1604 = vmatpush1.msra.mxu0 0.0
    %1605 = vmatprep.subr.mxu0 0.0
    %1606 = vmatpush1.msra.mxu0 0.0
    %1607 = vmatprep.subr.mxu0 0.0
    %1608 = vmatpush1.msra.mxu0 0.0
    %1609 = vmatprep.subr.mxu0 0.0
    %1610 = vmatpush1.msra.mxu0 0.0
    %1611 = vmatprep.subr.mxu0 0.0
    %1612 = vmatpush1.msra.mxu0 0.0
    %1613 = vmatprep.subr.mxu0 0.0
    %1614 = vmatpush1.msra.mxu0 0.0
    %1615 = vmatprep.subr.mxu0 0.0
    %1616 = vmatpush1.msra.mxu0 0.0
    %1617 = vmatprep.subr.mxu0 0.0
    %1618 = vmatpush1.msra.mxu0 0.0
    %1619 = vmatprep.subr.mxu0 0.0
    %1620 = vmatpush1.msra.mxu0 0.0
    %1621 = vmatprep.subr.mxu0 0.0
    %1622 = vmatpush1.msra.mxu0 0.0
    %1623 = vmatprep.subr.mxu0 0.0
    %1624 = vmatpush1.msra.mxu0 0.0
    %1625 = vmatprep.subr.mxu0 0.0
    %1626 = vmatpush1.msra.mxu0 0.0
    %1627 = vmatprep.subr.mxu0 0.0
    %1628 = vmatpush1.msra.mxu0 0.0
    %1629 = vmatprep.subr.mxu0 0.0
    %1630 = vmatpush1.msra.mxu0 0.0
    %1631 = vmatprep.subr.mxu0 0.0
    %1632 = vmatpush1.msra.mxu0 0.0
    %1633 = vmatprep.subr.mxu0 0.0
    %1634 = vmatpush1.msra.mxu0 0.0
    %1635 = vmatprep.subr.mxu0 0.0
    %1636 = vmatpush1.msra.mxu0 0.0
    %1637 = vmatprep.subr.mxu0 0.0
    %1638 = vmatpush1.msra.mxu0 0.0
    %1639 = vmatprep.subr.mxu0 0.0
    %1640 = vmatpush1.msra.mxu0 0.0
    %1641 = vmatprep.subr.mxu0 0.0
    %1642 = vmatpush1.msra.mxu0 0.0
    %1643 = vmatprep.subr.mxu0 0.0
    %1644 = vmatpush1.msra.mxu0 0.0
    %1645 = vmatprep.subr.mxu0 0.0
    %1646 = vmatpush1.msra.mxu0 0.0
    %1647 = vmatprep.subr.mxu0 0.0
    %1648 = vmatpush1.msra.mxu0 0.0
    %1649 = vmatprep.mubr.f32.mxu0 0.0
    %1650 = vmatmul.mubr.f32.gmra.mrb[0].mxu0 %v110
    %v1651 = vpop.f32.mrb[0].mxu0
    %v1652 = vadd.f32 0.0, %v1651
    %v1653 = vpop.f32.mrb[0].mxu0
    %1654 = vmatprep.mubr.f32.mxu0 0.0
    %1655 = vmatmul.mubr.f32.gmra.mrb[0].mxu0 %v113
    %v1656 = vpop.f32.mrb[0].mxu0
    %v1657 = vadd.f32 0.0, %v1656
    %v1658 = vpop.f32.mrb[0].mxu0
    %1659 = vdwg.mxu0
    %v1661 = vsel %vm350, %v1492, 0
    %v1664 = vsel %vm350, %v1572, 0
    %1666 = vmatprep.subr.mxu0 0.0
    %1667 = vmatpush1.xpose.msra.mxu0 %v1664
    %1668 = vmatprep.subr.mxu0 0.0
    %1669 = vmatpush1.xpose.msra.mxu0 0.0
    %1670 = vmatprep.subr.mxu0 0.0
    %1671 = vmatpush1.xpose.msra.mxu0 0.0
    %1672 = vmatprep.subr.mxu0 0.0
    %1673 = vmatpush1.xpose.msra.mxu0 0.0
    %1674 = vmatprep.subr.mxu0 0.0
    %1675 = vmatpush1.xpose.msra.mxu0 0.0
    %1676 = vmatprep.subr.mxu0 0.0
    %1677 = vmatpush1.xpose.msra.mxu0 0.0
    %1678 = vmatprep.subr.mxu0 0.0
    %1679 = vmatpush1.xpose.msra.mxu0 0.0
    %1680 = vmatprep.subr.mxu0 0.0
    %1681 = vmatpush1.xpose.msra.mxu0 0.0
    %1682 = vmatprep.subr.mxu0 0.0
    %1683 = vmatpush1.xpose.msra.mxu0 0.0
    %1684 = vmatprep.subr.mxu0 0.0
    %1685 = vmatpush1.xpose.msra.mxu0 0.0
    %1686 = vmatprep.subr.mxu0 0.0
    %1687 = vmatpush1.xpose.msra.mxu0 0.0
    %1688 = vmatprep.subr.mxu0 0.0
    %1689 = vmatpush1.xpose.msra.mxu0 0.0
    %1690 = vmatprep.subr.mxu0 0.0
    %1691 = vmatpush1.xpose.msra.mxu0 0.0
    %1692 = vmatprep.subr.mxu0 0.0
    %1693 = vmatpush1.xpose.msra.mxu0 0.0
    %1694 = vmatprep.subr.mxu0 0.0
    %1695 = vmatpush1.xpose.msra.mxu0 0.0
    %1696 = vmatprep.subr.mxu0 0.0
    %1697 = vmatpush1.xpose.msra.mxu0 0.0
    %1698 = vmatprep.subr.mxu0 0.0
    %1699 = vmatpush1.xpose.msra.mxu0 0.0
    %1700 = vmatprep.subr.mxu0 0.0
    %1701 = vmatpush1.xpose.msra.mxu0 0.0
    %1702 = vmatprep.subr.mxu0 0.0
    %1703 = vmatpush1.xpose.msra.mxu0 0.0
    %1704 = vmatprep.subr.mxu0 0.0
    %1705 = vmatpush1.xpose.msra.mxu0 0.0
    %1706 = vmatprep.subr.mxu0 0.0
    %1707 = vmatpush1.xpose.msra.mxu0 0.0
    %1708 = vmatprep.subr.mxu0 0.0
    %1709 = vmatpush1.xpose.msra.mxu0 0.0
    %1710 = vmatprep.subr.mxu0 0.0
    %1711 = vmatpush1.xpose.msra.mxu0 0.0
    %1712 = vmatprep.subr.mxu0 0.0
    %1713 = vmatpush1.xpose.msra.mxu0 0.0
    %1714 = vmatprep.subr.mxu0 0.0
    %1715 = vmatpush1.xpose.msra.mxu0 0.0
    %1716 = vmatprep.subr.mxu0 0.0
    %1717 = vmatpush1.xpose.msra.mxu0 0.0
    %1718 = vmatprep.subr.mxu0 0.0
    %1719 = vmatpush1.xpose.msra.mxu0 0.0
    %1720 = vmatprep.subr.mxu0 0.0
    %1721 = vmatpush1.xpose.msra.mxu0 0.0
    %1722 = vmatprep.subr.mxu0 0.0
    %1723 = vmatpush1.xpose.msra.mxu0 0.0
    %1724 = vmatprep.subr.mxu0 0.0
    %1725 = vmatpush1.xpose.msra.mxu0 0.0
    %1726 = vmatprep.subr.mxu0 0.0
    %1727 = vmatpush1.xpose.msra.mxu0 0.0
    %1728 = vmatprep.subr.mxu0 0.0
    %1729 = vmatpush1.xpose.msra.mxu0 0.0
    %1730 = vmatprep.mubr.f32.mxu0 0.0
    %1731 = vmatmul.mubr.f32.gmra.mrb[0].mxu0 %v1661
    %v1732 = vpop.f32.mrb[0].mxu0
    %v1733 = vadd.f32 0.0, %v1732
    %v1734 = vpop.f32.mrb[0].mxu0
    %1735 = vdwg.mxu0
    %v1737 = vsel %vm350, %v1497, 0
    %v1740 = vsel %vm350, %v1577, 0
    %1742 = vmatprep.subr.mxu0 0.0
    %1743 = vmatpush1.xpose.msra.mxu0 %v1740
    %1744 = vmatprep.subr.mxu0 0.0
    %1745 = vmatpush1.xpose.msra.mxu0 0.0
    %1746 = vmatprep.subr.mxu0 0.0
    %1747 = vmatpush1.xpose.msra.mxu0 0.0
    %1748 = vmatprep.subr.mxu0 0.0
    %1749 = vmatpush1.xpose.msra.mxu0 0.0
    %1750 = vmatprep.subr.mxu0 0.0
    %1751 = vmatpush1.xpose.msra.mxu0 0.0
    %1752 = vmatprep.subr.mxu0 0.0
    %1753 = vmatpush1.xpose.msra.mxu0 0.0
    %1754 = vmatprep.subr.mxu0 0.0
    %1755 = vmatpush1.xpose.msra.mxu0 0.0
    %1756 = vmatprep.subr.mxu0 0.0
    %1757 = vmatpush1.xpose.msra.mxu0 0.0
    %1758 = vmatprep.subr.mxu0 0.0
    %1759 = vmatpush1.xpose.msra.mxu0 0.0
    %1760 = vmatprep.subr.mxu0 0.0
    %1761 = vmatpush1.xpose.msra.mxu0 0.0
    %1762 = vmatprep.subr.mxu0 0.0
    %1763 = vmatpush1.xpose.msra.mxu0 0.0
    %1764 = vmatprep.subr.mxu0 0.0
    %1765 = vmatpush1.xpose.msra.mxu0 0.0
    %1766 = vmatprep.subr.mxu0 0.0
    %1767 = vmatpush1.xpose.msra.mxu0 0.0
    %1768 = vmatprep.subr.mxu0 0.0
    %1769 = vmatpush1.xpose.msra.mxu0 0.0
    %1770 = vmatprep.subr.mxu0 0.0
    %1771 = vmatpush1.xpose.msra.mxu0 0.0
    %1772 = vmatprep.subr.mxu0 0.0
    %1773 = vmatpush1.xpose.msra.mxu0 0.0
    %1774 = vmatprep.subr.mxu0 0.0
    %1775 = vmatpush1.xpose.msra.mxu0 0.0
    %1776 = vmatprep.subr.mxu0 0.0
    %1777 = vmatpush1.xpose.msra.mxu0 0.0
    %1778 = vmatprep.subr.mxu0 0.0
    %1779 = vmatpush1.xpose.msra.mxu0 0.0
    %1780 = vmatprep.subr.mxu0 0.0
    %1781 = vmatpush1.xpose.msra.mxu0 0.0
    %1782 = vmatprep.subr.mxu0 0.0
    %1783 = vmatpush1.xpose.msra.mxu0 0.0
    %1784 = vmatprep.subr.mxu0 0.0
    %1785 = vmatpush1.xpose.msra.mxu0 0.0
    %1786 = vmatprep.subr.mxu0 0.0
    %1787 = vmatpush1.xpose.msra.mxu0 0.0
    %1788 = vmatprep.subr.mxu0 0.0
    %1789 = vmatpush1.xpose.msra.mxu0 0.0
    %1790 = vmatprep.subr.mxu0 0.0
    %1791 = vmatpush1.xpose.msra.mxu0 0.0
    %1792 = vmatprep.subr.mxu0 0.0
    %1793 = vmatpush1.xpose.msra.mxu0 0.0
    %1794 = vmatprep.subr.mxu0 0.0
    %1795 = vmatpush1.xpose.msra.mxu0 0.0
    %1796 = vmatprep.subr.mxu0 0.0
    %1797 = vmatpush1.xpose.msra.mxu0 0.0
    %1798 = vmatprep.subr.mxu0 0.0
    %1799 = vmatpush1.xpose.msra.mxu0 0.0
    %1800 = vmatprep.subr.mxu0 0.0
    %1801 = vmatpush1.xpose.msra.mxu0 0.0
    %1802 = vmatprep.subr.mxu0 0.0
    %1803 = vmatpush1.xpose.msra.mxu0 0.0
    %1804 = vmatprep.subr.mxu0 0.0
    %1805 = vmatpush1.xpose.msra.mxu0 0.0
    %1806 = vmatprep.mubr.f32.mxu0 0.0
    %1807 = vmatmul.mubr.f32.gmra.mrb[0].mxu0 %v1737
    %v1808 = vpop.f32.mrb[0].mxu0
    %v1809 = vadd.f32 0.0, %v1808
    %v1810 = vpop.f32.mrb[0].mxu0
    %1811 = vdwg.mxu0
    %v1812 = vmul.f32 %v1733, 0.35355338
    %v1813 = vmul.f32 %v1809, 0.35355338
    %v1814 = vadd.f32 %v1812, %v510
    %v1815 = vadd.f32 %v1813, %v514
    %v1816 = vsel %vm350, %v1814, -inf
    %1817 = vmax.xlane.f32.xlu0 %v1816
    %v1818 = vpop.xlane.xlu0 %1817
    %v1819 = vsel %vm350, %v1815, -inf
    %1820 = vmax.xlane.f32.xlu0 %v1819
    %v1821 = vpop.xlane.xlu0 %1820
    %v1822 = vsub.f32 %v1814, %v1818
    %v1823 = vsub.f32 %v1815, %v1821
    %v1824 = vmul.f32 %v1822, 1.442695
    %v1825 = vpow.pop %v1824
    %v1826 = vmul.f32 %v1823, 1.442695
    %v1827 = vpow.pop %v1826
    %v1828 = vsel %vm350, %v1825, 0.0
    %1829 = vadd.xlane.f32.xlu0 %v1828
    %v1830 = vpop.xlane.xlu0 %1829
    %v1831 = vsel %vm350, %v1827, 0.0
    %1832 = vadd.xlane.f32.xlu0 %v1831
    %v1833 = vpop.xlane.xlu0 %1832
    %v1834 = vrcp.pop %v1830
    %v1835 = vmul.f32 1.0, %v1834
    %v1836 = vrcp.pop %v1833
    %v1837 = vmul.f32 1.0, %v1836
    %v1838 = vmul.f32 %v1825, %v1835
    %v1839 = vmul.f32 %v1827, %v1837
    %v1841 = vsel %vm350, %v1838, 0
    %1843 = vmatprep.subr.mxu0 0.0
    %1844 = vmatpush1.msra.mxu0 %v1652
    %1845 = vmatprep.subr.mxu0 0.0
    %1846 = vmatpush1.msra.mxu0 0.0
    %1847 = vmatprep.subr.mxu0 0.0
    %1848 = vmatpush1.msra.mxu0 0.0
    %1849 = vmatprep.subr.mxu0 0.0
    %1850 = vmatpush1.msra.mxu0 0.0
    %1851 = vmatprep.subr.mxu0 0.0
    %1852 = vmatpush1.msra.mxu0 0.0
    %1853 = vmatprep.subr.mxu0 0.0
    %1854 = vmatpush1.msra.mxu0 0.0
    %1855 = vmatprep.subr.mxu0 0.0
    %1856 = vmatpush1.msra.mxu0 0.0
    %1857 = vmatprep.subr.mxu0 0.0
    %1858 = vmatpush1.msra.mxu0 0.0
    %1859 = vmatprep.subr.mxu0 0.0
    %1860 = vmatpush1.msra.mxu0 0.0
    %1861 = vmatprep.subr.mxu0 0.0
    %1862 = vmatpush1.msra.mxu0 0.0
    %1863 = vmatprep.subr.mxu0 0.0
    %1864 = vmatpush1.msra.mxu0 0.0
    %1865 = vmatprep.subr.mxu0 0.0
    %1866 = vmatpush1.msra.mxu0 0.0
    %1867 = vmatprep.subr.mxu0 0.0
    %1868 = vmatpush1.msra.mxu0 0.0
    %1869 = vmatprep.subr.mxu0 0.0
    %1870 = vmatpush1.msra.mxu0 0.0
    %1871 = vmatprep.subr.mxu0 0.0
    %1872 = vmatpush1.msra.mxu0 0.0
    %1873 = vmatprep.subr.mxu0 0.0
    %1874 = vmatpush1.msra.mxu0 0.0
    %1875 = vmatprep.subr.mxu0 0.0
    %1876 = vmatpush1.msra.mxu0 0.0
    %1877 = vmatprep.subr.mxu0 0.0
    %1878 = vmatpush1.msra.mxu0 0.0
    %1879 = vmatprep.subr.mxu0 0.0
    %1880 = vmatpush1.msra.mxu0 0.0
    %1881 = vmatprep.subr.mxu0 0.0
    %1882 = vmatpush1.msra.mxu0 0.0
    %1883 = vmatprep.subr.mxu0 0.0
    %1884 = vmatpush1.msra.mxu0 0.0
    %1885 = vmatprep.subr.mxu0 0.0
    %1886 = vmatpush1.msra.mxu0 0.0
    %1887 = vmatprep.subr.mxu0 0.0
    %1888 = vmatpush1.msra.mxu0 0.0
    %1889 = vmatprep.subr.mxu0 0.0
    %1890 = vmatpush1.msra.mxu0 0.0
    %1891 = vmatprep.subr.mxu0 0.0
    %1892 = vmatpush1.msra.mxu0 0.0
    %1893 = vmatprep.subr.mxu0 0.0
    %1894 = vmatpush1.msra.mxu0 0.0
    %1895 = vmatprep.subr.mxu0 0.0
    %1896 = vmatpush1.msra.mxu0 0.0
    %1897 = vmatprep.subr.mxu0 0.0
    %1898 = vmatpush1.msra.mxu0 0.0
    %1899 = vmatprep.subr.mxu0 0.0
    %1900 = vmatpush1.msra.mxu0 0.0
    %1901 = vmatprep.subr.mxu0 0.0
    %1902 = vmatpush1.msra.mxu0 0.0
    %1903 = vmatprep.subr.mxu0 0.0
    %1904 = vmatpush1.msra.mxu0 0.0
    %1905 = vmatprep.subr.mxu0 0.0
    %1906 = vmatpush1.msra.mxu0 0.0
    %1907 = vmatprep.mubr.f32.mxu0 0.0
    %1908 = vmatmul.mubr.f32.gmra.mrb[0].mxu0 %v1841
    %v1909 = vpop.f32.mrb[0].mxu0
    %v1910 = vadd.f32 0.0, %v1909
    %v1911 = vpop.f32.mrb[0].mxu0
    %1912 = vdwg.mxu0
    %v1914 = vsel %vm350, %v1839, 0
    %1916 = vmatprep.subr.mxu0 0.0
    %1917 = vmatpush1.msra.mxu0 %v1657
    %1918 = vmatprep.subr.mxu0 0.0
    %1919 = vmatpush1.msra.mxu0 0.0
    %1920 = vmatprep.subr.mxu0 0.0
    %1921 = vmatpush1.msra.mxu0 0.0
    %1922 = vmatprep.subr.mxu0 0.0
    %1923 = vmatpush1.msra.mxu0 0.0
    %1924 = vmatprep.subr.mxu0 0.0
    %1925 = vmatpush1.msra.mxu0 0.0
    %1926 = vmatprep.subr.mxu0 0.0
    %1927 = vmatpush1.msra.mxu0 0.0
    %1928 = vmatprep.subr.mxu0 0.0
    %1929 = vmatpush1.msra.mxu0 0.0
    %1930 = vmatprep.subr.mxu0 0.0
    %1931 = vmatpush1.msra.mxu0 0.0
    %1932 = vmatprep.subr.mxu0 0.0
    %1933 = vmatpush1.msra.mxu0 0.0
    %1934 = vmatprep.subr.mxu0 0.0
    %1935 = vmatpush1.msra.mxu0 0.0
    %1936 = vmatprep.subr.mxu0 0.0
    %1937 = vmatpush1.msra.mxu0 0.0
    %1938 = vmatprep.subr.mxu0 0.0
    %1939 = vmatpush1.msra.mxu0 0.0
    %1940 = vmatprep.subr.mxu0 0.0
    %1941 = vmatpush1.msra.mxu0 0.0
    %1942 = vmatprep.subr.mxu0 0.0
    %1943 = vmatpush1.msra.mxu0 0.0
    %1944 = vmatprep.subr.mxu0 0.0
    %1945 = vmatpush1.msra.mxu0 0.0
    %1946 = vmatprep.subr.mxu0 0.0
    %1947 = vmatpush1.msra.mxu0 0.0
    %1948 = vmatprep.subr.mxu0 0.0
    %1949 = vmatpush1.msra.mxu0 0.0
    %1950 = vmatprep.subr.mxu0 0.0
    %1951 = vmatpush1.msra.mxu0 0.0
    %1952 = vmatprep.subr.mxu0 0.0
    %1953 = vmatpush1.msra.mxu0 0.0
    %1954 = vmatprep.subr.mxu0 0.0
    %1955 = vmatpush1.msra.mxu0 0.0
    %1956 = vmatprep.subr.mxu0 0.0
    %1957 = vmatpush1.msra.mxu0 0.0
    %1958 = vmatprep.subr.mxu0 0.0
    %1959 = vmatpush1.msra.mxu0 0.0
    %1960 = vmatprep.subr.mxu0 0.0
    %1961 = vmatpush1.msra.mxu0 0.0
    %1962 = vmatprep.subr.mxu0 0.0
    %1963 = vmatpush1.msra.mxu0 0.0
    %1964 = vmatprep.subr.mxu0 0.0
    %1965 = vmatpush1.msra.mxu0 0.0
    %1966 = vmatprep.subr.mxu0 0.0
    %1967 = vmatpush1.msra.mxu0 0.0
    %1968 = vmatprep.subr.mxu0 0.0
    %1969 = vmatpush1.msra.mxu0 0.0
    %1970 = vmatprep.subr.mxu0 0.0
    %1971 = vmatpush1.msra.mxu0 0.0
    %1972 = vmatprep.subr.mxu0 0.0
    %1973 = vmatpush1.msra.mxu0 0.0
    %1974 = vmatprep.subr.mxu0 0.0
    %1975 = vmatpush1.msra.mxu0 0.0
    %1976 = vmatprep.subr.mxu0 0.0
    %1977 = vmatpush1.msra.mxu0 0.0
    %1978 = vmatprep.subr.mxu0 0.0
    %1979 = vmatpush1.msra.mxu0 0.0
    %1980 = vmatprep.mubr.f32.mxu0 0.0
    %1981 = vmatmul.mubr.f32.gmra.mrb[0].mxu0 %v1914
    %v1982 = vpop.f32.mrb[0].mxu0
    %v1983 = vadd.f32 0.0, %v1982
    %v1984 = vpop.f32.mrb[0].mxu0
    %1985 = vdwg.mxu0
    %s1986 = scalar_lea.vmem %s4, 16
    %v1987 = vld [vmem:[%s1986] sm:$0xff]
    %v1989 = vsel %vm350, %v1910, 0
    %v1992 = vsel %vm350, %v1983, 0
    %1994 = vmatprep.subr.mxu0 0.0
    %1995 = vmatpush1.msra.mxu0 %v1987
    %1996 = vmatprep.subr.mxu0 0.0
    %1997 = vmatpush1.msra.mxu0 0.0
    %1998 = vmatprep.subr.mxu0 0.0
    %1999 = vmatpush1.msra.mxu0 0.0
    %2000 = vmatprep.subr.mxu0 0.0
    %2001 = vmatpush1.msra.mxu0 0.0
    %2002 = vmatprep.subr.mxu0 0.0
    %2003 = vmatpush1.msra.mxu0 0.0
    %2004 = vmatprep.subr.mxu0 0.0
    %2005 = vmatpush1.msra.mxu0 0.0
    %2006 = vmatprep.subr.mxu0 0.0
    %2007 = vmatpush1.msra.mxu0 0.0
    %2008 = vmatprep.subr.mxu0 0.0
    %2009 = vmatpush1.msra.mxu0 0.0
    %2010 = vmatprep.subr.mxu0 0.0
    %2011 = vmatpush1.msra.mxu0 0.0
    %2012 = vmatprep.subr.mxu0 0.0
    %2013 = vmatpush1.msra.mxu0 0.0
    %2014 = vmatprep.subr.mxu0 0.0
    %2015 = vmatpush1.msra.mxu0 0.0
    %2016 = vmatprep.subr.mxu0 0.0
    %2017 = vmatpush1.msra.mxu0 0.0
    %2018 = vmatprep.subr.mxu0 0.0
    %2019 = vmatpush1.msra.mxu0 0.0
    %2020 = vmatprep.subr.mxu0 0.0
    %2021 = vmatpush1.msra.mxu0 0.0
    %2022 = vmatprep.subr.mxu0 0.0
    %2023 = vmatpush1.msra.mxu0 0.0
    %2024 = vmatprep.subr.mxu0 0.0
    %2025 = vmatpush1.msra.mxu0 0.0
    %2026 = vmatprep.subr.mxu0 0.0
    %2027 = vmatpush1.msra.mxu0 0.0
    %2028 = vmatprep.subr.mxu0 0.0
    %2029 = vmatpush1.msra.mxu0 0.0
    %2030 = vmatprep.subr.mxu0 0.0
    %2031 = vmatpush1.msra.mxu0 0.0
    %2032 = vmatprep.subr.mxu0 0.0
    %2033 = vmatpush1.msra.mxu0 0.0
    %2034 = vmatprep.subr.mxu0 0.0
    %2035 = vmatpush1.msra.mxu0 0.0
    %2036 = vmatprep.subr.mxu0 0.0
    %2037 = vmatpush1.msra.mxu0 0.0
    %2038 = vmatprep.subr.mxu0 0.0
    %2039 = vmatpush1.msra.mxu0 0.0
    %2040 = vmatprep.subr.mxu0 0.0
    %2041 = vmatpush1.msra.mxu0 0.0
    %2042 = vmatprep.subr.mxu0 0.0
    %2043 = vmatpush1.msra.mxu0 0.0
    %2044 = vmatprep.subr.mxu0 0.0
    %2045 = vmatpush1.msra.mxu0 0.0
    %2046 = vmatprep.subr.mxu0 0.0
    %2047 = vmatpush1.msra.mxu0 0.0
    %2048 = vmatprep.subr.mxu0 0.0
    %2049 = vmatpush1.msra.mxu0 0.0
    %2050 = vmatprep.subr.mxu0 0.0
    %2051 = vmatpush1.msra.mxu0 0.0
    %2052 = vmatprep.subr.mxu0 0.0
    %2053 = vmatpush1.msra.mxu0 0.0
    %2054 = vmatprep.subr.mxu0 0.0
    %2055 = vmatpush1.msra.mxu0 0.0
    %2056 = vmatprep.subr.mxu0 0.0
    %2057 = vmatpush1.msra.mxu0 0.0
    %2058 = vmatprep.mubr.f32.mxu0 0.0
    %2059 = vmatmul.mubr.f32.gmra.mrb[0].mxu0 %v1989
    %v2060 = vpop.f32.mrb[0].mxu0
    %v2061 = vadd.f32 0.0, %v2060
    %v2062 = vpop.f32.mrb[0].mxu0
    %2063 = vmatprep.mubr.f32.mxu0 0.0
    %2064 = vmatmul.mubr.f32.gmra.mrb[0].mxu0 %v1992
    %v2065 = vpop.f32.mrb[0].mxu0
    %v2066 = vadd.f32 0.0, %v2065
    %v2067 = vpop.f32.mrb[0].mxu0
    %2068 = vdwg.mxu0
    %v2069 = vadd.f32 %v1412, %v2061
    %v2070 = vadd.f32 %v1417, %v2066
    %s2071 = scalar_lea.vmem %s3, 96
    %v2072 = vld [vmem:[%s2071] sm:$0xff]
    %v2073 = vld [vmem:[%s2071 + $0x8] sm:$0xff]
    %v2074 = vld [vmem:[%s2071 + $0x10] sm:$0xff]
    %v2075 = vld [vmem:[%s2071 + $0x18] sm:$0xff]
    %2076 = vmatprep.subr.mxu0 0.0
    %2077 = vmatpush1.msra.mxu0 %v2072
    %2078 = vmatprep.subr.mxu0 0.0
    %2079 = vmatpush1.msra.mxu0 %v2073
    %2080 = vmatprep.subr.mxu0 0.0
    %2081 = vmatpush1.msra.mxu0 %v2074
    %2082 = vmatprep.subr.mxu0 0.0
    %2083 = vmatpush1.msra.mxu0 %v2075
    %2084 = vmatprep.subr.mxu0 0.0
    %2085 = vmatpush1.msra.mxu0 0.0
    %2086 = vmatprep.subr.mxu0 0.0
    %2087 = vmatpush1.msra.mxu0 0.0
    %2088 = vmatprep.subr.mxu0 0.0
    %2089 = vmatpush1.msra.mxu0 0.0
    %2090 = vmatprep.subr.mxu0 0.0
    %2091 = vmatpush1.msra.mxu0 0.0
    %2092 = vmatprep.subr.mxu0 0.0
    %2093 = vmatpush1.msra.mxu0 0.0
    %2094 = vmatprep.subr.mxu0 0.0
    %2095 = vmatpush1.msra.mxu0 0.0
    %2096 = vmatprep.subr.mxu0 0.0
    %2097 = vmatpush1.msra.mxu0 0.0
    %2098 = vmatprep.subr.mxu0 0.0
    %2099 = vmatpush1.msra.mxu0 0.0
    %2100 = vmatprep.subr.mxu0 0.0
    %2101 = vmatpush1.msra.mxu0 0.0
    %2102 = vmatprep.subr.mxu0 0.0
    %2103 = vmatpush1.msra.mxu0 0.0
    %2104 = vmatprep.subr.mxu0 0.0
    %2105 = vmatpush1.msra.mxu0 0.0
    %2106 = vmatprep.subr.mxu0 0.0
    %2107 = vmatpush1.msra.mxu0 0.0
    %2108 = vmatprep.subr.mxu0 0.0
    %2109 = vmatpush1.msra.mxu0 0.0
    %2110 = vmatprep.subr.mxu0 0.0
    %2111 = vmatpush1.msra.mxu0 0.0
    %2112 = vmatprep.subr.mxu0 0.0
    %2113 = vmatpush1.msra.mxu0 0.0
    %2114 = vmatprep.subr.mxu0 0.0
    %2115 = vmatpush1.msra.mxu0 0.0
    %2116 = vmatprep.subr.mxu0 0.0
    %2117 = vmatpush1.msra.mxu0 0.0
    %2118 = vmatprep.subr.mxu0 0.0
    %2119 = vmatpush1.msra.mxu0 0.0
    %2120 = vmatprep.subr.mxu0 0.0
    %2121 = vmatpush1.msra.mxu0 0.0
    %2122 = vmatprep.subr.mxu0 0.0
    %2123 = vmatpush1.msra.mxu0 0.0
    %2124 = vmatprep.subr.mxu0 0.0
    %2125 = vmatpush1.msra.mxu0 0.0
    %2126 = vmatprep.subr.mxu0 0.0
    %2127 = vmatpush1.msra.mxu0 0.0
    %2128 = vmatprep.subr.mxu0 0.0
    %2129 = vmatpush1.msra.mxu0 0.0
    %2130 = vmatprep.subr.mxu0 0.0
    %2131 = vmatpush1.msra.mxu0 0.0
    %2132 = vmatprep.subr.mxu0 0.0
    %2133 = vmatpush1.msra.mxu0 0.0
    %2134 = vmatprep.subr.mxu0 0.0
    %2135 = vmatpush1.msra.mxu0 0.0
    %2136 = vmatprep.subr.mxu0 0.0
    %2137 = vmatpush1.msra.mxu0 0.0
    %2138 = vmatprep.subr.mxu0 0.0
    %2139 = vmatpush1.msra.mxu0 0.0
    %2140 = vmatprep.mubr.f32.mxu0 0.0
    %2141 = vmatmul.mubr.f32.gmra.mrb[0].mxu0 %v110
    %v2142 = vpop.f32.mrb[0].mxu0
    %v2143 = vadd.f32 0.0, %v2142
    %v2144 = vpop.f32.mrb[0].mxu0
    %2145 = vmatprep.mubr.f32.mxu0 0.0
    %2146 = vmatmul.mubr.f32.gmra.mrb[0].mxu0 %v113
    %v2147 = vpop.f32.mrb[0].mxu0
    %v2148 = vadd.f32 0.0, %v2147
    %v2149 = vpop.f32.mrb[0].mxu0
    %2150 = vdwg.mxu0
    %s2151 = scalar_lea.vmem %s3, 224
    %v2152 = vld [vmem:[%s2151] sm:$0xff]
    %v2153 = vld [vmem:[%s2151 + $0x8] sm:$0xff]
    %v2154 = vld [vmem:[%s2151 + $0x10] sm:$0xff]
    %v2155 = vld [vmem:[%s2151 + $0x18] sm:$0xff]
    %2156 = vmatprep.subr.mxu0 0.0
    %2157 = vmatpush1.msra.mxu0 %v2152
    %2158 = vmatprep.subr.mxu0 0.0
    %2159 = vmatpush1.msra.mxu0 %v2153
    %2160 = vmatprep.subr.mxu0 0.0
    %2161 = vmatpush1.msra.mxu0 %v2154
    %2162 = vmatprep.subr.mxu0 0.0
    %2163 = vmatpush1.msra.mxu0 %v2155
    %2164 = vmatprep.subr.mxu0 0.0
    %2165 = vmatpush1.msra.mxu0 0.0
    %2166 = vmatprep.subr.mxu0 0.0
    %2167 = vmatpush1.msra.mxu0 0.0
    %2168 = vmatprep.subr.mxu0 0.0
    %2169 = vmatpush1.msra.mxu0 0.0
    %2170 = vmatprep.subr.mxu0 0.0
    %2171 = vmatpush1.msra.mxu0 0.0
    %2172 = vmatprep.subr.mxu0 0.0
    %2173 = vmatpush1.msra.mxu0 0.0
    %2174 = vmatprep.subr.mxu0 0.0
    %2175 = vmatpush1.msra.mxu0 0.0
    %2176 = vmatprep.subr.mxu0 0.0
    %2177 = vmatpush1.msra.mxu0 0.0
    %2178 = vmatprep.subr.mxu0 0.0
    %2179 = vmatpush1.msra.mxu0 0.0
    %2180 = vmatprep.subr.mxu0 0.0
    %2181 = vmatpush1.msra.mxu0 0.0
    %2182 = vmatprep.subr.mxu0 0.0
    %2183 = vmatpush1.msra.mxu0 0.0
    %2184 = vmatprep.subr.mxu0 0.0
    %2185 = vmatpush1.msra.mxu0 0.0
    %2186 = vmatprep.subr.mxu0 0.0
    %2187 = vmatpush1.msra.mxu0 0.0
    %2188 = vmatprep.subr.mxu0 0.0
    %2189 = vmatpush1.msra.mxu0 0.0
    %2190 = vmatprep.subr.mxu0 0.0
    %2191 = vmatpush1.msra.mxu0 0.0
    %2192 = vmatprep.subr.mxu0 0.0
    %2193 = vmatpush1.msra.mxu0 0.0
    %2194 = vmatprep.subr.mxu0 0.0
    %2195 = vmatpush1.msra.mxu0 0.0
    %2196 = vmatprep.subr.mxu0 0.0
    %2197 = vmatpush1.msra.mxu0 0.0
    %2198 = vmatprep.subr.mxu0 0.0
    %2199 = vmatpush1.msra.mxu0 0.0
    %2200 = vmatprep.subr.mxu0 0.0
    %2201 = vmatpush1.msra.mxu0 0.0
    %2202 = vmatprep.subr.mxu0 0.0
    %2203 = vmatpush1.msra.mxu0 0.0
    %2204 = vmatprep.subr.mxu0 0.0
    %2205 = vmatpush1.msra.mxu0 0.0
    %2206 = vmatprep.subr.mxu0 0.0
    %2207 = vmatpush1.msra.mxu0 0.0
    %2208 = vmatprep.subr.mxu0 0.0
    %2209 = vmatpush1.msra.mxu0 0.0
    %2210 = vmatprep.subr.mxu0 0.0
    %2211 = vmatpush1.msra.mxu0 0.0
    %2212 = vmatprep.subr.mxu0 0.0
    %2213 = vmatpush1.msra.mxu0 0.0
    %2214 = vmatprep.subr.mxu0 0.0
    %2215 = vmatpush1.msra.mxu0 0.0
    %2216 = vmatprep.subr.mxu0 0.0
    %2217 = vmatpush1.msra.mxu0 0.0
    %2218 = vmatprep.subr.mxu0 0.0
    %2219 = vmatpush1.msra.mxu0 0.0
    %2220 = vmatprep.mubr.f32.mxu0 0.0
    %2221 = vmatmul.mubr.f32.gmra.mrb[0].mxu0 %v110
    %v2222 = vpop.f32.mrb[0].mxu0
    %v2223 = vadd.f32 0.0, %v2222
    %v2224 = vpop.f32.mrb[0].mxu0
    %2225 = vmatprep.mubr.f32.mxu0 0.0
    %2226 = vmatmul.mubr.f32.gmra.mrb[0].mxu0 %v113
    %v2227 = vpop.f32.mrb[0].mxu0
    %v2228 = vadd.f32 0.0, %v2227
    %v2229 = vpop.f32.mrb[0].mxu0
    %2230 = vdwg.mxu0
    %s2231 = scalar_lea.vmem %s3, 352
    %v2232 = vld [vmem:[%s2231] sm:$0xff]
    %v2233 = vld [vmem:[%s2231 + $0x8] sm:$0xff]
    %v2234 = vld [vmem:[%s2231 + $0x10] sm:$0xff]
    %v2235 = vld [vmem:[%s2231 + $0x18] sm:$0xff]
    %2236 = vmatprep.subr.mxu0 0.0
    %2237 = vmatpush1.msra.mxu0 %v2232
    %2238 = vmatprep.subr.mxu0 0.0
    %2239 = vmatpush1.msra.mxu0 %v2233
    %2240 = vmatprep.subr.mxu0 0.0
    %2241 = vmatpush1.msra.mxu0 %v2234
    %2242 = vmatprep.subr.mxu0 0.0
    %2243 = vmatpush1.msra.mxu0 %v2235
    %2244 = vmatprep.subr.mxu0 0.0
    %2245 = vmatpush1.msra.mxu0 0.0
    %2246 = vmatprep.subr.mxu0 0.0
    %2247 = vmatpush1.msra.mxu0 0.0
    %2248 = vmatprep.subr.mxu0 0.0
    %2249 = vmatpush1.msra.mxu0 0.0
    %2250 = vmatprep.subr.mxu0 0.0
    %2251 = vmatpush1.msra.mxu0 0.0
    %2252 = vmatprep.subr.mxu0 0.0
    %2253 = vmatpush1.msra.mxu0 0.0
    %2254 = vmatprep.subr.mxu0 0.0
    %2255 = vmatpush1.msra.mxu0 0.0
    %2256 = vmatprep.subr.mxu0 0.0
    %2257 = vmatpush1.msra.mxu0 0.0
    %2258 = vmatprep.subr.mxu0 0.0
    %2259 = vmatpush1.msra.mxu0 0.0
    %2260 = vmatprep.subr.mxu0 0.0
    %2261 = vmatpush1.msra.mxu0 0.0
    %2262 = vmatprep.subr.mxu0 0.0
    %2263 = vmatpush1.msra.mxu0 0.0
    %2264 = vmatprep.subr.mxu0 0.0
    %2265 = vmatpush1.msra.mxu0 0.0
    %2266 = vmatprep.subr.mxu0 0.0
    %2267 = vmatpush1.msra.mxu0 0.0
    %2268 = vmatprep.subr.mxu0 0.0
    %2269 = vmatpush1.msra.mxu0 0.0
    %2270 = vmatprep.subr.mxu0 0.0
    %2271 = vmatpush1.msra.mxu0 0.0
    %2272 = vmatprep.subr.mxu0 0.0
    %2273 = vmatpush1.msra.mxu0 0.0
    %2274 = vmatprep.subr.mxu0 0.0
    %2275 = vmatpush1.msra.mxu0 0.0
    %2276 = vmatprep.subr.mxu0 0.0
    %2277 = vmatpush1.msra.mxu0 0.0
    %2278 = vmatprep.subr.mxu0 0.0
    %2279 = vmatpush1.msra.mxu0 0.0
    %2280 = vmatprep.subr.mxu0 0.0
    %2281 = vmatpush1.msra.mxu0 0.0
    %2282 = vmatprep.subr.mxu0 0.0
    %2283 = vmatpush1.msra.mxu0 0.0
    %2284 = vmatprep.subr.mxu0 0.0
    %2285 = vmatpush1.msra.mxu0 0.0
    %2286 = vmatprep.subr.mxu0 0.0
    %2287 = vmatpush1.msra.mxu0 0.0
    %2288 = vmatprep.subr.mxu0 0.0
    %2289 = vmatpush1.msra.mxu0 0.0
    %2290 = vmatprep.subr.mxu0 0.0
    %2291 = vmatpush1.msra.mxu0 0.0
    %2292 = vmatprep.subr.mxu0 0.0
    %2293 = vmatpush1.msra.mxu0 0.0
    %2294 = vmatprep.subr.mxu0 0.0
    %2295 = vmatpush1.msra.mxu0 0.0
    %2296 = vmatprep.subr.mxu0 0.0
    %2297 = vmatpush1.msra.mxu0 0.0
    %2298 = vmatprep.subr.mxu0 0.0
    %2299 = vmatpush1.msra.mxu0 0.0
    %2300 = vmatprep.mubr.f32.mxu0 0.0
    %2301 = vmatmul.mubr.f32.gmra.mrb[0].mxu0 %v110
    %v2302 = vpop.f32.mrb[0].mxu0
    %v2303 = vadd.f32 0.0, %v2302
    %v2304 = vpop.f32.mrb[0].mxu0
    %2305 = vmatprep.mubr.f32.mxu0 0.0
    %2306 = vmatmul.mubr.f32.gmra.mrb[0].mxu0 %v113
    %v2307 = vpop.f32.mrb[0].mxu0
    %v2308 = vadd.f32 0.0, %v2307
    %v2309 = vpop.f32.mrb[0].mxu0
    %2310 = vdwg.mxu0
    %v2312 = vsel %vm350, %v2143, 0
    %v2315 = vsel %vm350, %v2223, 0
    %2317 = vmatprep.subr.mxu0 0.0
    %2318 = vmatpush1.xpose.msra.mxu0 %v2315
    %2319 = vmatprep.subr.mxu0 0.0
    %2320 = vmatpush1.xpose.msra.mxu0 0.0
    %2321 = vmatprep.subr.mxu0 0.0
    %2322 = vmatpush1.xpose.msra.mxu0 0.0
    %2323 = vmatprep.subr.mxu0 0.0
    %2324 = vmatpush1.xpose.msra.mxu0 0.0
    %2325 = vmatprep.subr.mxu0 0.0
    %2326 = vmatpush1.xpose.msra.mxu0 0.0
    %2327 = vmatprep.subr.mxu0 0.0
    %2328 = vmatpush1.xpose.msra.mxu0 0.0
    %2329 = vmatprep.subr.mxu0 0.0
    %2330 = vmatpush1.xpose.msra.mxu0 0.0
    %2331 = vmatprep.subr.mxu0 0.0
    %2332 = vmatpush1.xpose.msra.mxu0 0.0
    %2333 = vmatprep.subr.mxu0 0.0
    %2334 = vmatpush1.xpose.msra.mxu0 0.0
    %2335 = vmatprep.subr.mxu0 0.0
    %2336 = vmatpush1.xpose.msra.mxu0 0.0
    %2337 = vmatprep.subr.mxu0 0.0
    %2338 = vmatpush1.xpose.msra.mxu0 0.0
    %2339 = vmatprep.subr.mxu0 0.0
    %2340 = vmatpush1.xpose.msra.mxu0 0.0
    %2341 = vmatprep.subr.mxu0 0.0
    %2342 = vmatpush1.xpose.msra.mxu0 0.0
    %2343 = vmatprep.subr.mxu0 0.0
    %2344 = vmatpush1.xpose.msra.mxu0 0.0
    %2345 = vmatprep.subr.mxu0 0.0
    %2346 = vmatpush1.xpose.msra.mxu0 0.0
    %2347 = vmatprep.subr.mxu0 0.0
    %2348 = vmatpush1.xpose.msra.mxu0 0.0
    %2349 = vmatprep.subr.mxu0 0.0
    %2350 = vmatpush1.xpose.msra.mxu0 0.0
    %2351 = vmatprep.subr.mxu0 0.0
    %2352 = vmatpush1.xpose.msra.mxu0 0.0
    %2353 = vmatprep.subr.mxu0 0.0
    %2354 = vmatpush1.xpose.msra.mxu0 0.0
    %2355 = vmatprep.subr.mxu0 0.0
    %2356 = vmatpush1.xpose.msra.mxu0 0.0
    %2357 = vmatprep.subr.mxu0 0.0
    %2358 = vmatpush1.xpose.msra.mxu0 0.0
    %2359 = vmatprep.subr.mxu0 0.0
    %2360 = vmatpush1.xpose.msra.mxu0 0.0
    %2361 = vmatprep.subr.mxu0 0.0
    %2362 = vmatpush1.xpose.msra.mxu0 0.0
    %2363 = vmatprep.subr.mxu0 0.0
    %2364 = vmatpush1.xpose.msra.mxu0 0.0
    %2365 = vmatprep.subr.mxu0 0.0
    %2366 = vmatpush1.xpose.msra.mxu0 0.0
    %2367 = vmatprep.subr.mxu0 0.0
    %2368 = vmatpush1.xpose.msra.mxu0 0.0
    %2369 = vmatprep.subr.mxu0 0.0
    %2370 = vmatpush1.xpose.msra.mxu0 0.0
    %2371 = vmatprep.subr.mxu0 0.0
    %2372 = vmatpush1.xpose.msra.mxu0 0.0
    %2373 = vmatprep.subr.mxu0 0.0
    %2374 = vmatpush1.xpose.msra.mxu0 0.0
    %2375 = vmatprep.subr.mxu0 0.0
    %2376 = vmatpush1.xpose.msra.mxu0 0.0
    %2377 = vmatprep.subr.mxu0 0.0
    %2378 = vmatpush1.xpose.msra.mxu0 0.0
    %2379 = vmatprep.subr.mxu0 0.0
    %2380 = vmatpush1.xpose.msra.mxu0 0.0
    %2381 = vmatprep.mubr.f32.mxu0 0.0
    %2382 = vmatmul.mubr.f32.gmra.mrb[0].mxu0 %v2312
    %v2383 = vpop.f32.mrb[0].mxu0
    %v2384 = vadd.f32 0.0, %v2383
    %v2385 = vpop.f32.mrb[0].mxu0
    %2386 = vdwg.mxu0
    %v2388 = vsel %vm350, %v2148, 0
    %v2391 = vsel %vm350, %v2228, 0
    %2393 = vmatprep.subr.mxu0 0.0
    %2394 = vmatpush1.xpose.msra.mxu0 %v2391
    %2395 = vmatprep.subr.mxu0 0.0
    %2396 = vmatpush1.xpose.msra.mxu0 0.0
    %2397 = vmatprep.subr.mxu0 0.0
    %2398 = vmatpush1.xpose.msra.mxu0 0.0
    %2399 = vmatprep.subr.mxu0 0.0
    %2400 = vmatpush1.xpose.msra.mxu0 0.0
    %2401 = vmatprep.subr.mxu0 0.0
    %2402 = vmatpush1.xpose.msra.mxu0 0.0
    %2403 = vmatprep.subr.mxu0 0.0
    %2404 = vmatpush1.xpose.msra.mxu0 0.0
    %2405 = vmatprep.subr.mxu0 0.0
    %2406 = vmatpush1.xpose.msra.mxu0 0.0
    %2407 = vmatprep.subr.mxu0 0.0
    %2408 = vmatpush1.xpose.msra.mxu0 0.0
    %2409 = vmatprep.subr.mxu0 0.0
    %2410 = vmatpush1.xpose.msra.mxu0 0.0
    %2411 = vmatprep.subr.mxu0 0.0
    %2412 = vmatpush1.xpose.msra.mxu0 0.0
    %2413 = vmatprep.subr.mxu0 0.0
    %2414 = vmatpush1.xpose.msra.mxu0 0.0
    %2415 = vmatprep.subr.mxu0 0.0
    %2416 = vmatpush1.xpose.msra.mxu0 0.0
    %2417 = vmatprep.subr.mxu0 0.0
    %2418 = vmatpush1.xpose.msra.mxu0 0.0
    %2419 = vmatprep.subr.mxu0 0.0
    %2420 = vmatpush1.xpose.msra.mxu0 0.0
    %2421 = vmatprep.subr.mxu0 0.0
    %2422 = vmatpush1.xpose.msra.mxu0 0.0
    %2423 = vmatprep.subr.mxu0 0.0
    %2424 = vmatpush1.xpose.msra.mxu0 0.0
    %2425 = vmatprep.subr.mxu0 0.0
    %2426 = vmatpush1.xpose.msra.mxu0 0.0
    %2427 = vmatprep.subr.mxu0 0.0
    %2428 = vmatpush1.xpose.msra.mxu0 0.0
    %2429 = vmatprep.subr.mxu0 0.0
    %2430 = vmatpush1.xpose.msra.mxu0 0.0
    %2431 = vmatprep.subr.mxu0 0.0
    %2432 = vmatpush1.xpose.msra.mxu0 0.0
    %2433 = vmatprep.subr.mxu0 0.0
    %2434 = vmatpush1.xpose.msra.mxu0 0.0
    %2435 = vmatprep.subr.mxu0 0.0
    %2436 = vmatpush1.xpose.msra.mxu0 0.0
    %2437 = vmatprep.subr.mxu0 0.0
    %2438 = vmatpush1.xpose.msra.mxu0 0.0
    %2439 = vmatprep.subr.mxu0 0.0
    %2440 = vmatpush1.xpose.msra.mxu0 0.0
    %2441 = vmatprep.subr.mxu0 0.0
    %2442 = vmatpush1.xpose.msra.mxu0 0.0
    %2443 = vmatprep.subr.mxu0 0.0
    %2444 = vmatpush1.xpose.msra.mxu0 0.0
    %2445 = vmatprep.subr.mxu0 0.0
    %2446 = vmatpush1.xpose.msra.mxu0 0.0
    %2447 = vmatprep.subr.mxu0 0.0
    %2448 = vmatpush1.xpose.msra.mxu0 0.0
    %2449 = vmatprep.subr.mxu0 0.0
    %2450 = vmatpush1.xpose.msra.mxu0 0.0
    %2451 = vmatprep.subr.mxu0 0.0
    %2452 = vmatpush1.xpose.msra.mxu0 0.0
    %2453 = vmatprep.subr.mxu0 0.0
    %2454 = vmatpush1.xpose.msra.mxu0 0.0
    %2455 = vmatprep.subr.mxu0 0.0
    %2456 = vmatpush1.xpose.msra.mxu0 0.0
    %2457 = vmatprep.mubr.f32.mxu0 0.0
    %2458 = vmatmul.mubr.f32.gmra.mrb[0].mxu0 %v2388
    %v2459 = vpop.f32.mrb[0].mxu0
    %v2460 = vadd.f32 0.0, %v2459
    %v2461 = vpop.f32.mrb[0].mxu0
    %2462 = vdwg.mxu0
    %v2463 = vmul.f32 %v2384, 0.35355338
    %v2464 = vmul.f32 %v2460, 0.35355338
    %v2465 = vadd.f32 %v2463, %v510
    %v2466 = vadd.f32 %v2464, %v514
    %v2467 = vsel %vm350, %v2465, -inf
    %2468 = vmax.xlane.f32.xlu0 %v2467
    %v2469 = vpop.xlane.xlu0 %2468
    %v2470 = vsel %vm350, %v2466, -inf
    %2471 = vmax.xlane.f32.xlu0 %v2470
    %v2472 = vpop.xlane.xlu0 %2471
    %v2473 = vsub.f32 %v2465, %v2469
    %v2474 = vsub.f32 %v2466, %v2472
    %v2475 = vmul.f32 %v2473, 1.442695
    %v2476 = vpow.pop %v2475
    %v2477 = vmul.f32 %v2474, 1.442695
    %v2478 = vpow.pop %v2477
    %v2479 = vsel %vm350, %v2476, 0.0
    %2480 = vadd.xlane.f32.xlu0 %v2479
    %v2481 = vpop.xlane.xlu0 %2480
    %v2482 = vsel %vm350, %v2478, 0.0
    %2483 = vadd.xlane.f32.xlu0 %v2482
    %v2484 = vpop.xlane.xlu0 %2483
    %v2485 = vrcp.pop %v2481
    %v2486 = vmul.f32 1.0, %v2485
    %v2487 = vrcp.pop %v2484
    %v2488 = vmul.f32 1.0, %v2487
    %v2489 = vmul.f32 %v2476, %v2486
    %v2490 = vmul.f32 %v2478, %v2488
    %v2492 = vsel %vm350, %v2489, 0
    %2494 = vmatprep.subr.mxu0 0.0
    %2495 = vmatpush1.msra.mxu0 %v2303
    %2496 = vmatprep.subr.mxu0 0.0
    %2497 = vmatpush1.msra.mxu0 0.0
    %2498 = vmatprep.subr.mxu0 0.0
    %2499 = vmatpush1.msra.mxu0 0.0
    %2500 = vmatprep.subr.mxu0 0.0
    %2501 = vmatpush1.msra.mxu0 0.0
    %2502 = vmatprep.subr.mxu0 0.0
    %2503 = vmatpush1.msra.mxu0 0.0
    %2504 = vmatprep.subr.mxu0 0.0
    %2505 = vmatpush1.msra.mxu0 0.0
    %2506 = vmatprep.subr.mxu0 0.0
    %2507 = vmatpush1.msra.mxu0 0.0
    %2508 = vmatprep.subr.mxu0 0.0
    %2509 = vmatpush1.msra.mxu0 0.0
    %2510 = vmatprep.subr.mxu0 0.0
    %2511 = vmatpush1.msra.mxu0 0.0
    %2512 = vmatprep.subr.mxu0 0.0
    %2513 = vmatpush1.msra.mxu0 0.0
    %2514 = vmatprep.subr.mxu0 0.0
    %2515 = vmatpush1.msra.mxu0 0.0
    %2516 = vmatprep.subr.mxu0 0.0
    %2517 = vmatpush1.msra.mxu0 0.0
    %2518 = vmatprep.subr.mxu0 0.0
    %2519 = vmatpush1.msra.mxu0 0.0
    %2520 = vmatprep.subr.mxu0 0.0
    %2521 = vmatpush1.msra.mxu0 0.0
    %2522 = vmatprep.subr.mxu0 0.0
    %2523 = vmatpush1.msra.mxu0 0.0
    %2524 = vmatprep.subr.mxu0 0.0
    %2525 = vmatpush1.msra.mxu0 0.0
    %2526 = vmatprep.subr.mxu0 0.0
    %2527 = vmatpush1.msra.mxu0 0.0
    %2528 = vmatprep.subr.mxu0 0.0
    %2529 = vmatpush1.msra.mxu0 0.0
    %2530 = vmatprep.subr.mxu0 0.0
    %2531 = vmatpush1.msra.mxu0 0.0
    %2532 = vmatprep.subr.mxu0 0.0
    %2533 = vmatpush1.msra.mxu0 0.0
    %2534 = vmatprep.subr.mxu0 0.0
    %2535 = vmatpush1.msra.mxu0 0.0
    %2536 = vmatprep.subr.mxu0 0.0
    %2537 = vmatpush1.msra.mxu0 0.0
    %2538 = vmatprep.subr.mxu0 0.0
    %2539 = vmatpush1.msra.mxu0 0.0
    %2540 = vmatprep.subr.mxu0 0.0
    %2541 = vmatpush1.msra.mxu0 0.0
    %2542 = vmatprep.subr.mxu0 0.0
    %2543 = vmatpush1.msra.mxu0 0.0
    %2544 = vmatprep.subr.mxu0 0.0
    %2545 = vmatpush1.msra.mxu0 0.0
    %2546 = vmatprep.subr.mxu0 0.0
    %2547 = vmatpush1.msra.mxu0 0.0
    %2548 = vmatprep.subr.mxu0 0.0
    %2549 = vmatpush1.msra.mxu0 0.0
    %2550 = vmatprep.subr.mxu0 0.0
    %2551 = vmatpush1.msra.mxu0 0.0
    %2552 = vmatprep.subr.mxu0 0.0
    %2553 = vmatpush1.msra.mxu0 0.0
    %2554 = vmatprep.subr.mxu0 0.0
    %2555 = vmatpush1.msra.mxu0 0.0
    %2556 = vmatprep.subr.mxu0 0.0
    %2557 = vmatpush1.msra.mxu0 0.0
    %2558 = vmatprep.mubr.f32.mxu0 0.0
    %2559 = vmatmul.mubr.f32.gmra.mrb[0].mxu0 %v2492
    %v2560 = vpop.f32.mrb[0].mxu0
    %v2561 = vadd.f32 0.0, %v2560
    %v2562 = vpop.f32.mrb[0].mxu0
    %2563 = vdwg.mxu0
    %v2565 = vsel %vm350, %v2490, 0
    %2567 = vmatprep.subr.mxu0 0.0
    %2568 = vmatpush1.msra.mxu0 %v2308
    %2569 = vmatprep.subr.mxu0 0.0
    %2570 = vmatpush1.msra.mxu0 0.0
    %2571 = vmatprep.subr.mxu0 0.0
    %2572 = vmatpush1.msra.mxu0 0.0
    %2573 = vmatprep.subr.mxu0 0.0
    %2574 = vmatpush1.msra.mxu0 0.0
    %2575 = vmatprep.subr.mxu0 0.0
    %2576 = vmatpush1.msra.mxu0 0.0
    %2577 = vmatprep.subr.mxu0 0.0
    %2578 = vmatpush1.msra.mxu0 0.0
    %2579 = vmatprep.subr.mxu0 0.0
    %2580 = vmatpush1.msra.mxu0 0.0
    %2581 = vmatprep.subr.mxu0 0.0
    %2582 = vmatpush1.msra.mxu0 0.0
    %2583 = vmatprep.subr.mxu0 0.0
    %2584 = vmatpush1.msra.mxu0 0.0
    %2585 = vmatprep.subr.mxu0 0.0
    %2586 = vmatpush1.msra.mxu0 0.0
    %2587 = vmatprep.subr.mxu0 0.0
    %2588 = vmatpush1.msra.mxu0 0.0
    %2589 = vmatprep.subr.mxu0 0.0
    %2590 = vmatpush1.msra.mxu0 0.0
    %2591 = vmatprep.subr.mxu0 0.0
    %2592 = vmatpush1.msra.mxu0 0.0
    %2593 = vmatprep.subr.mxu0 0.0
    %2594 = vmatpush1.msra.mxu0 0.0
    %2595 = vmatprep.subr.mxu0 0.0
    %2596 = vmatpush1.msra.mxu0 0.0
    %2597 = vmatprep.subr.mxu0 0.0
    %2598 = vmatpush1.msra.mxu0 0.0
    %2599 = vmatprep.subr.mxu0 0.0
    %2600 = vmatpush1.msra.mxu0 0.0
    %2601 = vmatprep.subr.mxu0 0.0
    %2602 = vmatpush1.msra.mxu0 0.0
    %2603 = vmatprep.subr.mxu0 0.0
    %2604 = vmatpush1.msra.mxu0 0.0
    %2605 = vmatprep.subr.mxu0 0.0
    %2606 = vmatpush1.msra.mxu0 0.0
    %2607 = vmatprep.subr.mxu0 0.0
    %2608 = vmatpush1.msra.mxu0 0.0
    %2609 = vmatprep.subr.mxu0 0.0
    %2610 = vmatpush1.msra.mxu0 0.0
    %2611 = vmatprep.subr.mxu0 0.0
    %2612 = vmatpush1.msra.mxu0 0.0
    %2613 = vmatprep.subr.mxu0 0.0
    %2614 = vmatpush1.msra.mxu0 0.0
    %2615 = vmatprep.subr.mxu0 0.0
    %2616 = vmatpush1.msra.mxu0 0.0
    %2617 = vmatprep.subr.mxu0 0.0
    %2618 = vmatpush1.msra.mxu0 0.0
    %2619 = vmatprep.subr.mxu0 0.0
    %2620 = vmatpush1.msra.mxu0 0.0
    %2621 = vmatprep.subr.mxu0 0.0
    %2622 = vmatpush1.msra.mxu0 0.0
    %2623 = vmatprep.subr.mxu0 0.0
    %2624 = vmatpush1.msra.mxu0 0.0
    %2625 = vmatprep.subr.mxu0 0.0
    %2626 = vmatpush1.msra.mxu0 0.0
    %2627 = vmatprep.subr.mxu0 0.0
    %2628 = vmatpush1.msra.mxu0 0.0
    %2629 = vmatprep.subr.mxu0 0.0
    %2630 = vmatpush1.msra.mxu0 0.0
    %2631 = vmatprep.mubr.f32.mxu0 0.0
    %2632 = vmatmul.mubr.f32.gmra.mrb[0].mxu0 %v2565
    %v2633 = vpop.f32.mrb[0].mxu0
    %v2634 = vadd.f32 0.0, %v2633
    %v2635 = vpop.f32.mrb[0].mxu0
    %2636 = vdwg.mxu0
    %s2637 = scalar_lea.vmem %s4, 24
    %v2638 = vld [vmem:[%s2637] sm:$0xff]
    %v2640 = vsel %vm350, %v2561, 0
    %v2643 = vsel %vm350, %v2634, 0
    %2645 = vmatprep.subr.mxu0 0.0
    %2646 = vmatpush1.msra.mxu0 %v2638
    %2647 = vmatprep.subr.mxu0 0.0
    %2648 = vmatpush1.msra.mxu0 0.0
    %2649 = vmatprep.subr.mxu0 0.0
    %2650 = vmatpush1.msra.mxu0 0.0
    %2651 = vmatprep.subr.mxu0 0.0
    %2652 = vmatpush1.msra.mxu0 0.0
    %2653 = vmatprep.subr.mxu0 0.0
    %2654 = vmatpush1.msra.mxu0 0.0
    %2655 = vmatprep.subr.mxu0 0.0
    %2656 = vmatpush1.msra.mxu0 0.0
    %2657 = vmatprep.subr.mxu0 0.0
    %2658 = vmatpush1.msra.mxu0 0.0
    %2659 = vmatprep.subr.mxu0 0.0
    %2660 = vmatpush1.msra.mxu0 0.0
    %2661 = vmatprep.subr.mxu0 0.0
    %2662 = vmatpush1.msra.mxu0 0.0
    %2663 = vmatprep.subr.mxu0 0.0
    %2664 = vmatpush1.msra.mxu0 0.0
    %2665 = vmatprep.subr.mxu0 0.0
    %2666 = vmatpush1.msra.mxu0 0.0
    %2667 = vmatprep.subr.mxu0 0.0
    %2668 = vmatpush1.msra.mxu0 0.0
    %2669 = vmatprep.subr.mxu0 0.0
    %2670 = vmatpush1.msra.mxu0 0.0
    %2671 = vmatprep.subr.mxu0 0.0
    %2672 = vmatpush1.msra.mxu0 0.0
    %2673 = vmatprep.subr.mxu0 0.0
    %2674 = vmatpush1.msra.mxu0 0.0
    %2675 = vmatprep.subr.mxu0 0.0
    %2676 = vmatpush1.msra.mxu0 0.0
    %2677 = vmatprep.subr.mxu0 0.0
    %2678 = vmatpush1.msra.mxu0 0.0
    %2679 = vmatprep.subr.mxu0 0.0
    %2680 = vmatpush1.msra.mxu0 0.0
    %2681 = vmatprep.subr.mxu0 0.0
    %2682 = vmatpush1.msra.mxu0 0.0
    %2683 = vmatprep.subr.mxu0 0.0
    %2684 = vmatpush1.msra.mxu0 0.0
    %2685 = vmatprep.subr.mxu0 0.0
    %2686 = vmatpush1.msra.mxu0 0.0
    %2687 = vmatprep.subr.mxu0 0.0
    %2688 = vmatpush1.msra.mxu0 0.0
    %2689 = vmatprep.subr.mxu0 0.0
    %2690 = vmatpush1.msra.mxu0 0.0
    %2691 = vmatprep.subr.mxu0 0.0
    %2692 = vmatpush1.msra.mxu0 0.0
    %2693 = vmatprep.subr.mxu0 0.0
    %2694 = vmatpush1.msra.mxu0 0.0
    %2695 = vmatprep.subr.mxu0 0.0
    %2696 = vmatpush1.msra.mxu0 0.0
    %2697 = vmatprep.subr.mxu0 0.0
    %2698 = vmatpush1.msra.mxu0 0.0
    %2699 = vmatprep.subr.mxu0 0.0
    %2700 = vmatpush1.msra.mxu0 0.0
    %2701 = vmatprep.subr.mxu0 0.0
    %2702 = vmatpush1.msra.mxu0 0.0
    %2703 = vmatprep.subr.mxu0 0.0
    %2704 = vmatpush1.msra.mxu0 0.0
    %2705 = vmatprep.subr.mxu0 0.0
    %2706 = vmatpush1.msra.mxu0 0.0
    %2707 = vmatprep.subr.mxu0 0.0
    %2708 = vmatpush1.msra.mxu0 0.0
    %2709 = vmatprep.mubr.f32.mxu0 0.0
    %2710 = vmatmul.mubr.f32.gmra.mrb[0].mxu0 %v2640
    %v2711 = vpop.f32.mrb[0].mxu0
    %v2712 = vadd.f32 0.0, %v2711
    %v2713 = vpop.f32.mrb[0].mxu0
    %2714 = vmatprep.mubr.f32.mxu0 0.0
    %2715 = vmatmul.mubr.f32.gmra.mrb[0].mxu0 %v2643
    %v2716 = vpop.f32.mrb[0].mxu0
    %v2717 = vadd.f32 0.0, %v2716
    %v2718 = vpop.f32.mrb[0].mxu0
    %2719 = vdwg.mxu0
    %v2720 = vadd.f32 %v2069, %v2712
    %v2721 = vadd.f32 %v2070, %v2717
    %v2722 = vadd.f32 %v46, %v2720
    %v2723 = vadd.f32 %v47, %v2721
    %s2724 = sld [smem:[#allocation2 + $0x80]]
    %s2725 = sld [smem:[#allocation2 + $0x81]]
    %v2726 = vsel %vm50, %v2722, 0.0
    %2727 = vadd.xlane.f32.xlu0 %v2726
    %v2728 = vpop.xlane.xlu0 %2727
    %v2729 = vsel %vm50, %v2723, 0.0
    %2730 = vadd.xlane.f32.xlu0 %v2729
    %v2731 = vpop.xlane.xlu0 %2730
    %v2732 = vmul.f32 %v2728, %v57
    %v2733 = vmul.f32 %v2731, %v57
    %v2734 = vsub.f32 %v2722, %v2732
    %v2735 = vsub.f32 %v2723, %v2733
    %v2736 = vmul.f32 %v2734, %v2734
    %v2737 = vmul.f32 %v2735, %v2735
    %v2738 = vsel %vm50, %v2736, 0.0
    %2739 = vadd.xlane.f32.xlu0 %v2738
    %v2740 = vpop.xlane.xlu0 %2739
    %v2741 = vsel %vm50, %v2737, 0.0
    %2742 = vadd.xlane.f32.xlu0 %v2741
    %v2743 = vpop.xlane.xlu0 %2742
    %v2744 = vmul.f32 %v2740, %v70
    %v2745 = vmul.f32 %v2743, %v70
    %v2746 = vrsqrt.pop %v2744
    %v2747 = vmul.f32 %v2744, %v2746
    %vm2748 = vcmp.eq.f32.partialorder %v2744, inf
    %v2749 = vsel %vm2748, %v2744, %v2747
    %vm2750 = vcmp.eq.f32.partialorder %v2744, 0.0
    %v2751 = vand.u32 %v2744, 2147483648
    %v2752 = vsel %vm2750, %v2751, %v2749
    %v2753 = vrsqrt.pop %v2745
    %v2754 = vmul.f32 %v2745, %v2753
    %vm2755 = vcmp.eq.f32.partialorder %v2745, inf
    %v2756 = vsel %vm2755, %v2745, %v2754
    %vm2757 = vcmp.eq.f32.partialorder %v2745, 0.0
    %v2758 = vand.u32 %v2745, 2147483648
    %v2759 = vsel %vm2757, %v2758, %v2756
    %v2760 = vstv %s2724
    %v2761 = vmul.f32 %v2760, %v2734
    %v2762 = vmul.f32 %v2760, %v2735
    %v2763 = vadd.f32 %v2752, 1e-07
    %v2764 = vadd.f32 %v2759, 1e-07
    %v2765 = vrcp.pop %v2763
    %v2766 = vmul.f32 %v2761, %v2765
    %v2767 = vrcp.pop %v2764
    %v2768 = vmul.f32 %v2762, %v2767
    %v2769 = vstv %s2725
    %v2770 = vadd.f32 %v2766, %v2769
    %v2771 = vadd.f32 %v2768, %v2769
    %v2772 = vld [vmem:[%s5] sm:$0xff]
    %v2773 = vld [vmem:[%s5 + $0x8] sm:$0xff]
    %v2774 = vld [vmem:[%s5 + $0x10] sm:$0xff]
    %v2775 = vld [vmem:[%s5 + $0x18] sm:$0xff]
    %v2776 = vld [vmem:[%s6] sm:$0x1]
    %v2778 = vlaneseq
    %v2779 = vshrl.u32 %v2778, 7
    %v2780 = vsub.s32 0, %v2779
    %v2781 = vrot.slane %v2776, %v2780
    %v2784 = vsel %vm50, %v2770, 0
    %v2787 = vsel %vm50, %v2771, 0
    %2789 = vmatprep.subr.mxu0 0.0
    %2790 = vmatpush1.msra.mxu0 %v2772
    %2791 = vmatprep.subr.mxu0 0.0
    %2792 = vmatpush1.msra.mxu0 %v2773
    %2793 = vmatprep.subr.mxu0 0.0
    %2794 = vmatpush1.msra.mxu0 %v2774
    %2795 = vmatprep.subr.mxu0 0.0
    %2796 = vmatpush1.msra.mxu0 %v2775
    %2797 = vmatprep.subr.mxu0 0.0
    %2798 = vmatpush1.msra.mxu0 0.0
    %2799 = vmatprep.subr.mxu0 0.0
    %2800 = vmatpush1.msra.mxu0 0.0
    %2801 = vmatprep.subr.mxu0 0.0
    %2802 = vmatpush1.msra.mxu0 0.0
    %2803 = vmatprep.subr.mxu0 0.0
    %2804 = vmatpush1.msra.mxu0 0.0
    %2805 = vmatprep.subr.mxu0 0.0
    %2806 = vmatpush1.msra.mxu0 0.0
    %2807 = vmatprep.subr.mxu0 0.0
    %2808 = vmatpush1.msra.mxu0 0.0
    %2809 = vmatprep.subr.mxu0 0.0
    %2810 = vmatpush1.msra.mxu0 0.0
    %2811 = vmatprep.subr.mxu0 0.0
    %2812 = vmatpush1.msra.mxu0 0.0
    %2813 = vmatprep.subr.mxu0 0.0
    %2814 = vmatpush1.msra.mxu0 0.0
    %2815 = vmatprep.subr.mxu0 0.0
    %2816 = vmatpush1.msra.mxu0 0.0
    %2817 = vmatprep.subr.mxu0 0.0
    %2818 = vmatpush1.msra.mxu0 0.0
    %2819 = vmatprep.subr.mxu0 0.0
    %2820 = vmatpush1.msra.mxu0 0.0
    %2821 = vmatprep.subr.mxu0 0.0
    %2822 = vmatpush1.msra.mxu0 0.0
    %2823 = vmatprep.subr.mxu0 0.0
    %2824 = vmatpush1.msra.mxu0 0.0
    %2825 = vmatprep.subr.mxu0 0.0
    %2826 = vmatpush1.msra.mxu0 0.0
    %2827 = vmatprep.subr.mxu0 0.0
    %2828 = vmatpush1.msra.mxu0 0.0
    %2829 = vmatprep.subr.mxu0 0.0
    %2830 = vmatpush1.msra.mxu0 0.0
    %2831 = vmatprep.subr.mxu0 0.0
    %2832 = vmatpush1.msra.mxu0 0.0
    %2833 = vmatprep.subr.mxu0 0.0
    %2834 = vmatpush1.msra.mxu0 0.0
    %2835 = vmatprep.subr.mxu0 0.0
    %2836 = vmatpush1.msra.mxu0 0.0
    %2837 = vmatprep.subr.mxu0 0.0
    %2838 = vmatpush1.msra.mxu0 0.0
    %2839 = vmatprep.subr.mxu0 0.0
    %2840 = vmatpush1.msra.mxu0 0.0
    %2841 = vmatprep.subr.mxu0 0.0
    %2842 = vmatpush1.msra.mxu0 0.0
    %2843 = vmatprep.subr.mxu0 0.0
    %2844 = vmatpush1.msra.mxu0 0.0
    %2845 = vmatprep.subr.mxu0 0.0
    %2846 = vmatpush1.msra.mxu0 0.0
    %2847 = vmatprep.subr.mxu0 0.0
    %2848 = vmatpush1.msra.mxu0 0.0
    %2849 = vmatprep.subr.mxu0 0.0
    %2850 = vmatpush1.msra.mxu0 0.0
    %2851 = vmatprep.subr.mxu0 0.0
    %2852 = vmatpush1.msra.mxu0 0.0
    %2853 = vmatprep.mubr.f32.mxu0 0.0
    %2854 = vmatmul.mubr.f32.gmra.mrb[0].mxu0 %v2784
    %v2855 = vpop.f32.mrb[0].mxu0
    %v2856 = vadd.f32 %v2781, %v2855
    %v2857 = vpop.f32.mrb[0].mxu0
    %2858 = vmatprep.mubr.f32.mxu0 0.0
    %2859 = vmatmul.mubr.f32.gmra.mrb[0].mxu0 %v2787
    %v2860 = vpop.f32.mrb[0].mxu0
    %v2861 = vadd.f32 %v2781, %v2860
    %v2862 = vpop.f32.mrb[0].mxu0
    %2863 = vdwg.mxu0
    %v2864 = vmax.f32 %v2856, 0.0
    %v2865 = vmax.f32 %v2861, 0.0
    %v2866 = vld [vmem:[%s7] sm:$0xff]
    %v2867 = vld [vmem:[%s7 + $0x8] sm:$0xff]
    %v2868 = vld [vmem:[%s7 + $0x10] sm:$0xff]
    %v2869 = vld [vmem:[%s7 + $0x18] sm:$0xff]
    %v2870 = vld [vmem:[%s7 + $0x20] sm:$0xff]
    %v2871 = vld [vmem:[%s7 + $0x28] sm:$0xff]
    %v2872 = vld [vmem:[%s7 + $0x30] sm:$0xff]
    %v2873 = vld [vmem:[%s7 + $0x38] sm:$0xff]
    %v2874 = vld [vmem:[%s8] sm:$0x1]
    %v2876 = vlaneseq
    %v2877 = vshrl.u32 %v2876, 7
    %v2878 = vsub.s32 0, %v2877
    %v2879 = vrot.slane %v2874, %v2878
    %vm2881 = vcmask 523264
    %v2883 = vsel %vm2881, %v2864, 0
    %v2886 = vsel %vm2881, %v2865, 0
    %2888 = vmatprep.subr.mxu0 0.0
    %2889 = vmatpush1.msra.mxu0 %v2866
    %2890 = vmatprep.subr.mxu0 0.0
    %2891 = vmatpush1.msra.mxu0 %v2867
    %2892 = vmatprep.subr.mxu0 0.0
    %2893 = vmatpush1.msra.mxu0 %v2868
    %2894 = vmatprep.subr.mxu0 0.0
    %2895 = vmatpush1.msra.mxu0 %v2869
    %2896 = vmatprep.subr.mxu0 0.0
    %2897 = vmatpush1.msra.mxu0 %v2870
    %2898 = vmatprep.subr.mxu0 0.0
    %2899 = vmatpush1.msra.mxu0 %v2871
    %2900 = vmatprep.subr.mxu0 0.0
    %2901 = vmatpush1.msra.mxu0 %v2872
    %2902 = vmatprep.subr.mxu0 0.0
    %2903 = vmatpush1.msra.mxu0 %v2873
    %2904 = vmatprep.subr.mxu0 0.0
    %2905 = vmatpush1.msra.mxu0 0.0
    %2906 = vmatprep.subr.mxu0 0.0
    %2907 = vmatpush1.msra.mxu0 0.0
    %2908 = vmatprep.subr.mxu0 0.0
    %2909 = vmatpush1.msra.mxu0 0.0
    %2910 = vmatprep.subr.mxu0 0.0
    %2911 = vmatpush1.msra.mxu0 0.0
    %2912 = vmatprep.subr.mxu0 0.0
    %2913 = vmatpush1.msra.mxu0 0.0
    %2914 = vmatprep.subr.mxu0 0.0
    %2915 = vmatpush1.msra.mxu0 0.0
    %2916 = vmatprep.subr.mxu0 0.0
    %2917 = vmatpush1.msra.mxu0 0.0
    %2918 = vmatprep.subr.mxu0 0.0
    %2919 = vmatpush1.msra.mxu0 0.0
    %2920 = vmatprep.subr.mxu0 0.0
    %2921 = vmatpush1.msra.mxu0 0.0
    %2922 = vmatprep.subr.mxu0 0.0
    %2923 = vmatpush1.msra.mxu0 0.0
    %2924 = vmatprep.subr.mxu0 0.0
    %2925 = vmatpush1.msra.mxu0 0.0
    %2926 = vmatprep.subr.mxu0 0.0
    %2927 = vmatpush1.msra.mxu0 0.0
    %2928 = vmatprep.subr.mxu0 0.0
    %2929 = vmatpush1.msra.mxu0 0.0
    %2930 = vmatprep.subr.mxu0 0.0
    %2931 = vmatpush1.msra.mxu0 0.0
    %2932 = vmatprep.subr.mxu0 0.0
    %2933 = vmatpush1.msra.mxu0 0.0
    %2934 = vmatprep.subr.mxu0 0.0
    %2935 = vmatpush1.msra.mxu0 0.0
    %2936 = vmatprep.subr.mxu0 0.0
    %2937 = vmatpush1.msra.mxu0 0.0
    %2938 = vmatprep.subr.mxu0 0.0
    %2939 = vmatpush1.msra.mxu0 0.0
    %2940 = vmatprep.subr.mxu0 0.0
    %2941 = vmatpush1.msra.mxu0 0.0
    %2942 = vmatprep.subr.mxu0 0.0
    %2943 = vmatpush1.msra.mxu0 0.0
    %2944 = vmatprep.subr.mxu0 0.0
    %2945 = vmatpush1.msra.mxu0 0.0
    %2946 = vmatprep.subr.mxu0 0.0
    %2947 = vmatpush1.msra.mxu0 0.0
    %2948 = vmatprep.subr.mxu0 0.0
    %2949 = vmatpush1.msra.mxu0 0.0
    %2950 = vmatprep.subr.mxu0 0.0
    %2951 = vmatpush1.msra.mxu0 0.0
    %2952 = vmatprep.mubr.f32.mxu0 0.0
    %2953 = vmatmul.mubr.f32.gmra.mrb[0].mxu0 %v2883
    %v2954 = vpop.f32.mrb[0].mxu0
    %v2955 = vadd.f32 %v2879, %v2954
    %v2956 = vpop.f32.mrb[0].mxu0
    %2957 = vmatprep.mubr.f32.mxu0 0.0
    %2958 = vmatmul.mubr.f32.gmra.mrb[0].mxu0 %v2886
    %v2959 = vpop.f32.mrb[0].mxu0
    %v2960 = vadd.f32 %v2879, %v2959
    %v2961 = vpop.f32.mrb[0].mxu0
    %2962 = vdwg.mxu0
    %v2963 = vadd.f32 %v2722, %v2955
    %v2964 = vadd.f32 %v2723, %v2960
    %2965 = vst.msk [vmem:[#allocation5] sm:$0xff] %vm50, %v2963
    %2966 = vst.msk [vmem:[#allocation5 + $0x8] sm:$0xff] %vm50, %v2964
    // Predicated region
    $region42: #{tpu_custom_call.1} parent=1 // pred_check
      _
    $region43: #{tpu_custom_call.1} parent=1 // pred_check_branch
      %2968 = sbr.rel (0) target = $region45
    $region44: #{tpu_custom_call.1} parent=1 // pred_region
      %s2970 = ssub.s32 256, 256
      %2971 = vsyncadd [#allocation3], %s2970
      %s2972 = sshll.u32 [#allocation5], 4
      %s2973 = int_to_ptr.vmem [resolvable:$true] %s2972
      %2978 = dma.vmem_to_hbm [thread:$0]  %s2973, 256, %s9, [#allocation3], 128, 128, 8
    $region45: #{tpu_custom_call.1} parent=1 // pred_fallthru
      _
    // Predicated region
    $region46: #{tpu_custom_call.1} parent=1 // pred_check
      _
    $region47: #{tpu_custom_call.1} parent=1 // pred_check_branch
      %2980 = sbr.rel (0) target = $region49
    $region48: #{tpu_custom_call.1} parent=1 // pred_region
      %2981 = dma.done [#allocation3], 256
    $region49: #{tpu_custom_call.1} parent=1 // pred_fallthru
      _
    %2982 = vsyncpa [#allocation3], 1
    %2983 = vsyncpa [#allocation4], 1

</llo_original>
